<compile_context>
chip_gen: v5e
topology: v5e:2x2
jax: 0.10.0
libtpu: 0.0.40
codegen_flags: <defaults>
</compile_context>

<pallas_src>
import functools

import jax
import jax.numpy as jnp
from jax.experimental import pallas as pl
from jax.experimental.pallas import tpu as pltpu

LEAKY_SLOPE = 0.1
BN_EPS = 1e-5


def _leaky_relu(x):
    return jnp.where(x > 0, x, LEAKY_SLOPE * x)


# ---------------------------------------------------------------------------
# Fused kernel: conv blocks (+BN+LeakyReLU+MaxPool, 1x1 shortcut), attention,
# FC head.  refs = [x, (w,b,ws,bs)*n_blocks, attn*6, fc*6, out, col_scratch*n]
# ---------------------------------------------------------------------------
def _cnnnet_kernel(*refs, B, K, L0, Cin0, C_list, attention_weight, use_attention):
    n_blocks = len(C_list)
    pad = K // 2
    Cin_list = (Cin0,) + tuple(C_list[:-1])

    idx = 0
    x_ref = refs[idx]; idx += 1
    blk_refs = []
    for _ in range(n_blocks):
        blk_refs.append(refs[idx:idx + 4])
        idx += 4
    wq_ref, bq_ref, wk_ref, bk_ref, wv_ref, bv_ref = refs[idx:idx + 6]; idx += 6
    fw1_ref, fb1_ref, fw2_ref, fb2_ref, fw3_ref, fb3_ref = refs[idx:idx + 6]; idx += 6
    out_ref = refs[idx]; idx += 1
    col_refs = refs[idx:idx + n_blocks]

    # ---------------- residual conv blocks (channels-last, (B, L, C)) --------
    h = x_ref[...]                                    # (B, L0, Cin0) float32
    L = L0
    for i in range(n_blocks):
        w_ref, b_ref, ws_ref, bs_ref = blk_refs[i]
        col_ref = col_refs[i]
        Cin, Cout = Cin_list[i], C_list[i]
        do_pool = i < n_blocks - 1                    # last block has no MaxPool

        # im2col with in-kernel zero padding -> single MXU matmul (K*Cin contraction)
        col_ref[...] = jnp.zeros(col_ref.shape, col_ref.dtype)
        for t in range(K):                            # static unroll over taps
            s = t - pad
            dst, src, n = max(0, -s), max(0, s), L - abs(s)
            col_ref[:, dst:dst + n, t * Cin:(t + 1) * Cin] = h[:, src:src + n, :]
        cols = col_ref[...].reshape(B * L, K * Cin)

        # Conv1d (+ folded eval-BatchNorm) + LeakyReLU(0.1)
        y = jnp.dot(cols, w_ref[...], preferred_element_type=jnp.float32) + b_ref[...]
        y = _leaky_relu(y)                            # (B*L, Cout)

        # 1x1 shortcut conv on the identity (VPU outer product when Cin == 1)
        hflat = h.reshape(B * L, Cin)
        if Cin == 1:
            sc = hflat * ws_ref[...] + bs_ref[...]
        else:
            sc = jnp.dot(hflat, ws_ref[...],
                         preferred_element_type=jnp.float32) + bs_ref[...]

        if do_pool:
            # MaxPool1d(kernel=2, stride=2) applied to BOTH branches, then add
            # (matches PyTorch: pool inside conv_block, pool on shortcut, sum).
            y = jnp.max(y.reshape(B, L // 2, 2, Cout), axis=2)
            sc = jnp.max(sc.reshape(B, L // 2, 2, Cout), axis=2)
            L = L // 2
            h = y + sc                                # (B, L, Cout)
        else:
            h = (y + sc).reshape(B, L, Cout)

    C = C_list[-1]

    # ---------------- self-attention + weighted residual ---------------------
    if use_attention:
        x2 = h.reshape(B * L, C)
        q = (jnp.dot(x2, wq_ref[...], preferred_element_type=jnp.float32)
             + bq_ref[...]).reshape(B, L, C)
        k = (jnp.dot(x2, wk_ref[...], preferred_element_type=jnp.float32)
             + bk_ref[...]).reshape(B, L, C)
        v = (jnp.dot(x2, wv_ref[...], preferred_element_type=jnp.float32)
             + bv_ref[...]).reshape(B, L, C)
        scores = jnp.einsum('bqc,bkc->bqk', q, k,
                            preferred_element_type=jnp.float32) * (1.0 / float(C) ** 0.5)
        m = jnp.max(scores, axis=-1, keepdims=True)
        e = jnp.exp(scores - m)
        attn = e * pl.reciprocal(jnp.sum(e, axis=-1, keepdims=True), approx=True)
        ctx = jnp.einsum('bqk,bkc->bqc', attn, v, preferred_element_type=jnp.float32)
        h = h + attention_weight * ctx                # (B, L, C)

    # ---------------- FC head (BN folded into weights) -----------------------
    # TODO(synk): Dropout layers are identity in eval mode; training-mode
    #             stochastic dropout is not modeled.
    U1 = fw1_ref.shape[2]
    f = jnp.zeros((B, U1), jnp.float32)
    for l in range(L):                                # 128-wide contraction chunks
        f = f + jnp.dot(h[:, l, :], fw1_ref[l], preferred_element_type=jnp.float32)
    f = _leaky_relu(f + fb1_ref[...])
    f = _leaky_relu(jnp.dot(f, fw2_ref[...], preferred_element_type=jnp.float32)
                    + fb2_ref[...])
    out_ref[...] = (jnp.dot(f, fw3_ref[...], preferred_element_type=jnp.float32)
                    + fb3_ref[...])


# ---------------------------------------------------------------------------
# Parameter construction (deterministic; mirrors CNNNet.__init__ shapes).
# Eval-mode BatchNorm (default running stats) is folded into weights here.
# ---------------------------------------------------------------------------
def init_cnnnet_params(key, *, input_channels=1, seq_length=8, num_features=4,
                       conv_layers=3, first_conv_out=32, kernel_size=7,
                       fc_units1=256, fc_units2=128, attention_weight=0.3928,
                       use_attention=True):
    channels_list = [first_conv_out]
    for i in range(1, conv_layers):
        if i <= 2:
            channels_list.append(channels_list[-1] * 2 if channels_list[-1] * 2 <= 512 else 512)
        else:
            channels_list.append(channels_list[-1] // 2 if channels_list[-1] // 2 >= 32 else 32)

    keys = list(jax.random.split(key, 64))

    def rnd(shape, scale=0.05):
        return (jax.random.normal(keys.pop(0), shape, jnp.float32) * scale).astype(jnp.float32)

    # gamma=1, beta=0, running_mean=0, running_var=1  ->  scale only.
    # Real trained stats fold the same way: w *= gamma/sqrt(var+eps), etc.
    bn_scale = jnp.float32(1.0 / (1.0 + BN_EPS) ** 0.5)

    params = {"config": dict(kernel_size=kernel_size,
                             channels_list=tuple(channels_list),
                             attention_weight=float(attention_weight),
                             use_attention=bool(use_attention))}

    blocks = []
    cin = input_channels
    for cout in channels_list:
        w = rnd((kernel_size, cin, cout))                       # (K, Cin, Cout)
        b = rnd((1, cout))
        blocks.append(dict(
            w=(w * bn_scale).reshape(kernel_size * cin, cout),  # BN-folded, im2col layout
            b=b * bn_scale,
            ws=rnd((cin, cout)),                                # 1x1 shortcut conv
            bs=rnd((1, cout)),
        ))
        cin = cout
    params["blocks"] = blocks

    C = channels_list[-1]
    params["attn"] = dict(wq=rnd((C, C)), bq=rnd((1, C)),
                          wk=rnd((C, C)), bk=rnd((1, C)),
                          wv=rnd((C, C)), bv=rnd((1, C)))

    sim_len = seq_length * num_features
    for _ in range(conv_layers - 1):
        sim_len = max(sim_len // 2, 1)
    flat = C * sim_len
    # fc1 generated in PyTorch flatten order (row = c*sim_len + l), pre-permuted
    # to (sim_len, C, U1) and BN-folded -> no runtime transpose before the head.
    w1 = rnd((flat, fc_units1), 0.02)
    w1p = jnp.transpose(w1.reshape(C, sim_len, fc_units1), (1, 0, 2)) * bn_scale
    params["fc"] = dict(
        w1=w1p,
        b1=rnd((1, fc_units1)) * bn_scale,
        w2=rnd((fc_units1, fc_units2), 0.02) * bn_scale,
        b2=rnd((1, fc_units2)) * bn_scale,
        w3=rnd((fc_units2, 1), 0.02),
        b3=rnd((1, 1)))
    return params


# ---------------------------------------------------------------------------
# Forward: one host-side reshape + one fused pallas_call.
# ---------------------------------------------------------------------------
def cnnnet_forward(params, x):
    cfg = params["config"]
    K = cfg["kernel_size"]
    C_list = tuple(cfg["channels_list"])
    n_blocks = len(C_list)

    B, Cin, S, F = x.shape
    L0 = S * F
    if Cin == 1:
        h0 = x.reshape(B, L0, 1).astype(jnp.float32)
    else:
        h0 = jnp.transpose(x.reshape(B, Cin, L0), (0, 2, 1)).astype(jnp.float32)

    # per-block input lengths (MaxPool(2,2) after every block except the last)
    Cin_list = [Cin] + list(C_list[:-1])
    L_list = [L0]
    for _ in range(n_blocks - 1):
        # TODO(synk): PyTorch's degenerate pool_stride=1 path (length <= 1) and
        #             odd-length flooring are not modeled (not hit by defaults).
        assert L_list[-1] % 2 == 0 and L_list[-1] >= 2, "MaxPool1d(2,2) needs even length"
        L_list.append(L_list[-1] // 2)

    args = [h0]
    for blk in params["blocks"]:
        args += [blk["w"], blk["b"], blk["ws"], blk["bs"]]
    a = params["attn"]
    args += [a["wq"], a["bq"], a["wk"], a["bk"], a["wv"], a["bv"]]
    fc = params["fc"]
    args += [fc["w1"], fc["b1"], fc["w2"], fc["b2"], fc["w3"], fc["b3"]]

    kern = functools.partial(
        _cnnnet_kernel, B=B, K=K, L0=L0, Cin0=Cin, C_list=C_list,
        attention_weight=cfg["attention_weight"],
        use_attention=cfg["use_attention"])

    return pl.pallas_call(
        kern,
        out_shape=jax.ShapeDtypeStruct((B, 1), jnp.float32),
        in_specs=[pl.BlockSpec(memory_space=pltpu.MemorySpace.VMEM)] * len(args),
        out_specs=pl.BlockSpec(memory_space=pltpu.MemorySpace.VMEM),
        scratch_shapes=[pltpu.VMEM((B, L_list[i], K * Cin_list[i]), jnp.float32)
                        for i in range(n_blocks)],
    )(*args)


if __name__ == "__main__":
    key = jax.random.PRNGKey(0)
    k_in, k_par = jax.random.split(key)

    batch, input_channels, seq_length, num_features = 2, 1, 8, 4
    x = jax.random.normal(k_in, (batch, input_channels, seq_length, num_features),
                          jnp.float32)

    params = init_cnnnet_params(k_par, input_channels=input_channels,
                                seq_length=seq_length, num_features=num_features)

    out = cnnnet_forward(params, x)
    out = jax.block_until_ready(out)
    assert out.shape == (batch, 1), out.shape
    assert bool(jnp.all(jnp.isfinite(out)))
    print("KERNEL_OK")
</pallas_src>

<mosaic_0001>
module attributes {stable_mosaic.version = 11 : i64} {
  func.func @_cnnnet_kernel(%arg0: memref<2x32x1xf32, #tpu.memory_space<vmem>>, %arg1: memref<7x32xf32, #tpu.memory_space<vmem>>, %arg2: memref<1x32xf32, #tpu.memory_space<vmem>>, %arg3: memref<1x32xf32, #tpu.memory_space<vmem>>, %arg4: memref<1x32xf32, #tpu.memory_space<vmem>>, %arg5: memref<224x64xf32, #tpu.memory_space<vmem>>, %arg6: memref<1x64xf32, #tpu.memory_space<vmem>>, %arg7: memref<32x64xf32, #tpu.memory_space<vmem>>, %arg8: memref<1x64xf32, #tpu.memory_space<vmem>>, %arg9: memref<448x128xf32, #tpu.memory_space<vmem>>, %arg10: memref<1x128xf32, #tpu.memory_space<vmem>>, %arg11: memref<64x128xf32, #tpu.memory_space<vmem>>, %arg12: memref<1x128xf32, #tpu.memory_space<vmem>>, %arg13: memref<128x128xf32, #tpu.memory_space<vmem>>, %arg14: memref<1x128xf32, #tpu.memory_space<vmem>>, %arg15: memref<128x128xf32, #tpu.memory_space<vmem>>, %arg16: memref<1x128xf32, #tpu.memory_space<vmem>>, %arg17: memref<128x128xf32, #tpu.memory_space<vmem>>, %arg18: memref<1x128xf32, #tpu.memory_space<vmem>>, %arg19: memref<8x128x256xf32, #tpu.memory_space<vmem>>, %arg20: memref<1x256xf32, #tpu.memory_space<vmem>>, %arg21: memref<256x128xf32, #tpu.memory_space<vmem>>, %arg22: memref<1x128xf32, #tpu.memory_space<vmem>>, %arg23: memref<128x1xf32, #tpu.memory_space<vmem>>, %arg24: memref<1x1xf32, #tpu.memory_space<vmem>>, %arg25: memref<2x1xf32, #tpu.memory_space<vmem>>, %arg26: memref<2x32x7xf32, #tpu.memory_space<vmem>>, %arg27: memref<2x16x224xf32, #tpu.memory_space<vmem>>, %arg28: memref<2x8x448xf32, #tpu.memory_space<vmem>>) attributes {dimension_semantics = [], scalar_prefetch = 0 : i64, scratch_operands = 3 : i64, tpu.core_type = #tpu.core_type<tc>} {
    %c0 = arith.constant 0 : index
    %c0_0 = arith.constant 0 : index
    %c0_1 = arith.constant 0 : index
    %0 = vector.load %arg0[%c0, %c0_0, %c0_1] : memref<2x32x1xf32, #tpu.memory_space<vmem>>, vector<2x32x1xf32>
    %cst = arith.constant 0.000000e+00 : f32
    %1 = vector.broadcast %cst : f32 to vector<2x32x7xf32>
    %c0_2 = arith.constant 0 : index
    %c0_3 = arith.constant 0 : index
    %c0_4 = arith.constant 0 : index
    %2 = vector.load %arg26[%c0_2, %c0_3, %c0_4] : memref<2x32x7xf32, #tpu.memory_space<vmem>>, vector<2x32x7xf32>
    tpu.vector_store %arg26[%c0_2, %c0_3, %c0_4], %1 {strides = array<i32>} : memref<2x32x7xf32, #tpu.memory_space<vmem>>, vector<2x32x7xf32>,
    %3 = vector.extract_strided_slice %0 {offsets = [0, 0, 0], sizes = [2, 29, 1], strides = [1, 1, 1]} : vector<2x32x1xf32> to vector<2x29x1xf32>
    %c0_5 = arith.constant 0 : index
    %c3 = arith.constant 3 : index
    %c0_6 = arith.constant 0 : index
    %4 = vector.load %arg26[%c0_5, %c3, %c0_6] : memref<2x32x7xf32, #tpu.memory_space<vmem>>, vector<2x29x1xf32>
    tpu.vector_store %arg26[%c0_5, %c3, %c0_6], %3 {strides = array<i32>} : memref<2x32x7xf32, #tpu.memory_space<vmem>>, vector<2x29x1xf32>,
    %5 = vector.extract_strided_slice %0 {offsets = [0, 0, 0], sizes = [2, 30, 1], strides = [1, 1, 1]} : vector<2x32x1xf32> to vector<2x30x1xf32>
    %c0_7 = arith.constant 0 : index
    %c2 = arith.constant 2 : index
    %c1 = arith.constant 1 : index
    %6 = vector.load %arg26[%c0_7, %c2, %c1] : memref<2x32x7xf32, #tpu.memory_space<vmem>>, vector<2x30x1xf32>
    tpu.vector_store %arg26[%c0_7, %c2, %c1], %5 {strides = array<i32>} : memref<2x32x7xf32, #tpu.memory_space<vmem>>, vector<2x30x1xf32>,
    %7 = vector.extract_strided_slice %0 {offsets = [0, 0, 0], sizes = [2, 31, 1], strides = [1, 1, 1]} : vector<2x32x1xf32> to vector<2x31x1xf32>
    %c0_8 = arith.constant 0 : index
    %c1_9 = arith.constant 1 : index
    %c2_10 = arith.constant 2 : index
    %8 = vector.load %arg26[%c0_8, %c1_9, %c2_10] : memref<2x32x7xf32, #tpu.memory_space<vmem>>, vector<2x31x1xf32>
    tpu.vector_store %arg26[%c0_8, %c1_9, %c2_10], %7 {strides = array<i32>} : memref<2x32x7xf32, #tpu.memory_space<vmem>>, vector<2x31x1xf32>,
    %c0_11 = arith.constant 0 : index
    %c0_12 = arith.constant 0 : index
    %c3_13 = arith.constant 3 : index
    %9 = vector.load %arg26[%c0_11, %c0_12, %c3_13] : memref<2x32x7xf32, #tpu.memory_space<vmem>>, vector<2x32x1xf32>
    tpu.vector_store %arg26[%c0_11, %c0_12, %c3_13], %0 {strides = array<i32>} : memref<2x32x7xf32, #tpu.memory_space<vmem>>, vector<2x32x1xf32>,
    %10 = vector.extract_strided_slice %0 {offsets = [0, 1, 0], sizes = [2, 31, 1], strides = [1, 1, 1]} : vector<2x32x1xf32> to vector<2x31x1xf32>
    %c0_14 = arith.constant 0 : index
    %c0_15 = arith.constant 0 : index
    %c4 = arith.constant 4 : index
    %11 = vector.load %arg26[%c0_14, %c0_15, %c4] : memref<2x32x7xf32, #tpu.memory_space<vmem>>, vector<2x31x1xf32>
    tpu.vector_store %arg26[%c0_14, %c0_15, %c4], %10 {strides = array<i32>} : memref<2x32x7xf32, #tpu.memory_space<vmem>>, vector<2x31x1xf32>,
    %12 = vector.extract_strided_slice %0 {offsets = [0, 2, 0], sizes = [2, 30, 1], strides = [1, 1, 1]} : vector<2x32x1xf32> to vector<2x30x1xf32>
    %c0_16 = arith.constant 0 : index
    %c0_17 = arith.constant 0 : index
    %c5 = arith.constant 5 : index
    %13 = vector.load %arg26[%c0_16, %c0_17, %c5] : memref<2x32x7xf32, #tpu.memory_space<vmem>>, vector<2x30x1xf32>
    tpu.vector_store %arg26[%c0_16, %c0_17, %c5], %12 {strides = array<i32>} : memref<2x32x7xf32, #tpu.memory_space<vmem>>, vector<2x30x1xf32>,
    %14 = vector.extract_strided_slice %0 {offsets = [0, 3, 0], sizes = [2, 29, 1], strides = [1, 1, 1]} : vector<2x32x1xf32> to vector<2x29x1xf32>
    %c0_18 = arith.constant 0 : index
    %c0_19 = arith.constant 0 : index
    %c6 = arith.constant 6 : index
    %15 = vector.load %arg26[%c0_18, %c0_19, %c6] : memref<2x32x7xf32, #tpu.memory_space<vmem>>, vector<2x29x1xf32>
    tpu.vector_store %arg26[%c0_18, %c0_19, %c6], %14 {strides = array<i32>} : memref<2x32x7xf32, #tpu.memory_space<vmem>>, vector<2x29x1xf32>,
    %c0_20 = arith.constant 0 : index
    %c0_21 = arith.constant 0 : index
    %c0_22 = arith.constant 0 : index
    %16 = vector.load %arg26[%c0_20, %c0_21, %c0_22] : memref<2x32x7xf32, #tpu.memory_space<vmem>>, vector<2x32x7xf32>
    %17 = vector.shape_cast %16 : vector<2x32x7xf32> to vector<64x7xf32>
    %c0_23 = arith.constant 0 : index
    %c0_24 = arith.constant 0 : index
    %18 = vector.load %arg1[%c0_23, %c0_24] : memref<7x32xf32, #tpu.memory_space<vmem>>, vector<7x32xf32>
    %cst_25 = arith.constant dense<0.000000e+00> : vector<64x32xf32>
    %19 = tpu.matmul %17, %18, %cst_25 {dimension_numbers = #tpu.dot_dimension_numbers<[1], [0], [0], [1], [0, 0, 1, 1], [], []>} : vector<64x7xf32>, vector<7x32xf32>, vector<64x32xf32> -> vector<64x32xf32>
    %c0_26 = arith.constant 0 : index
    %c0_27 = arith.constant 0 : index
    %20 = vector.load %arg2[%c0_26, %c0_27] : memref<1x32xf32, #tpu.memory_space<vmem>>, vector<1x32xf32>
    %21 = vector.broadcast %20 : vector<1x32xf32> to vector<64x32xf32>
    %22 = arith.addf %19, %21 : vector<64x32xf32>
    %cst_28 = arith.constant 0.000000e+00 : f32
    %23 = vector.broadcast %cst_28 : f32 to vector<64x32xf32>
    %24 = arith.cmpf ogt, %22, %23 : vector<64x32xf32>
    %cst_29 = arith.constant 1.000000e-01 : f32
    %25 = vector.broadcast %cst_29 : f32 to vector<64x32xf32>
    %26 = arith.mulf %25, %22 : vector<64x32xf32>
    %27 = arith.select %24, %22, %26 : vector<64x32xi1>, vector<64x32xf32>
    %28 = vector.shape_cast %0 : vector<2x32x1xf32> to vector<64x1xf32>
    %c0_30 = arith.constant 0 : index
    %c0_31 = arith.constant 0 : index
    %29 = vector.load %arg3[%c0_30, %c0_31] : memref<1x32xf32, #tpu.memory_space<vmem>>, vector<1x32xf32>
    %30 = vector.broadcast %28 : vector<64x1xf32> to vector<64x32xf32>
    %31 = vector.broadcast %29 : vector<1x32xf32> to vector<64x32xf32>
    %32 = arith.mulf %30, %31 : vector<64x32xf32>
    %c0_32 = arith.constant 0 : index
    %c0_33 = arith.constant 0 : index
    %33 = vector.load %arg4[%c0_32, %c0_33] : memref<1x32xf32, #tpu.memory_space<vmem>>, vector<1x32xf32>
    %34 = vector.broadcast %33 : vector<1x32xf32> to vector<64x32xf32>
    %35 = arith.addf %32, %34 : vector<64x32xf32>
    %36 = vector.shape_cast %27 : vector<64x32xf32> to vector<2x16x2x32xf32>
    %cst_34 = arith.constant dense<0xFF800000> : vector<2x16x32xf32>
    %37 = vector.multi_reduction <maximumf>, %36, %cst_34 [2] : vector<2x16x2x32xf32> to vector<2x16x32xf32>
    %38 = vector.shape_cast %35 : vector<64x32xf32> to vector<2x16x2x32xf32>
    %cst_35 = arith.constant dense<0xFF800000> : vector<2x16x32xf32>
    %39 = vector.multi_reduction <maximumf>, %38, %cst_35 [2] : vector<2x16x2x32xf32> to vector<2x16x32xf32>
    %40 = arith.addf %37, %39 : vector<2x16x32xf32>
    %cst_36 = arith.constant 0.000000e+00 : f32
    %41 = vector.broadcast %cst_36 : f32 to vector<2x16x224xf32>
    %c0_37 = arith.constant 0 : index
    %c0_38 = arith.constant 0 : index
    %c0_39 = arith.constant 0 : index
    %42 = vector.load %arg27[%c0_37, %c0_38, %c0_39] : memref<2x16x224xf32, #tpu.memory_space<vmem>>, vector<2x16x224xf32>
    tpu.vector_store %arg27[%c0_37, %c0_38, %c0_39], %41 {strides = array<i32>} : memref<2x16x224xf32, #tpu.memory_space<vmem>>, vector<2x16x224xf32>,
    %43 = vector.extract_strided_slice %40 {offsets = [0, 0, 0], sizes = [2, 13, 32], strides = [1, 1, 1]} : vector<2x16x32xf32> to vector<2x13x32xf32>
    %c0_40 = arith.constant 0 : index
    %c3_41 = arith.constant 3 : index
    %c0_42 = arith.constant 0 : index
    %44 = vector.load %arg27[%c0_40, %c3_41, %c0_42] : memref<2x16x224xf32, #tpu.memory_space<vmem>>, vector<2x13x32xf32>
    tpu.vector_store %arg27[%c0_40, %c3_41, %c0_42], %43 {strides = array<i32>} : memref<2x16x224xf32, #tpu.memory_space<vmem>>, vector<2x13x32xf32>,
    %45 = vector.extract_strided_slice %40 {offsets = [0, 0, 0], sizes = [2, 14, 32], strides = [1, 1, 1]} : vector<2x16x32xf32> to vector<2x14x32xf32>
    %c0_43 = arith.constant 0 : index
    %c2_44 = arith.constant 2 : index
    %c32 = arith.constant 32 : index
    %46 = vector.load %arg27[%c0_43, %c2_44, %c32] : memref<2x16x224xf32, #tpu.memory_space<vmem>>, vector<2x14x32xf32>
    tpu.vector_store %arg27[%c0_43, %c2_44, %c32], %45 {strides = array<i32>} : memref<2x16x224xf32, #tpu.memory_space<vmem>>, vector<2x14x32xf32>,
    %47 = vector.extract_strided_slice %40 {offsets = [0, 0, 0], sizes = [2, 15, 32], strides = [1, 1, 1]} : vector<2x16x32xf32> to vector<2x15x32xf32>
    %c0_45 = arith.constant 0 : index
    %c1_46 = arith.constant 1 : index
    %c64 = arith.constant 64 : index
    %48 = vector.load %arg27[%c0_45, %c1_46, %c64] : memref<2x16x224xf32, #tpu.memory_space<vmem>>, vector<2x15x32xf32>
    tpu.vector_store %arg27[%c0_45, %c1_46, %c64], %47 {strides = array<i32>} : memref<2x16x224xf32, #tpu.memory_space<vmem>>, vector<2x15x32xf32>,
    %c0_47 = arith.constant 0 : index
    %c0_48 = arith.constant 0 : index
    %c96 = arith.constant 96 : index
    %49 = vector.load %arg27[%c0_47, %c0_48, %c96] : memref<2x16x224xf32, #tpu.memory_space<vmem>>, vector<2x16x32xf32>
    tpu.vector_store %arg27[%c0_47, %c0_48, %c96], %40 {strides = array<i32>} : memref<2x16x224xf32, #tpu.memory_space<vmem>>, vector<2x16x32xf32>,
    %50 = vector.extract_strided_slice %40 {offsets = [0, 1, 0], sizes = [2, 15, 32], strides = [1, 1, 1]} : vector<2x16x32xf32> to vector<2x15x32xf32>
    %c0_49 = arith.constant 0 : index
    %c0_50 = arith.constant 0 : index
    %c128 = arith.constant 128 : index
    %51 = vector.load %arg27[%c0_49, %c0_50, %c128] : memref<2x16x224xf32, #tpu.memory_space<vmem>>, vector<2x15x32xf32>
    tpu.vector_store %arg27[%c0_49, %c0_50, %c128], %50 {strides = array<i32>} : memref<2x16x224xf32, #tpu.memory_space<vmem>>, vector<2x15x32xf32>,
    %52 = vector.extract_strided_slice %40 {offsets = [0, 2, 0], sizes = [2, 14, 32], strides = [1, 1, 1]} : vector<2x16x32xf32> to vector<2x14x32xf32>
    %c0_51 = arith.constant 0 : index
    %c0_52 = arith.constant 0 : index
    %c160 = arith.constant 160 : index
    %53 = vector.load %arg27[%c0_51, %c0_52, %c160] : memref<2x16x224xf32, #tpu.memory_space<vmem>>, vector<2x14x32xf32>
    tpu.vector_store %arg27[%c0_51, %c0_52, %c160], %52 {strides = array<i32>} : memref<2x16x224xf32, #tpu.memory_space<vmem>>, vector<2x14x32xf32>,
    %54 = vector.extract_strided_slice %40 {offsets = [0, 3, 0], sizes = [2, 13, 32], strides = [1, 1, 1]} : vector<2x16x32xf32> to vector<2x13x32xf32>
    %c0_53 = arith.constant 0 : index
    %c0_54 = arith.constant 0 : index
    %c192 = arith.constant 192 : index
    %55 = vector.load %arg27[%c0_53, %c0_54, %c192] : memref<2x16x224xf32, #tpu.memory_space<vmem>>, vector<2x13x32xf32>
    tpu.vector_store %arg27[%c0_53, %c0_54, %c192], %54 {strides = array<i32>} : memref<2x16x224xf32, #tpu.memory_space<vmem>>, vector<2x13x32xf32>,
    %c0_55 = arith.constant 0 : index
    %c0_56 = arith.constant 0 : index
    %c0_57 = arith.constant 0 : index
    %56 = vector.load %arg27[%c0_55, %c0_56, %c0_57] : memref<2x16x224xf32, #tpu.memory_space<vmem>>, vector<2x16x224xf32>
    %57 = vector.shape_cast %56 : vector<2x16x224xf32> to vector<32x224xf32>
    %c0_58 = arith.constant 0 : index
    %c0_59 = arith.constant 0 : index
    %58 = vector.load %arg5[%c0_58, %c0_59] : memref<224x64xf32, #tpu.memory_space<vmem>>, vector<224x64xf32>
    %cst_60 = arith.constant dense<0.000000e+00> : vector<32x64xf32>
    %59 = tpu.matmul %57, %58, %cst_60 {dimension_numbers = #tpu.dot_dimension_numbers<[1], [0], [0], [1], [0, 0, 1, 1], [], []>} : vector<32x224xf32>, vector<224x64xf32>, vector<32x64xf32> -> vector<32x64xf32>
    %c0_61 = arith.constant 0 : index
    %c0_62 = arith.constant 0 : index
    %60 = vector.load %arg6[%c0_61, %c0_62] : memref<1x64xf32, #tpu.memory_space<vmem>>, vector<1x64xf32>
    %61 = vector.broadcast %60 : vector<1x64xf32> to vector<32x64xf32>
    %62 = arith.addf %59, %61 : vector<32x64xf32>
    %cst_63 = arith.constant 0.000000e+00 : f32
    %63 = vector.broadcast %cst_63 : f32 to vector<32x64xf32>
    %64 = arith.cmpf ogt, %62, %63 : vector<32x64xf32>
    %cst_64 = arith.constant 1.000000e-01 : f32
    %65 = vector.broadcast %cst_64 : f32 to vector<32x64xf32>
    %66 = arith.mulf %65, %62 : vector<32x64xf32>
    %67 = arith.select %64, %62, %66 : vector<32x64xi1>, vector<32x64xf32>
    %68 = vector.shape_cast %40 : vector<2x16x32xf32> to vector<32x32xf32>
    %c0_65 = arith.constant 0 : index
    %c0_66 = arith.constant 0 : index
    %69 = vector.load %arg7[%c0_65, %c0_66] : memref<32x64xf32, #tpu.memory_space<vmem>>, vector<32x64xf32>
    %cst_67 = arith.constant dense<0.000000e+00> : vector<32x64xf32>
    %70 = tpu.matmul %68, %69, %cst_67 {dimension_numbers = #tpu.dot_dimension_numbers<[1], [0], [0], [1], [0, 0, 1, 1], [], []>} : vector<32x32xf32>, vector<32x64xf32>, vector<32x64xf32> -> vector<32x64xf32>
    %c0_68 = arith.constant 0 : index
    %c0_69 = arith.constant 0 : index
    %71 = vector.load %arg8[%c0_68, %c0_69] : memref<1x64xf32, #tpu.memory_space<vmem>>, vector<1x64xf32>
    %72 = vector.broadcast %71 : vector<1x64xf32> to vector<32x64xf32>
    %73 = arith.addf %70, %72 : vector<32x64xf32>
    %74 = vector.shape_cast %67 : vector<32x64xf32> to vector<2x8x2x64xf32>
    %cst_70 = arith.constant dense<0xFF800000> : vector<2x8x64xf32>
    %75 = vector.multi_reduction <maximumf>, %74, %cst_70 [2] : vector<2x8x2x64xf32> to vector<2x8x64xf32>
    %76 = vector.shape_cast %73 : vector<32x64xf32> to vector<2x8x2x64xf32>
    %cst_71 = arith.constant dense<0xFF800000> : vector<2x8x64xf32>
    %77 = vector.multi_reduction <maximumf>, %76, %cst_71 [2] : vector<2x8x2x64xf32> to vector<2x8x64xf32>
    %78 = arith.addf %75, %77 : vector<2x8x64xf32>
    %cst_72 = arith.constant 0.000000e+00 : f32
    %79 = vector.broadcast %cst_72 : f32 to vector<2x8x448xf32>
    %c0_73 = arith.constant 0 : index
    %c0_74 = arith.constant 0 : index
    %c0_75 = arith.constant 0 : index
    %80 = vector.load %arg28[%c0_73, %c0_74, %c0_75] : memref<2x8x448xf32, #tpu.memory_space<vmem>>, vector<2x8x448xf32>
    tpu.vector_store %arg28[%c0_73, %c0_74, %c0_75], %79 {strides = array<i32>} : memref<2x8x448xf32, #tpu.memory_space<vmem>>, vector<2x8x448xf32>,
    %81 = vector.extract_strided_slice %78 {offsets = [0, 0, 0], sizes = [2, 5, 64], strides = [1, 1, 1]} : vector<2x8x64xf32> to vector<2x5x64xf32>
    %c0_76 = arith.constant 0 : index
    %c3_77 = arith.constant 3 : index
    %c0_78 = arith.constant 0 : index
    %82 = vector.load %arg28[%c0_76, %c3_77, %c0_78] : memref<2x8x448xf32, #tpu.memory_space<vmem>>, vector<2x5x64xf32>
    tpu.vector_store %arg28[%c0_76, %c3_77, %c0_78], %81 {strides = array<i32>} : memref<2x8x448xf32, #tpu.memory_space<vmem>>, vector<2x5x64xf32>,
    %83 = vector.extract_strided_slice %78 {offsets = [0, 0, 0], sizes = [2, 6, 64], strides = [1, 1, 1]} : vector<2x8x64xf32> to vector<2x6x64xf32>
    %c0_79 = arith.constant 0 : index
    %c2_80 = arith.constant 2 : index
    %c64_81 = arith.constant 64 : index
    %84 = vector.load %arg28[%c0_79, %c2_80, %c64_81] : memref<2x8x448xf32, #tpu.memory_space<vmem>>, vector<2x6x64xf32>
    tpu.vector_store %arg28[%c0_79, %c2_80, %c64_81], %83 {strides = array<i32>} : memref<2x8x448xf32, #tpu.memory_space<vmem>>, vector<2x6x64xf32>,
    %85 = vector.extract_strided_slice %78 {offsets = [0, 0, 0], sizes = [2, 7, 64], strides = [1, 1, 1]} : vector<2x8x64xf32> to vector<2x7x64xf32>
    %c0_82 = arith.constant 0 : index
    %c1_83 = arith.constant 1 : index
    %c128_84 = arith.constant 128 : index
    %86 = vector.load %arg28[%c0_82, %c1_83, %c128_84] : memref<2x8x448xf32, #tpu.memory_space<vmem>>, vector<2x7x64xf32>
    tpu.vector_store %arg28[%c0_82, %c1_83, %c128_84], %85 {strides = array<i32>} : memref<2x8x448xf32, #tpu.memory_space<vmem>>, vector<2x7x64xf32>,
    %c0_85 = arith.constant 0 : index
    %c0_86 = arith.constant 0 : index
    %c192_87 = arith.constant 192 : index
    %87 = vector.load %arg28[%c0_85, %c0_86, %c192_87] : memref<2x8x448xf32, #tpu.memory_space<vmem>>, vector<2x8x64xf32>
    tpu.vector_store %arg28[%c0_85, %c0_86, %c192_87], %78 {strides = array<i32>} : memref<2x8x448xf32, #tpu.memory_space<vmem>>, vector<2x8x64xf32>,
    %88 = vector.extract_strided_slice %78 {offsets = [0, 1, 0], sizes = [2, 7, 64], strides = [1, 1, 1]} : vector<2x8x64xf32> to vector<2x7x64xf32>
    %c0_88 = arith.constant 0 : index
    %c0_89 = arith.constant 0 : index
    %c256 = arith.constant 256 : index
    %89 = vector.load %arg28[%c0_88, %c0_89, %c256] : memref<2x8x448xf32, #tpu.memory_space<vmem>>, vector<2x7x64xf32>
    tpu.vector_store %arg28[%c0_88, %c0_89, %c256], %88 {strides = array<i32>} : memref<2x8x448xf32, #tpu.memory_space<vmem>>, vector<2x7x64xf32>,
    %90 = vector.extract_strided_slice %78 {offsets = [0, 2, 0], sizes = [2, 6, 64], strides = [1, 1, 1]} : vector<2x8x64xf32> to vector<2x6x64xf32>
    %c0_90 = arith.constant 0 : index
    %c0_91 = arith.constant 0 : index
    %c320 = arith.constant 320 : index
    %91 = vector.load %arg28[%c0_90, %c0_91, %c320] : memref<2x8x448xf32, #tpu.memory_space<vmem>>, vector<2x6x64xf32>
    tpu.vector_store %arg28[%c0_90, %c0_91, %c320], %90 {strides = array<i32>} : memref<2x8x448xf32, #tpu.memory_space<vmem>>, vector<2x6x64xf32>,
    %92 = vector.extract_strided_slice %78 {offsets = [0, 3, 0], sizes = [2, 5, 64], strides = [1, 1, 1]} : vector<2x8x64xf32> to vector<2x5x64xf32>
    %c0_92 = arith.constant 0 : index
    %c0_93 = arith.constant 0 : index
    %c384 = arith.constant 384 : index
    %93 = vector.load %arg28[%c0_92, %c0_93, %c384] : memref<2x8x448xf32, #tpu.memory_space<vmem>>, vector<2x5x64xf32>
    tpu.vector_store %arg28[%c0_92, %c0_93, %c384], %92 {strides = array<i32>} : memref<2x8x448xf32, #tpu.memory_space<vmem>>, vector<2x5x64xf32>,
    %c0_94 = arith.constant 0 : index
    %c0_95 = arith.constant 0 : index
    %c0_96 = arith.constant 0 : index
    %94 = vector.load %arg28[%c0_94, %c0_95, %c0_96] : memref<2x8x448xf32, #tpu.memory_space<vmem>>, vector<2x8x448xf32>
    %95 = vector.shape_cast %94 : vector<2x8x448xf32> to vector<16x448xf32>
    %c0_97 = arith.constant 0 : index
    %c0_98 = arith.constant 0 : index
    %96 = vector.load %arg9[%c0_97, %c0_98] : memref<448x128xf32, #tpu.memory_space<vmem>>, vector<448x128xf32>
    %cst_99 = arith.constant dense<0.000000e+00> : vector<16x128xf32>
    %97 = tpu.matmul %95, %96, %cst_99 {dimension_numbers = #tpu.dot_dimension_numbers<[1], [0], [0], [1], [0, 0, 1, 1], [], []>} : vector<16x448xf32>, vector<448x128xf32>, vector<16x128xf32> -> vector<16x128xf32>
    %c0_100 = arith.constant 0 : index
    %c0_101 = arith.constant 0 : index
    %98 = vector.load %arg10[%c0_100, %c0_101] : memref<1x128xf32, #tpu.memory_space<vmem>>, vector<1x128xf32>
    %99 = vector.broadcast %98 : vector<1x128xf32> to vector<16x128xf32>
    %100 = arith.addf %97, %99 : vector<16x128xf32>
    %cst_102 = arith.constant 0.000000e+00 : f32
    %101 = vector.broadcast %cst_102 : f32 to vector<16x128xf32>
    %102 = arith.cmpf ogt, %100, %101 : vector<16x128xf32>
    %cst_103 = arith.constant 1.000000e-01 : f32
    %103 = vector.broadcast %cst_103 : f32 to vector<16x128xf32>
    %104 = arith.mulf %103, %100 : vector<16x128xf32>
    %105 = arith.select %102, %100, %104 : vector<16x128xi1>, vector<16x128xf32>
    %106 = vector.shape_cast %78 : vector<2x8x64xf32> to vector<16x64xf32>
    %c0_104 = arith.constant 0 : index
    %c0_105 = arith.constant 0 : index
    %107 = vector.load %arg11[%c0_104, %c0_105] : memref<64x128xf32, #tpu.memory_space<vmem>>, vector<64x128xf32>
    %cst_106 = arith.constant dense<0.000000e+00> : vector<16x128xf32>
    %108 = tpu.matmul %106, %107, %cst_106 {dimension_numbers = #tpu.dot_dimension_numbers<[1], [0], [0], [1], [0, 0, 1, 1], [], []>} : vector<16x64xf32>, vector<64x128xf32>, vector<16x128xf32> -> vector<16x128xf32>
    %c0_107 = arith.constant 0 : index
    %c0_108 = arith.constant 0 : index
    %109 = vector.load %arg12[%c0_107, %c0_108] : memref<1x128xf32, #tpu.memory_space<vmem>>, vector<1x128xf32>
    %110 = vector.broadcast %109 : vector<1x128xf32> to vector<16x128xf32>
    %111 = arith.addf %108, %110 : vector<16x128xf32>
    %112 = arith.addf %105, %111 : vector<16x128xf32>
    %113 = vector.shape_cast %112 : vector<16x128xf32> to vector<2x8x128xf32>
    %114 = vector.shape_cast %113 : vector<2x8x128xf32> to vector<16x128xf32>
    %c0_109 = arith.constant 0 : index
    %c0_110 = arith.constant 0 : index
    %115 = vector.load %arg13[%c0_109, %c0_110] : memref<128x128xf32, #tpu.memory_space<vmem>>, vector<128x128xf32>
    %cst_111 = arith.constant dense<0.000000e+00> : vector<16x128xf32>
    %116 = tpu.matmul %114, %115, %cst_111 {dimension_numbers = #tpu.dot_dimension_numbers<[1], [0], [0], [1], [0, 0, 1, 1], [], []>} : vector<16x128xf32>, vector<128x128xf32>, vector<16x128xf32> -> vector<16x128xf32>
    %c0_112 = arith.constant 0 : index
    %c0_113 = arith.constant 0 : index
    %117 = vector.load %arg14[%c0_112, %c0_113] : memref<1x128xf32, #tpu.memory_space<vmem>>, vector<1x128xf32>
    %118 = vector.broadcast %117 : vector<1x128xf32> to vector<16x128xf32>
    %119 = arith.addf %116, %118 : vector<16x128xf32>
    %120 = vector.shape_cast %119 : vector<16x128xf32> to vector<2x8x128xf32>
    %c0_114 = arith.constant 0 : index
    %c0_115 = arith.constant 0 : index
    %121 = vector.load %arg15[%c0_114, %c0_115] : memref<128x128xf32, #tpu.memory_space<vmem>>, vector<128x128xf32>
    %cst_116 = arith.constant dense<0.000000e+00> : vector<16x128xf32>
    %122 = tpu.matmul %114, %121, %cst_116 {dimension_numbers = #tpu.dot_dimension_numbers<[1], [0], [0], [1], [0, 0, 1, 1], [], []>} : vector<16x128xf32>, vector<128x128xf32>, vector<16x128xf32> -> vector<16x128xf32>
    %c0_117 = arith.constant 0 : index
    %c0_118 = arith.constant 0 : index
    %123 = vector.load %arg16[%c0_117, %c0_118] : memref<1x128xf32, #tpu.memory_space<vmem>>, vector<1x128xf32>
    %124 = vector.broadcast %123 : vector<1x128xf32> to vector<16x128xf32>
    %125 = arith.addf %122, %124 : vector<16x128xf32>
    %126 = vector.shape_cast %125 : vector<16x128xf32> to vector<2x8x128xf32>
    %c0_119 = arith.constant 0 : index
    %c0_120 = arith.constant 0 : index
    %127 = vector.load %arg17[%c0_119, %c0_120] : memref<128x128xf32, #tpu.memory_space<vmem>>, vector<128x128xf32>
    %cst_121 = arith.constant dense<0.000000e+00> : vector<16x128xf32>
    %128 = tpu.matmul %114, %127, %cst_121 {dimension_numbers = #tpu.dot_dimension_numbers<[1], [0], [0], [1], [0, 0, 1, 1], [], []>} : vector<16x128xf32>, vector<128x128xf32>, vector<16x128xf32> -> vector<16x128xf32>
    %c0_122 = arith.constant 0 : index
    %c0_123 = arith.constant 0 : index
    %129 = vector.load %arg18[%c0_122, %c0_123] : memref<1x128xf32, #tpu.memory_space<vmem>>, vector<1x128xf32>
    %130 = vector.broadcast %129 : vector<1x128xf32> to vector<16x128xf32>
    %131 = arith.addf %128, %130 : vector<16x128xf32>
    %132 = vector.shape_cast %131 : vector<16x128xf32> to vector<2x8x128xf32>
    "tpu.trace_start"() <{level = 10 : i32, message = "bqc,bkc->bqk"}> : () -> ()
    %cst_124 = arith.constant dense<0.000000e+00> : vector<2x8x8xf32>
    %133 = tpu.matmul %120, %126, %cst_124 {dimension_numbers = #tpu.dot_dimension_numbers<[2], [2], [1], [1], [0, 0, 0, 1, 1, 1], [0], [0]>} : vector<2x8x128xf32>, vector<2x8x128xf32>, vector<2x8x8xf32> -> vector<2x8x8xf32>
    "tpu.trace_stop"() : () -> ()
    %cst_125 = arith.constant 0.0883883461 : f32
    %134 = vector.broadcast %cst_125 : f32 to vector<2x8x8xf32>
    %135 = arith.mulf %133, %134 : vector<2x8x8xf32>
    %cst_126 = arith.constant dense<0xFF800000> : vector<2x8xf32>
    %136 = vector.multi_reduction <maximumf>, %135, %cst_126 [2] : vector<2x8x8xf32> to vector<2x8xf32>
    %137 = vector.shape_cast %136 : vector<2x8xf32> to vector<2x8x1xf32>
    %138 = vector.broadcast %137 : vector<2x8x1xf32> to vector<2x8x8xf32>
    %139 = arith.subf %135, %138 : vector<2x8x8xf32>
    %140 = math.exp %139 : vector<2x8x8xf32>
    %cst_127 = arith.constant dense<0.000000e+00> : vector<2x8xf32>
    %141 = vector.multi_reduction <add>, %140, %cst_127 [2] : vector<2x8x8xf32> to vector<2x8xf32>
    %142 = vector.shape_cast %141 : vector<2x8xf32> to vector<2x8x1xf32>
    %143 = tpu.reciprocal %142 {approx = true} : vector<2x8x1xf32> -> vector<2x8x1xf32>
    %144 = vector.broadcast %143 : vector<2x8x1xf32> to vector<2x8x8xf32>
    %145 = arith.mulf %140, %144 : vector<2x8x8xf32>
    "tpu.trace_start"() <{level = 10 : i32, message = "bqk,bkc->bqc"}> : () -> ()
    %cst_128 = arith.constant dense<0.000000e+00> : vector<2x8x128xf32>
    %146 = tpu.matmul %145, %132, %cst_128 {dimension_numbers = #tpu.dot_dimension_numbers<[2], [1], [1], [2], [0, 0, 0, 1, 1, 2], [0], [0]>} : vector<2x8x8xf32>, vector<2x8x128xf32>, vector<2x8x128xf32> -> vector<2x8x128xf32>
    "tpu.trace_stop"() : () -> ()
    %cst_129 = arith.constant 3.928000e-01 : f32
    %147 = vector.broadcast %cst_129 : f32 to vector<2x8x128xf32>
    %148 = arith.mulf %147, %146 : vector<2x8x128xf32>
    %149 = arith.addf %113, %148 : vector<2x8x128xf32>
    %cst_130 = arith.constant 0.000000e+00 : f32
    %150 = vector.broadcast %cst_130 : f32 to vector<2x256xf32>
    %151 = vector.extract_strided_slice %149 {offsets = [0, 0, 0], sizes = [2, 1, 128], strides = [1, 1, 1]} : vector<2x8x128xf32> to vector<2x1x128xf32>
    %152 = vector.shape_cast %151 : vector<2x1x128xf32> to vector<2x128xf32>
    %c0_131 = arith.constant 0 : index
    %c0_132 = arith.constant 0 : index
    %c0_133 = arith.constant 0 : index
    %153 = vector.load %arg19[%c0_131, %c0_132, %c0_133] : memref<8x128x256xf32, #tpu.memory_space<vmem>>, vector<1x128x256xf32>
    %154 = vector.shape_cast %153 : vector<1x128x256xf32> to vector<128x256xf32>
    %cst_134 = arith.constant dense<0.000000e+00> : vector<2x256xf32>
    %155 = tpu.matmul %152, %154, %cst_134 {dimension_numbers = #tpu.dot_dimension_numbers<[1], [0], [0], [1], [0, 0, 1, 1], [], []>} : vector<2x128xf32>, vector<128x256xf32>, vector<2x256xf32> -> vector<2x256xf32>
    %156 = arith.addf %150, %155 : vector<2x256xf32>
    %157 = vector.extract_strided_slice %149 {offsets = [0, 1, 0], sizes = [2, 1, 128], strides = [1, 1, 1]} : vector<2x8x128xf32> to vector<2x1x128xf32>
    %158 = vector.shape_cast %157 : vector<2x1x128xf32> to vector<2x128xf32>
    %c1_135 = arith.constant 1 : index
    %c0_136 = arith.constant 0 : index
    %c0_137 = arith.constant 0 : index
    %159 = vector.load %arg19[%c1_135, %c0_136, %c0_137] : memref<8x128x256xf32, #tpu.memory_space<vmem>>, vector<1x128x256xf32>
    %160 = vector.shape_cast %159 : vector<1x128x256xf32> to vector<128x256xf32>
    %cst_138 = arith.constant dense<0.000000e+00> : vector<2x256xf32>
    %161 = tpu.matmul %158, %160, %cst_138 {dimension_numbers = #tpu.dot_dimension_numbers<[1], [0], [0], [1], [0, 0, 1, 1], [], []>} : vector<2x128xf32>, vector<128x256xf32>, vector<2x256xf32> -> vector<2x256xf32>
    %162 = arith.addf %156, %161 : vector<2x256xf32>
    %163 = vector.extract_strided_slice %149 {offsets = [0, 2, 0], sizes = [2, 1, 128], strides = [1, 1, 1]} : vector<2x8x128xf32> to vector<2x1x128xf32>
    %164 = vector.shape_cast %163 : vector<2x1x128xf32> to vector<2x128xf32>
    %c2_139 = arith.constant 2 : index
    %c0_140 = arith.constant 0 : index
    %c0_141 = arith.constant 0 : index
    %165 = vector.load %arg19[%c2_139, %c0_140, %c0_141] : memref<8x128x256xf32, #tpu.memory_space<vmem>>, vector<1x128x256xf32>
    %166 = vector.shape_cast %165 : vector<1x128x256xf32> to vector<128x256xf32>
    %cst_142 = arith.constant dense<0.000000e+00> : vector<2x256xf32>
    %167 = tpu.matmul %164, %166, %cst_142 {dimension_numbers = #tpu.dot_dimension_numbers<[1], [0], [0], [1], [0, 0, 1, 1], [], []>} : vector<2x128xf32>, vector<128x256xf32>, vector<2x256xf32> -> vector<2x256xf32>
    %168 = arith.addf %162, %167 : vector<2x256xf32>
    %169 = vector.extract_strided_slice %149 {offsets = [0, 3, 0], sizes = [2, 1, 128], strides = [1, 1, 1]} : vector<2x8x128xf32> to vector<2x1x128xf32>
    %170 = vector.shape_cast %169 : vector<2x1x128xf32> to vector<2x128xf32>
    %c3_143 = arith.constant 3 : index
    %c0_144 = arith.constant 0 : index
    %c0_145 = arith.constant 0 : index
    %171 = vector.load %arg19[%c3_143, %c0_144, %c0_145] : memref<8x128x256xf32, #tpu.memory_space<vmem>>, vector<1x128x256xf32>
    %172 = vector.shape_cast %171 : vector<1x128x256xf32> to vector<128x256xf32>
    %cst_146 = arith.constant dense<0.000000e+00> : vector<2x256xf32>
    %173 = tpu.matmul %170, %172, %cst_146 {dimension_numbers = #tpu.dot_dimension_numbers<[1], [0], [0], [1], [0, 0, 1, 1], [], []>} : vector<2x128xf32>, vector<128x256xf32>, vector<2x256xf32> -> vector<2x256xf32>
    %174 = arith.addf %168, %173 : vector<2x256xf32>
    %175 = vector.extract_strided_slice %149 {offsets = [0, 4, 0], sizes = [2, 1, 128], strides = [1, 1, 1]} : vector<2x8x128xf32> to vector<2x1x128xf32>
    %176 = vector.shape_cast %175 : vector<2x1x128xf32> to vector<2x128xf32>
    %c4_147 = arith.constant 4 : index
    %c0_148 = arith.constant 0 : index
    %c0_149 = arith.constant 0 : index
    %177 = vector.load %arg19[%c4_147, %c0_148, %c0_149] : memref<8x128x256xf32, #tpu.memory_space<vmem>>, vector<1x128x256xf32>
    %178 = vector.shape_cast %177 : vector<1x128x256xf32> to vector<128x256xf32>
    %cst_150 = arith.constant dense<0.000000e+00> : vector<2x256xf32>
    %179 = tpu.matmul %176, %178, %cst_150 {dimension_numbers = #tpu.dot_dimension_numbers<[1], [0], [0], [1], [0, 0, 1, 1], [], []>} : vector<2x128xf32>, vector<128x256xf32>, vector<2x256xf32> -> vector<2x256xf32>
    %180 = arith.addf %174, %179 : vector<2x256xf32>
    %181 = vector.extract_strided_slice %149 {offsets = [0, 5, 0], sizes = [2, 1, 128], strides = [1, 1, 1]} : vector<2x8x128xf32> to vector<2x1x128xf32>
    %182 = vector.shape_cast %181 : vector<2x1x128xf32> to vector<2x128xf32>
    %c5_151 = arith.constant 5 : index
    %c0_152 = arith.constant 0 : index
    %c0_153 = arith.constant 0 : index
    %183 = vector.load %arg19[%c5_151, %c0_152, %c0_153] : memref<8x128x256xf32, #tpu.memory_space<vmem>>, vector<1x128x256xf32>
    %184 = vector.shape_cast %183 : vector<1x128x256xf32> to vector<128x256xf32>
    %cst_154 = arith.constant dense<0.000000e+00> : vector<2x256xf32>
    %185 = tpu.matmul %182, %184, %cst_154 {dimension_numbers = #tpu.dot_dimension_numbers<[1], [0], [0], [1], [0, 0, 1, 1], [], []>} : vector<2x128xf32>, vector<128x256xf32>, vector<2x256xf32> -> vector<2x256xf32>
    %186 = arith.addf %180, %185 : vector<2x256xf32>
    %187 = vector.extract_strided_slice %149 {offsets = [0, 6, 0], sizes = [2, 1, 128], strides = [1, 1, 1]} : vector<2x8x128xf32> to vector<2x1x128xf32>
    %188 = vector.shape_cast %187 : vector<2x1x128xf32> to vector<2x128xf32>
    %c6_155 = arith.constant 6 : index
    %c0_156 = arith.constant 0 : index
    %c0_157 = arith.constant 0 : index
    %189 = vector.load %arg19[%c6_155, %c0_156, %c0_157] : memref<8x128x256xf32, #tpu.memory_space<vmem>>, vector<1x128x256xf32>
    %190 = vector.shape_cast %189 : vector<1x128x256xf32> to vector<128x256xf32>
    %cst_158 = arith.constant dense<0.000000e+00> : vector<2x256xf32>
    %191 = tpu.matmul %188, %190, %cst_158 {dimension_numbers = #tpu.dot_dimension_numbers<[1], [0], [0], [1], [0, 0, 1, 1], [], []>} : vector<2x128xf32>, vector<128x256xf32>, vector<2x256xf32> -> vector<2x256xf32>
    %192 = arith.addf %186, %191 : vector<2x256xf32>
    %193 = vector.extract_strided_slice %149 {offsets = [0, 7, 0], sizes = [2, 1, 128], strides = [1, 1, 1]} : vector<2x8x128xf32> to vector<2x1x128xf32>
    %194 = vector.shape_cast %193 : vector<2x1x128xf32> to vector<2x128xf32>
    %c7 = arith.constant 7 : index
    %c0_159 = arith.constant 0 : index
    %c0_160 = arith.constant 0 : index
    %195 = vector.load %arg19[%c7, %c0_159, %c0_160] : memref<8x128x256xf32, #tpu.memory_space<vmem>>, vector<1x128x256xf32>
    %196 = vector.shape_cast %195 : vector<1x128x256xf32> to vector<128x256xf32>
    %cst_161 = arith.constant dense<0.000000e+00> : vector<2x256xf32>
    %197 = tpu.matmul %194, %196, %cst_161 {dimension_numbers = #tpu.dot_dimension_numbers<[1], [0], [0], [1], [0, 0, 1, 1], [], []>} : vector<2x128xf32>, vector<128x256xf32>, vector<2x256xf32> -> vector<2x256xf32>
    %198 = arith.addf %192, %197 : vector<2x256xf32>
    %c0_162 = arith.constant 0 : index
    %c0_163 = arith.constant 0 : index
    %199 = vector.load %arg20[%c0_162, %c0_163] : memref<1x256xf32, #tpu.memory_space<vmem>>, vector<1x256xf32>
    %200 = vector.broadcast %199 : vector<1x256xf32> to vector<2x256xf32>
    %201 = arith.addf %198, %200 : vector<2x256xf32>
    %cst_164 = arith.constant 0.000000e+00 : f32
    %202 = vector.broadcast %cst_164 : f32 to vector<2x256xf32>
    %203 = arith.cmpf ogt, %201, %202 : vector<2x256xf32>
    %cst_165 = arith.constant 1.000000e-01 : f32
    %204 = vector.broadcast %cst_165 : f32 to vector<2x256xf32>
    %205 = arith.mulf %204, %201 : vector<2x256xf32>
    %206 = arith.select %203, %201, %205 : vector<2x256xi1>, vector<2x256xf32>
    %c0_166 = arith.constant 0 : index
    %c0_167 = arith.constant 0 : index
    %207 = vector.load %arg21[%c0_166, %c0_167] : memref<256x128xf32, #tpu.memory_space<vmem>>, vector<256x128xf32>
    %cst_168 = arith.constant dense<0.000000e+00> : vector<2x128xf32>
    %208 = tpu.matmul %206, %207, %cst_168 {dimension_numbers = #tpu.dot_dimension_numbers<[1], [0], [0], [1], [0, 0, 1, 1], [], []>} : vector<2x256xf32>, vector<256x128xf32>, vector<2x128xf32> -> vector<2x128xf32>
    %c0_169 = arith.constant 0 : index
    %c0_170 = arith.constant 0 : index
    %209 = vector.load %arg22[%c0_169, %c0_170] : memref<1x128xf32, #tpu.memory_space<vmem>>, vector<1x128xf32>
    %210 = vector.broadcast %209 : vector<1x128xf32> to vector<2x128xf32>
    %211 = arith.addf %208, %210 : vector<2x128xf32>
    %cst_171 = arith.constant 0.000000e+00 : f32
    %212 = vector.broadcast %cst_171 : f32 to vector<2x128xf32>
    %213 = arith.cmpf ogt, %211, %212 : vector<2x128xf32>
    %cst_172 = arith.constant 1.000000e-01 : f32
    %214 = vector.broadcast %cst_172 : f32 to vector<2x128xf32>
    %215 = arith.mulf %214, %211 : vector<2x128xf32>
    %216 = arith.select %213, %211, %215 : vector<2x128xi1>, vector<2x128xf32>
    %c0_173 = arith.constant 0 : index
    %c0_174 = arith.constant 0 : index
    %217 = vector.load %arg23[%c0_173, %c0_174] : memref<128x1xf32, #tpu.memory_space<vmem>>, vector<128x1xf32>
    %cst_175 = arith.constant dense<0.000000e+00> : vector<2x1xf32>
    %218 = tpu.matmul %216, %217, %cst_175 {dimension_numbers = #tpu.dot_dimension_numbers<[1], [0], [0], [1], [0, 0, 1, 1], [], []>} : vector<2x128xf32>, vector<128x1xf32>, vector<2x1xf32> -> vector<2x1xf32>
    %c0_176 = arith.constant 0 : index
    %c0_177 = arith.constant 0 : index
    %219 = vector.load %arg24[%c0_176, %c0_177] : memref<1x1xf32, #tpu.memory_space<vmem>>, vector<1x1xf32>
    %220 = vector.broadcast %219 : vector<1x1xf32> to vector<2x1xf32>
    %221 = arith.addf %218, %220 : vector<2x1xf32>
    %c0_178 = arith.constant 0 : index
    %c0_179 = arith.constant 0 : index
    %222 = vector.load %arg25[%c0_178, %c0_179] : memref<2x1xf32, #tpu.memory_space<vmem>>, vector<2x1xf32>
    tpu.vector_store %arg25[%c0_178, %c0_179], %221 {strides = array<i32>} : memref<2x1xf32, #tpu.memory_space<vmem>>, vector<2x1xf32>,
    return
  }
}

</mosaic_0001>

<llo_original>
// kernel: tpu_custom_call.1
$region0: #{tpu_custom_call.1}
  #allocation0 [shape = 'u32[]', space=smem, size = 0x4, offset = 0x4, fixed_abs, tag = 'smem constant byte address 0x4 - core index']
  #allocation1 [shape = 'u32[72,128]{1,0:T(1,128)}', space=vmem, size = 0x9000, scoped, tag = 'internal scratch']
  #allocation2 [shape = 'f32[2,32,7]{2,1,0:T(8,128)}', space=vmem, size = 0x8000, scoped, tag = 'scratch operand']
  #allocation3 [shape = 'f32[2,16,224]{2,1,0:T(8,128)}', space=vmem, size = 0x8000, scoped, tag = 'scratch operand']
  #allocation4 [shape = 'f32[2,8,448]{2,1,0:T(8,128)}', space=vmem, size = 0x8000, scoped, tag = 'scratch operand']
  #allocation5 [shape = 'f32[1,1]{1,0:T(1,128)S(1)}', space=vmem, size = 0x200, scoped, tag = 'scoped memory for tpu_custom_call.1']
  %s0 = inlined_call_operand.vmem [shape: f32[2,32,1], index: 0, kind: input, shape index: {}]
  %s1 = inlined_call_operand.vmem [shape: f32[7,32], index: 1, kind: input, shape index: {}]
  %s2 = inlined_call_operand.vmem [shape: f32[1,32], index: 2, kind: input, shape index: {}]
  %s3 = inlined_call_operand.hbm [shape: f32[1,32], index: 3, kind: input, shape index: {}]
  %s4 = inlined_call_operand.hbm [shape: f32[1,32], index: 4, kind: input, shape index: {}]
  %s5 = inlined_call_operand.vmem [shape: f32[224,64], index: 5, kind: input, shape index: {}]
  %s6 = inlined_call_operand.hbm [shape: f32[1,64], index: 6, kind: input, shape index: {}]
  %s7 = inlined_call_operand.vmem [shape: f32[32,64], index: 7, kind: input, shape index: {}]
  %s8 = inlined_call_operand.hbm [shape: f32[1,64], index: 8, kind: input, shape index: {}]
  %s9 = inlined_call_operand.hbm [shape: f32[448,128], index: 9, kind: input, shape index: {}]
  %s10 = inlined_call_operand.vmem [shape: f32[1,128], index: 10, kind: input, shape index: {}]
  %s11 = inlined_call_operand.hbm [shape: f32[64,128], index: 11, kind: input, shape index: {}]
  %s12 = inlined_call_operand.vmem [shape: f32[1,128], index: 12, kind: input, shape index: {}]
  %s13 = inlined_call_operand.vmem [shape: f32[128,128], index: 13, kind: input, shape index: {}]
  %s14 = inlined_call_operand.hbm [shape: f32[1,128], index: 14, kind: input, shape index: {}]
  %s15 = inlined_call_operand.hbm [shape: f32[128,128], index: 15, kind: input, shape index: {}]
  %s16 = inlined_call_operand.vmem [shape: f32[1,128], index: 16, kind: input, shape index: {}]
  %s17 = inlined_call_operand.hbm [shape: f32[128,128], index: 17, kind: input, shape index: {}]
  %s18 = inlined_call_operand.vmem [shape: f32[1,128], index: 18, kind: input, shape index: {}]
  %s19 = inlined_call_operand.hbm [shape: f32[8,128,256], index: 19, kind: input, shape index: {}]
  %s20 = inlined_call_operand.vmem [shape: f32[1,256], index: 20, kind: input, shape index: {}]
  %s21 = inlined_call_operand.vmem [shape: f32[256,128], index: 21, kind: input, shape index: {}]
  %s22 = inlined_call_operand.vmem [shape: f32[1,128], index: 22, kind: input, shape index: {}]
  %s23 = inlined_call_operand.vmem [shape: f32[128,1], index: 23, kind: input, shape index: {}]
  %s24 = inlined_call_operand.<no memory space> [shape: f32[1,1], index: 24, kind: input, shape index: {}]
  %s25 = inlined_call_operand.vmem [shape: f32[2,1], index: 25, kind: output, shape index: {}]
  %s26 = sld [smem:[#allocation0]]
  $region150: #{tpu_custom_call.1} parent=0
    _
  %s28 = ssub.s32 1, %s26
  %s29 = scalar_select 0, %s28, %s26
  %v30 = vstv %s24
  %31 = vst [vmem:[#allocation5] sm:$0x1] %v30
  $region1: #{tpu_custom_call.1} parent=0
    #allocation6 [shape = 'u8[512]{0}', space=vmem, size = 0x400, scoped, tag = 'input window, operand 3, single buffered']
    #allocation7 [shape = 's32[1]{0}', space=sflag, size = 0x4, scoped, tag = 'scoped memory for tpu_custom_call.1']
    #allocation8 [shape = 'u8[512]{0}', space=vmem, size = 0x400, scoped, tag = 'input window, operand 4, single buffered']
    #allocation9 [shape = 's32[1]{0}', space=sflag, size = 0x4, scoped, tag = 'scoped memory for tpu_custom_call.1']
    #allocation10 [shape = 'u8[512]{0}', space=vmem, size = 0x400, scoped, tag = 'input window, operand 6, single buffered']
    #allocation11 [shape = 'u8[512]{0}', space=vmem, size = 0x400, scoped, tag = 'input window, operand 8, single buffered']
    #allocation12 [shape = 's32[1]{0}', space=sflag, size = 0x4, scoped, tag = 'scoped memory for tpu_custom_call.1']
    #allocation13 [shape = 'u8[229376]{0}', space=vmem, size = 0x38000, scoped, tag = 'input window, operand 9, single buffered']
    #allocation14 [shape = 'u8[32768]{0}', space=vmem, size = 0x8000, scoped, tag = 'input window, operand 11, single buffered']
    #allocation15 [shape = 's32[1]{0}', space=sflag, size = 0x4, scoped, tag = 'scoped memory for tpu_custom_call.1']
    #allocation16 [shape = 'u8[512]{0}', space=vmem, size = 0x400, scoped, tag = 'input window, operand 14, single buffered']
    #allocation17 [shape = 'u8[65536]{0}', space=vmem, size = 0x10000, scoped, tag = 'input window, operand 15, single buffered']
    #allocation18 [shape = 's32[1]{0}', space=sflag, size = 0x4, scoped, tag = 'scoped memory for tpu_custom_call.1']
    #allocation19 [shape = 'u8[65536]{0}', space=vmem, size = 0x10000, scoped, tag = 'input window, operand 17, single buffered']
    #allocation20 [shape = 'u8[1048576]{0}', space=vmem, size = 0x100000, scoped, tag = 'input window, operand 19, single buffered']
    #allocation21 [shape = 's32[1]{0}', space=sflag, size = 0x4, scoped, tag = 'scoped memory for tpu_custom_call.1']
    %32 = vsyncpa [#allocation7], 0
    %33 = vsyncpa [#allocation9], 0
    %34 = vsyncpa [#allocation12], 0
    %35 = vsyncpa [#allocation15], 0
    %36 = vsyncpa [#allocation18], 0
    %37 = vsyncpa [#allocation21], 0
    // Predicated region
    $region2: #{tpu_custom_call.1} parent=1 // pred_check
      _
    $region3: #{tpu_custom_call.1} parent=1 // pred_check_branch
      %39 = sbr.rel (0) target = $region5
    $region4: #{tpu_custom_call.1} parent=1 // pred_region
      _
    $region5: #{tpu_custom_call.1} parent=1 // pred_fallthru
      _
    // Predicated region
    $region6: #{tpu_custom_call.1} parent=1 // pred_check
      _
    $region7: #{tpu_custom_call.1} parent=1 // pred_check_branch
      %41 = sbr.rel (0) target = $region9
    $region8: #{tpu_custom_call.1} parent=1 // pred_region
      _
    $region9: #{tpu_custom_call.1} parent=1 // pred_fallthru
      _
    // Predicated region
    $region10: #{tpu_custom_call.1} parent=1 // pred_check
      _
    $region11: #{tpu_custom_call.1} parent=1 // pred_check_branch
      %43 = sbr.rel (0) target = $region13
    $region12: #{tpu_custom_call.1} parent=1 // pred_region
      _
    $region13: #{tpu_custom_call.1} parent=1 // pred_fallthru
      _
    // Predicated region
    $region14: #{tpu_custom_call.1} parent=1 // pred_check
      _
    $region15: #{tpu_custom_call.1} parent=1 // pred_check_branch
      %45 = sbr.rel (0) target = $region17
    $region16: #{tpu_custom_call.1} parent=1 // pred_region
      %47 = vsyncadd [#allocation7], 0
      %s49 = sshll.u32 %s3, 4
      %s50 = int_to_ptr.hbm [resolvable:$true] %s49
      %s51 = sshll.u32 [#allocation6], 4
      %s52 = int_to_ptr.vmem [resolvable:$true] %s51
      %54 = dma.hbm_to_vmem [thread:$0]  %s50, 16, %s52, [#allocation7]
    $region17: #{tpu_custom_call.1} parent=1 // pred_fallthru
      _
    // Predicated region
    $region18: #{tpu_custom_call.1} parent=1 // pred_check
      _
    $region19: #{tpu_custom_call.1} parent=1 // pred_check_branch
      %56 = sbr.rel (0) target = $region21
    $region20: #{tpu_custom_call.1} parent=1 // pred_region
      %58 = vsyncadd [#allocation9], 0
      %s60 = sshll.u32 %s4, 4
      %s61 = int_to_ptr.hbm [resolvable:$true] %s60
      %s62 = sshll.u32 [#allocation8], 4
      %s63 = int_to_ptr.vmem [resolvable:$true] %s62
      %65 = dma.hbm_to_vmem [thread:$0]  %s61, 16, %s63, [#allocation9]
    $region21: #{tpu_custom_call.1} parent=1 // pred_fallthru
      _
    // Predicated region
    $region22: #{tpu_custom_call.1} parent=1 // pred_check
      _
    $region23: #{tpu_custom_call.1} parent=1 // pred_check_branch
      %67 = sbr.rel (0) target = $region25
    $region24: #{tpu_custom_call.1} parent=1 // pred_region
      _
    $region25: #{tpu_custom_call.1} parent=1 // pred_fallthru
      _
    // Predicated region
    $region26: #{tpu_custom_call.1} parent=1 // pred_check
      _
    $region27: #{tpu_custom_call.1} parent=1 // pred_check_branch
      %69 = sbr.rel (0) target = $region29
    $region28: #{tpu_custom_call.1} parent=1 // pred_region
      %71 = vsyncadd [#allocation9], 0
      %s73 = sshll.u32 %s6, 4
      %s74 = int_to_ptr.hbm [resolvable:$true] %s73
      %s75 = sshll.u32 [#allocation10], 4
      %s76 = int_to_ptr.vmem [resolvable:$true] %s75
      %78 = dma.hbm_to_vmem [thread:$0]  %s74, 16, %s76, [#allocation9]
    $region29: #{tpu_custom_call.1} parent=1 // pred_fallthru
      _
    // Predicated region
    $region30: #{tpu_custom_call.1} parent=1 // pred_check
      _
    $region31: #{tpu_custom_call.1} parent=1 // pred_check_branch
      %80 = sbr.rel (0) target = $region33
    $region32: #{tpu_custom_call.1} parent=1 // pred_region
      _
    $region33: #{tpu_custom_call.1} parent=1 // pred_fallthru
      _
    // Predicated region
    $region34: #{tpu_custom_call.1} parent=1 // pred_check
      _
    $region35: #{tpu_custom_call.1} parent=1 // pred_check_branch
      %82 = sbr.rel (0) target = $region37
    $region36: #{tpu_custom_call.1} parent=1 // pred_region
      %84 = vsyncadd [#allocation12], 0
      %s86 = sshll.u32 %s8, 4
      %s87 = int_to_ptr.hbm [resolvable:$true] %s86
      %s88 = sshll.u32 [#allocation11], 4
      %s89 = int_to_ptr.vmem [resolvable:$true] %s88
      %91 = dma.hbm_to_vmem [thread:$0]  %s87, 16, %s89, [#allocation12]
    $region37: #{tpu_custom_call.1} parent=1 // pred_fallthru
      _
    // Predicated region
    $region38: #{tpu_custom_call.1} parent=1 // pred_check
      _
    $region39: #{tpu_custom_call.1} parent=1 // pred_check_branch
      %93 = sbr.rel (0) target = $region41
    $region40: #{tpu_custom_call.1} parent=1 // pred_region
      %95 = vsyncadd [#allocation12], 0
      %s96 = sshll.u32 %s9, 4
      %s97 = int_to_ptr.hbm [resolvable:$true] %s96
      %s98 = sshll.u32 [#allocation13], 4
      %s99 = int_to_ptr.vmem [resolvable:$true] %s98
      %104 = dma.hbm_to_vmem [thread:$0]  %s97, 7168, %s99, [#allocation12], 128, 128, 8
    $region41: #{tpu_custom_call.1} parent=1 // pred_fallthru
      _
    // Predicated region
    $region42: #{tpu_custom_call.1} parent=1 // pred_check
      _
    $region43: #{tpu_custom_call.1} parent=1 // pred_check_branch
      %106 = sbr.rel (0) target = $region45
    $region44: #{tpu_custom_call.1} parent=1 // pred_region
      _
    $region45: #{tpu_custom_call.1} parent=1 // pred_fallthru
      _
    // Predicated region
    $region46: #{tpu_custom_call.1} parent=1 // pred_check
      _
    $region47: #{tpu_custom_call.1} parent=1 // pred_check_branch
      %108 = sbr.rel (0) target = $region49
    $region48: #{tpu_custom_call.1} parent=1 // pred_region
      %110 = vsyncadd [#allocation15], 0
      %s111 = sshll.u32 %s11, 4
      %s112 = int_to_ptr.hbm [resolvable:$true] %s111
      %s113 = sshll.u32 [#allocation14], 4
      %s114 = int_to_ptr.vmem [resolvable:$true] %s113
      %119 = dma.hbm_to_vmem [thread:$0]  %s112, 1024, %s114, [#allocation15], 128, 128, 8
    $region49: #{tpu_custom_call.1} parent=1 // pred_fallthru
      _
    // Predicated region
    $region50: #{tpu_custom_call.1} parent=1 // pred_check
      _
    $region51: #{tpu_custom_call.1} parent=1 // pred_check_branch
      %121 = sbr.rel (0) target = $region53
    $region52: #{tpu_custom_call.1} parent=1 // pred_region
      _
    $region53: #{tpu_custom_call.1} parent=1 // pred_fallthru
      _
    // Predicated region
    $region54: #{tpu_custom_call.1} parent=1 // pred_check
      _
    $region55: #{tpu_custom_call.1} parent=1 // pred_check_branch
      %123 = sbr.rel (0) target = $region57
    $region56: #{tpu_custom_call.1} parent=1 // pred_region
      _
    $region57: #{tpu_custom_call.1} parent=1 // pred_fallthru
      _
    // Predicated region
    $region58: #{tpu_custom_call.1} parent=1 // pred_check
      _
    $region59: #{tpu_custom_call.1} parent=1 // pred_check_branch
      %125 = sbr.rel (0) target = $region61
    $region60: #{tpu_custom_call.1} parent=1 // pred_region
      %127 = vsyncadd [#allocation15], 0
      %s129 = sshll.u32 %s14, 4
      %s130 = int_to_ptr.hbm [resolvable:$true] %s129
      %s131 = sshll.u32 [#allocation16], 4
      %s132 = int_to_ptr.vmem [resolvable:$true] %s131
      %134 = dma.hbm_to_vmem [thread:$0]  %s130, 16, %s132, [#allocation15]
    $region61: #{tpu_custom_call.1} parent=1 // pred_fallthru
      _
    // Predicated region
    $region62: #{tpu_custom_call.1} parent=1 // pred_check
      _
    $region63: #{tpu_custom_call.1} parent=1 // pred_check_branch
      %136 = sbr.rel (0) target = $region65
    $region64: #{tpu_custom_call.1} parent=1 // pred_region
      %138 = vsyncadd [#allocation18], 0
      %s139 = sshll.u32 %s15, 4
      %s140 = int_to_ptr.hbm [resolvable:$true] %s139
      %s141 = sshll.u32 [#allocation17], 4
      %s142 = int_to_ptr.vmem [resolvable:$true] %s141
      %147 = dma.hbm_to_vmem [thread:$0]  %s140, 2048, %s142, [#allocation18], 128, 128, 8
    $region65: #{tpu_custom_call.1} parent=1 // pred_fallthru
      _
    // Predicated region
    $region66: #{tpu_custom_call.1} parent=1 // pred_check
      _
    $region67: #{tpu_custom_call.1} parent=1 // pred_check_branch
      %149 = sbr.rel (0) target = $region69
    $region68: #{tpu_custom_call.1} parent=1 // pred_region
      _
    $region69: #{tpu_custom_call.1} parent=1 // pred_fallthru
      _
    // Predicated region
    $region70: #{tpu_custom_call.1} parent=1 // pred_check
      _
    $region71: #{tpu_custom_call.1} parent=1 // pred_check_branch
      %151 = sbr.rel (0) target = $region73
    $region72: #{tpu_custom_call.1} parent=1 // pred_region
      %153 = vsyncadd [#allocation18], 0
      %s154 = sshll.u32 %s17, 4
      %s155 = int_to_ptr.hbm [resolvable:$true] %s154
      %s156 = sshll.u32 [#allocation19], 4
      %s157 = int_to_ptr.vmem [resolvable:$true] %s156
      %162 = dma.hbm_to_vmem [thread:$0]  %s155, 2048, %s157, [#allocation18], 128, 128, 8
    $region73: #{tpu_custom_call.1} parent=1 // pred_fallthru
      _
    // Predicated region
    $region74: #{tpu_custom_call.1} parent=1 // pred_check
      _
    $region75: #{tpu_custom_call.1} parent=1 // pred_check_branch
      %164 = sbr.rel (0) target = $region77
    $region76: #{tpu_custom_call.1} parent=1 // pred_region
      _
    $region77: #{tpu_custom_call.1} parent=1 // pred_fallthru
      _
    // Predicated region
    $region78: #{tpu_custom_call.1} parent=1 // pred_check
      _
    $region79: #{tpu_custom_call.1} parent=1 // pred_check_branch
      %166 = sbr.rel (0) target = $region81
    $region80: #{tpu_custom_call.1} parent=1 // pred_region
      %168 = vsyncadd [#allocation21], 0
      %s169 = sshll.u32 %s19, 4
      %s170 = int_to_ptr.hbm [resolvable:$true] %s169
      %s171 = sshll.u32 [#allocation20], 4
      %s172 = int_to_ptr.vmem [resolvable:$true] %s171
      %177 = dma.hbm_to_vmem [thread:$0]  %s170, 32768, %s172, [#allocation21], 256, 256, 16
    $region81: #{tpu_custom_call.1} parent=1 // pred_fallthru
      _
    // Predicated region
    $region82: #{tpu_custom_call.1} parent=1 // pred_check
      _
    $region83: #{tpu_custom_call.1} parent=1 // pred_check_branch
      %179 = sbr.rel (0) target = $region85
    $region84: #{tpu_custom_call.1} parent=1 // pred_region
      _
    $region85: #{tpu_custom_call.1} parent=1 // pred_fallthru
      _
    // Predicated region
    $region86: #{tpu_custom_call.1} parent=1 // pred_check
      _
    $region87: #{tpu_custom_call.1} parent=1 // pred_check_branch
      %181 = sbr.rel (0) target = $region89
    $region88: #{tpu_custom_call.1} parent=1 // pred_region
      _
    $region89: #{tpu_custom_call.1} parent=1 // pred_fallthru
      _
    // Predicated region
    $region90: #{tpu_custom_call.1} parent=1 // pred_check
      _
    $region91: #{tpu_custom_call.1} parent=1 // pred_check_branch
      %183 = sbr.rel (0) target = $region93
    $region92: #{tpu_custom_call.1} parent=1 // pred_region
      _
    $region93: #{tpu_custom_call.1} parent=1 // pred_fallthru
      _
    // Predicated region
    $region94: #{tpu_custom_call.1} parent=1 // pred_check
      _
    $region95: #{tpu_custom_call.1} parent=1 // pred_check_branch
      %185 = sbr.rel (0) target = $region97
    $region96: #{tpu_custom_call.1} parent=1 // pred_region
      _
    $region97: #{tpu_custom_call.1} parent=1 // pred_fallthru
      _
    // Predicated region
    $region98: #{tpu_custom_call.1} parent=1 // pred_check
      _
    $region99: #{tpu_custom_call.1} parent=1 // pred_check_branch
      %187 = sbr.rel (0) target = $region101
    $region100: #{tpu_custom_call.1} parent=1 // pred_region
      _
    $region101: #{tpu_custom_call.1} parent=1 // pred_fallthru
      _
    // Predicated region
    $region102: #{tpu_custom_call.1} parent=1 // pred_check
      _
    $region103: #{tpu_custom_call.1} parent=1 // pred_check_branch
      %189 = sbr.rel (0) target = $region105
    $region104: #{tpu_custom_call.1} parent=1 // pred_region
      %191 = dma.done [#allocation7], 16
    $region105: #{tpu_custom_call.1} parent=1 // pred_fallthru
      _
    // Predicated region
    $region106: #{tpu_custom_call.1} parent=1 // pred_check
      _
    $region107: #{tpu_custom_call.1} parent=1 // pred_check_branch
      %193 = sbr.rel (0) target = $region109
    $region108: #{tpu_custom_call.1} parent=1 // pred_region
      %195 = dma.done [#allocation9], 16
    $region109: #{tpu_custom_call.1} parent=1 // pred_fallthru
      _
    // Predicated region
    $region110: #{tpu_custom_call.1} parent=1 // pred_check
      _
    $region111: #{tpu_custom_call.1} parent=1 // pred_check_branch
      %197 = sbr.rel (0) target = $region113
    $region112: #{tpu_custom_call.1} parent=1 // pred_region
      %199 = dma.done [#allocation9], 16
    $region113: #{tpu_custom_call.1} parent=1 // pred_fallthru
      _
    // Predicated region
    $region114: #{tpu_custom_call.1} parent=1 // pred_check
      _
    $region115: #{tpu_custom_call.1} parent=1 // pred_check_branch
      %201 = sbr.rel (0) target = $region117
    $region116: #{tpu_custom_call.1} parent=1 // pred_region
      %203 = dma.done [#allocation12], 16
    $region117: #{tpu_custom_call.1} parent=1 // pred_fallthru
      _
    // Predicated region
    $region118: #{tpu_custom_call.1} parent=1 // pred_check
      _
    $region119: #{tpu_custom_call.1} parent=1 // pred_check_branch
      %205 = sbr.rel (0) target = $region121
    $region120: #{tpu_custom_call.1} parent=1 // pred_region
      %207 = dma.done [#allocation12], 7168
    $region121: #{tpu_custom_call.1} parent=1 // pred_fallthru
      _
    // Predicated region
    $region122: #{tpu_custom_call.1} parent=1 // pred_check
      _
    $region123: #{tpu_custom_call.1} parent=1 // pred_check_branch
      %209 = sbr.rel (0) target = $region125
    $region124: #{tpu_custom_call.1} parent=1 // pred_region
      %211 = dma.done [#allocation15], 1024
    $region125: #{tpu_custom_call.1} parent=1 // pred_fallthru
      _
    // Predicated region
    $region126: #{tpu_custom_call.1} parent=1 // pred_check
      _
    $region127: #{tpu_custom_call.1} parent=1 // pred_check_branch
      %213 = sbr.rel (0) target = $region129
    $region128: #{tpu_custom_call.1} parent=1 // pred_region
      %215 = dma.done [#allocation15], 16
    $region129: #{tpu_custom_call.1} parent=1 // pred_fallthru
      _
    // Predicated region
    $region130: #{tpu_custom_call.1} parent=1 // pred_check
      _
    $region131: #{tpu_custom_call.1} parent=1 // pred_check_branch
      %217 = sbr.rel (0) target = $region133
    $region132: #{tpu_custom_call.1} parent=1 // pred_region
      %219 = dma.done [#allocation18], 2048
    $region133: #{tpu_custom_call.1} parent=1 // pred_fallthru
      _
    // Predicated region
    $region134: #{tpu_custom_call.1} parent=1 // pred_check
      _
    $region135: #{tpu_custom_call.1} parent=1 // pred_check_branch
      %221 = sbr.rel (0) target = $region137
    $region136: #{tpu_custom_call.1} parent=1 // pred_region
      %223 = dma.done [#allocation18], 2048
    $region137: #{tpu_custom_call.1} parent=1 // pred_fallthru
      _
    // Predicated region
    $region138: #{tpu_custom_call.1} parent=1 // pred_check
      _
    $region139: #{tpu_custom_call.1} parent=1 // pred_check_branch
      %225 = sbr.rel (0) target = $region141
    $region140: #{tpu_custom_call.1} parent=1 // pred_region
      %227 = dma.done [#allocation21], 32768
    $region141: #{tpu_custom_call.1} parent=1 // pred_fallthru
      _
    %v228 = vld [vmem:[%s0] sm:$0xff]
    %v229 = vld [vmem:[%s0 + $0x8] sm:$0xff]
    %v230 = vld [vmem:[%s0 + $0x10] sm:$0xff]
    %v231 = vld [vmem:[%s0 + $0x18] sm:$0xff]
    %v232 = vld [vmem:[%s0 + $0x20] sm:$0xff]
    %v233 = vld [vmem:[%s0 + $0x28] sm:$0xff]
    %v234 = vld [vmem:[%s0 + $0x30] sm:$0xff]
    %v235 = vld [vmem:[%s0 + $0x38] sm:$0xff]
    %vm236 = vcmask 56320
    %237 = vst.msk [vmem:[#allocation2] sm:$0xff] %vm236, 0.0
    %238 = vst.msk [vmem:[#allocation2 + $0x8] sm:$0xff] %vm236, 0.0
    %239 = vst.msk [vmem:[#allocation2 + $0x10] sm:$0xff] %vm236, 0.0
    %240 = vst.msk [vmem:[#allocation2 + $0x18] sm:$0xff] %vm236, 0.0
    %241 = vst.msk [vmem:[#allocation2 + $0x20] sm:$0xff] %vm236, 0.0
    %242 = vst.msk [vmem:[#allocation2 + $0x28] sm:$0xff] %vm236, 0.0
    %243 = vst.msk [vmem:[#allocation2 + $0x30] sm:$0xff] %vm236, 0.0
    %244 = vst.msk [vmem:[#allocation2 + $0x38] sm:$0xff] %vm236, 0.0
    %vm245 = vcmask 7168
    %246 = vst.msk [vmem:[#allocation2 + $0x3] sm:$0xff] %vm245, %v228
    %247 = vst.msk [vmem:[#allocation2 + $0xb] sm:$0xff] %vm245, %v229
    %248 = vst.msk [vmem:[#allocation2 + $0x13] sm:$0xff] %vm245, %v230
    %vm249 = vcmask 4096
    %250 = vst.msk [vmem:[#allocation2 + $0x1b] sm:$0x1f] %vm249, %v231
    %251 = vst.msk [vmem:[#allocation2 + $0x23] sm:$0xff] %vm245, %v232
    %252 = vst.msk [vmem:[#allocation2 + $0x2b] sm:$0xff] %vm245, %v233
    %253 = vst.msk [vmem:[#allocation2 + $0x33] sm:$0xff] %vm245, %v234
    %254 = vst.msk [vmem:[#allocation2 + $0x3b] sm:$0x1f] %vm249, %v235
    %263 = vrot.lane.b32.xlu0 %v228, 1
    %v264 = vpop.permute.xlu0 %263
    %265 = vrot.lane.b32.xlu0 %v229, 1
    %v266 = vpop.permute.xlu0 %265
    %267 = vrot.lane.b32.xlu0 %v230, 1
    %v268 = vpop.permute.xlu0 %267
    %269 = vrot.lane.b32.xlu0 %v231, 1
    %v270 = vpop.permute.xlu0 %269
    %271 = vrot.lane.b32.xlu0 %v232, 1
    %v272 = vpop.permute.xlu0 %271
    %273 = vrot.lane.b32.xlu0 %v233, 1
    %v274 = vpop.permute.xlu0 %273
    %275 = vrot.lane.b32.xlu0 %v234, 1
    %v276 = vpop.permute.xlu0 %275
    %277 = vrot.lane.b32.xlu0 %v235, 1
    %v278 = vpop.permute.xlu0 %277
    %vm287 = vcmask 15368
    %288 = vst.msk [vmem:[#allocation2 + $0x2] sm:$0xff] %vm287, %v264
    %289 = vst.msk [vmem:[#allocation2 + $0xa] sm:$0xff] %vm287, %v266
    %290 = vst.msk [vmem:[#allocation2 + $0x12] sm:$0xff] %vm287, %v268
    %vm291 = vcmask 13320
    %292 = vst.msk [vmem:[#allocation2 + $0x1a] sm:$0x3f] %vm291, %v270
    %293 = vst.msk [vmem:[#allocation2 + $0x22] sm:$0xff] %vm287, %v272
    %294 = vst.msk [vmem:[#allocation2 + $0x2a] sm:$0xff] %vm287, %v274
    %295 = vst.msk [vmem:[#allocation2 + $0x32] sm:$0xff] %vm287, %v276
    %296 = vst.msk [vmem:[#allocation2 + $0x3a] sm:$0x3f] %vm291, %v278
    %297 = vrot.lane.b32.xlu0 %v228, 2
    %v298 = vpop.permute.xlu0 %297
    %299 = vrot.lane.b32.xlu0 %v229, 2
    %v300 = vpop.permute.xlu0 %299
    %301 = vrot.lane.b32.xlu0 %v230, 2
    %v302 = vpop.permute.xlu0 %301
    %303 = vrot.lane.b32.xlu0 %v231, 2
    %v304 = vpop.permute.xlu0 %303
    %305 = vrot.lane.b32.xlu0 %v232, 2
    %v306 = vpop.permute.xlu0 %305
    %307 = vrot.lane.b32.xlu0 %v233, 2
    %v308 = vpop.permute.xlu0 %307
    %309 = vrot.lane.b32.xlu0 %v234, 2
    %v310 = vpop.permute.xlu0 %309
    %311 = vrot.lane.b32.xlu0 %v235, 2
    %v312 = vpop.permute.xlu0 %311
    %vm321 = vcmask 23568
    %322 = vst.msk [vmem:[#allocation2 + $0x1] sm:$0xff] %vm321, %v298
    %323 = vst.msk [vmem:[#allocation2 + $0x9] sm:$0xff] %vm321, %v300
    %324 = vst.msk [vmem:[#allocation2 + $0x11] sm:$0xff] %vm321, %v302
    %vm325 = vcmask 22544
    %326 = vst.msk [vmem:[#allocation2 + $0x19] sm:$0x7f] %vm325, %v304
    %327 = vst.msk [vmem:[#allocation2 + $0x21] sm:$0xff] %vm321, %v306
    %328 = vst.msk [vmem:[#allocation2 + $0x29] sm:$0xff] %vm321, %v308
    %329 = vst.msk [vmem:[#allocation2 + $0x31] sm:$0xff] %vm321, %v310
    %330 = vst.msk [vmem:[#allocation2 + $0x39] sm:$0x7f] %vm325, %v312
    %331 = vrot.lane.b32.xlu0 %v228, 3
    %v332 = vpop.permute.xlu0 %331
    %333 = vrot.lane.b32.xlu0 %v229, 3
    %v334 = vpop.permute.xlu0 %333
    %335 = vrot.lane.b32.xlu0 %v230, 3
    %v336 = vpop.permute.xlu0 %335
    %337 = vrot.lane.b32.xlu0 %v231, 3
    %v338 = vpop.permute.xlu0 %337
    %339 = vrot.lane.b32.xlu0 %v232, 3
    %v340 = vpop.permute.xlu0 %339
    %341 = vrot.lane.b32.xlu0 %v233, 3
    %v342 = vpop.permute.xlu0 %341
    %343 = vrot.lane.b32.xlu0 %v234, 3
    %v344 = vpop.permute.xlu0 %343
    %345 = vrot.lane.b32.xlu0 %v235, 3
    %v346 = vpop.permute.xlu0 %345
    %vm355 = vcmask 31768
    %356 = vst.msk [vmem:[#allocation2] sm:$0xff] %vm355, %v332
    %357 = vst.msk [vmem:[#allocation2 + $0x8] sm:$0xff] %vm355, %v334
    %358 = vst.msk [vmem:[#allocation2 + $0x10] sm:$0xff] %vm355, %v336
    %359 = vst.msk [vmem:[#allocation2 + $0x18] sm:$0xff] %vm355, %v338
    %360 = vst.msk [vmem:[#allocation2 + $0x20] sm:$0xff] %vm355, %v340
    %361 = vst.msk [vmem:[#allocation2 + $0x28] sm:$0xff] %vm355, %v342
    %362 = vst.msk [vmem:[#allocation2 + $0x30] sm:$0xff] %vm355, %v344
    %363 = vst.msk [vmem:[#allocation2 + $0x38] sm:$0xff] %vm355, %v346
    %364 = vrot.lane.b32.xlu0 %v228, 4
    %v365 = vpop.permute.xlu0 %364
    %366 = vrot.lane.b32.xlu0 %v229, 4
    %v367 = vpop.permute.xlu0 %366
    %368 = vrot.lane.b32.xlu0 %v230, 4
    %v369 = vpop.permute.xlu0 %368
    %370 = vrot.lane.b32.xlu0 %v231, 4
    %v371 = vpop.permute.xlu0 %370
    %372 = vrot.lane.b32.xlu0 %v232, 4
    %v373 = vpop.permute.xlu0 %372
    %374 = vrot.lane.b32.xlu0 %v233, 4
    %v375 = vpop.permute.xlu0 %374
    %376 = vrot.lane.b32.xlu0 %v234, 4
    %v377 = vpop.permute.xlu0 %376
    %378 = vrot.lane.b32.xlu0 %v235, 4
    %v379 = vpop.permute.xlu0 %378
    %vm388 = vcmask 39969
    %389 = vst.msk [vmem:[#allocation2 - $0x1] sm:$0xfe] %vm388, %v365
    %vm390 = vcmask 39968
    %391 = vst.msk [vmem:[#allocation2 + $0x7] sm:$0xff] %vm390, %v367
    %392 = vst.msk [vmem:[#allocation2 + $0xf] sm:$0xff] %vm390, %v369
    %393 = vst.msk [vmem:[#allocation2 + $0x17] sm:$0xff] %vm390, %v371
    %394 = vst.msk [vmem:[#allocation2 + $0x1f] sm:$0xfe] %vm388, %v373
    %395 = vst.msk [vmem:[#allocation2 + $0x27] sm:$0xff] %vm390, %v375
    %396 = vst.msk [vmem:[#allocation2 + $0x2f] sm:$0xff] %vm390, %v377
    %397 = vst.msk [vmem:[#allocation2 + $0x37] sm:$0xff] %vm390, %v379
    %398 = vrot.lane.b32.xlu0 %v228, 5
    %v399 = vpop.permute.xlu0 %398
    %400 = vrot.lane.b32.xlu0 %v229, 5
    %v401 = vpop.permute.xlu0 %400
    %402 = vrot.lane.b32.xlu0 %v230, 5
    %v403 = vpop.permute.xlu0 %402
    %404 = vrot.lane.b32.xlu0 %v231, 5
    %v405 = vpop.permute.xlu0 %404
    %406 = vrot.lane.b32.xlu0 %v232, 5
    %v407 = vpop.permute.xlu0 %406
    %408 = vrot.lane.b32.xlu0 %v233, 5
    %v409 = vpop.permute.xlu0 %408
    %410 = vrot.lane.b32.xlu0 %v234, 5
    %v411 = vpop.permute.xlu0 %410
    %412 = vrot.lane.b32.xlu0 %v235, 5
    %v413 = vpop.permute.xlu0 %412
    %vm422 = vcmask 48170
    %423 = vst.msk [vmem:[#allocation2 - $0x2] sm:$0xfc] %vm422, %v399
    %vm424 = vcmask 48168
    %425 = vst.msk [vmem:[#allocation2 + $0x6] sm:$0xff] %vm424, %v401
    %426 = vst.msk [vmem:[#allocation2 + $0xe] sm:$0xff] %vm424, %v403
    %427 = vst.msk [vmem:[#allocation2 + $0x16] sm:$0xff] %vm424, %v405
    %428 = vst.msk [vmem:[#allocation2 + $0x1e] sm:$0xfc] %vm422, %v407
    %429 = vst.msk [vmem:[#allocation2 + $0x26] sm:$0xff] %vm424, %v409
    %430 = vst.msk [vmem:[#allocation2 + $0x2e] sm:$0xff] %vm424, %v411
    %431 = vst.msk [vmem:[#allocation2 + $0x36] sm:$0xff] %vm424, %v413
    %432 = vrot.lane.b32.xlu0 %v228, 6
    %v433 = vpop.permute.xlu0 %432
    %434 = vrot.lane.b32.xlu0 %v229, 6
    %v435 = vpop.permute.xlu0 %434
    %436 = vrot.lane.b32.xlu0 %v230, 6
    %v437 = vpop.permute.xlu0 %436
    %438 = vrot.lane.b32.xlu0 %v231, 6
    %v439 = vpop.permute.xlu0 %438
    %440 = vrot.lane.b32.xlu0 %v232, 6
    %v441 = vpop.permute.xlu0 %440
    %442 = vrot.lane.b32.xlu0 %v233, 6
    %v443 = vpop.permute.xlu0 %442
    %444 = vrot.lane.b32.xlu0 %v234, 6
    %v445 = vpop.permute.xlu0 %444
    %446 = vrot.lane.b32.xlu0 %v235, 6
    %v447 = vpop.permute.xlu0 %446
    %vm456 = vcmask 56371
    %457 = vst.msk [vmem:[#allocation2 - $0x3] sm:$0xf8] %vm456, %v433
    %vm458 = vcmask 56368
    %459 = vst.msk [vmem:[#allocation2 + $0x5] sm:$0xff] %vm458, %v435
    %460 = vst.msk [vmem:[#allocation2 + $0xd] sm:$0xff] %vm458, %v437
    %461 = vst.msk [vmem:[#allocation2 + $0x15] sm:$0xff] %vm458, %v439
    %462 = vst.msk [vmem:[#allocation2 + $0x1d] sm:$0xf8] %vm456, %v441
    %463 = vst.msk [vmem:[#allocation2 + $0x25] sm:$0xff] %vm458, %v443
    %464 = vst.msk [vmem:[#allocation2 + $0x2d] sm:$0xff] %vm458, %v445
    %465 = vst.msk [vmem:[#allocation2 + $0x35] sm:$0xff] %vm458, %v447
    %v466 = vld [vmem:[#allocation2] sm:$0xff]
    %v467 = vld [vmem:[#allocation2 + $0x8] sm:$0xff]
    %v468 = vld [vmem:[#allocation2 + $0x10] sm:$0xff]
    %v469 = vld [vmem:[#allocation2 + $0x18] sm:$0xff]
    %v470 = vld [vmem:[#allocation2 + $0x20] sm:$0xff]
    %v471 = vld [vmem:[#allocation2 + $0x28] sm:$0xff]
    %v472 = vld [vmem:[#allocation2 + $0x30] sm:$0xff]
    %v473 = vld [vmem:[#allocation2 + $0x38] sm:$0xff]
    %v474 = vld [vmem:[%s1] sm:$0x7f]
    %v475 = vld [vmem:[%s2] sm:$0x1]
    %v477 = vperm.slane %v475, 0
    %v480 = vsel %vm236, %v466, 0
    %v483 = vsel %vm236, %v467, 0
    %v486 = vsel %vm236, %v468, 0
    %v489 = vsel %vm236, %v469, 0
    %v492 = vsel %vm236, %v470, 0
    %v495 = vsel %vm236, %v471, 0
    %v498 = vsel %vm236, %v472, 0
    %v501 = vsel %vm236, %v473, 0
    %vm503 = vcmask 1046528
    %v505 = vsel %vm503, %v474, 0
    %507 = vmatpush.msra.mxu0 0.0
    %508 = vmatpush.msra.mxu0 0.0
    %509 = vmatpush.msra.mxu0 0.0
    %510 = vmatpush.msra.mxu0 0.0
    %511 = vmatpush.msra.mxu0 0.0
    %512 = vmatpush.msra.mxu0 0.0
    %513 = vmatpush.msra.mxu0 0.0
    %514 = vmatpush.msra.mxu0 0.0
    %515 = vmatpush.msra.mxu0 0.0
    %516 = vmatpush.msra.mxu0 0.0
    %517 = vmatpush.msra.mxu0 0.0
    %518 = vmatpush.msra.mxu0 0.0
    %519 = vmatpush.msra.mxu0 0.0
    %520 = vmatpush.msra.mxu0 0.0
    %521 = vmatpush.msra.mxu0 0.0
    %522 = vmatpush.msra.mxu0 %v505
    %523 = vmatmul.f32.gmra.mxu0 %v480
    %v524 = vpop.f32.mrf.mxu0
    %v525 = vadd.f32 %v477, %v524
    %526 = vmatmul.f32.gmra.mxu0 %v483
    %v527 = vpop.f32.mrf.mxu0
    %v528 = vadd.f32 %v477, %v527
    %529 = vmatmul.f32.gmra.mxu0 %v486
    %v530 = vpop.f32.mrf.mxu0
    %v531 = vadd.f32 %v477, %v530
    %532 = vmatmul.f32.gmra.mxu0 %v489
    %v533 = vpop.f32.mrf.mxu0
    %v534 = vadd.f32 %v477, %v533
    %535 = vmatmul.f32.gmra.mxu0 %v492
    %v536 = vpop.f32.mrf.mxu0
    %v537 = vadd.f32 %v477, %v536
    %538 = vmatmul.f32.gmra.mxu0 %v495
    %v539 = vpop.f32.mrf.mxu0
    %v540 = vadd.f32 %v477, %v539
    %541 = vmatmul.f32.gmra.mxu0 %v498
    %v542 = vpop.f32.mrf.mxu0
    %v543 = vadd.f32 %v477, %v542
    %544 = vmatmul.f32.gmra.mxu0 %v501
    %v545 = vpop.f32.mrf.mxu0
    %v546 = vadd.f32 %v477, %v545
    %547 = vdwg.mxu0
    %vm548 = vcmp.gt.f32.partialorder %v525, 0.0
    %vm549 = vcmp.gt.f32.partialorder %v528, 0.0
    %vm550 = vcmp.gt.f32.partialorder %v531, 0.0
    %vm551 = vcmp.gt.f32.partialorder %v534, 0.0
    %vm552 = vcmp.gt.f32.partialorder %v537, 0.0
    %vm553 = vcmp.gt.f32.partialorder %v540, 0.0
    %vm554 = vcmp.gt.f32.partialorder %v543, 0.0
    %vm555 = vcmp.gt.f32.partialorder %v546, 0.0
    %v556 = vmul.f32 %v525, 0.1
    %v557 = vmul.f32 %v528, 0.1
    %v558 = vmul.f32 %v531, 0.1
    %v559 = vmul.f32 %v534, 0.1
    %v560 = vmul.f32 %v537, 0.1
    %v561 = vmul.f32 %v540, 0.1
    %v562 = vmul.f32 %v543, 0.1
    %v563 = vmul.f32 %v546, 0.1
    %v564 = vsel %vm548, %v525, %v556
    %v565 = vsel %vm549, %v528, %v557
    %v566 = vsel %vm550, %v531, %v558
    %v567 = vsel %vm551, %v534, %v559
    %v568 = vsel %vm552, %v537, %v560
    %v569 = vsel %vm553, %v540, %v561
    %v570 = vsel %vm554, %v543, %v562
    %v571 = vsel %vm555, %v546, %v563
    %v572 = vld [vmem:[#allocation6] sm:$0x1]
    %573 = vset.pattern.permute.xlu0 0
    %574 = vperm.xlu0 %573, %v228
    %v575 = vpop.permute.xlu0 %574
    %577 = vset.pattern.permute.xlu0 0
    %578 = vperm.xlu0 %577, %v229
    %v579 = vpop.permute.xlu0 %578
    %581 = vset.pattern.permute.xlu0 0
    %582 = vperm.xlu0 %581, %v230
    %v583 = vpop.permute.xlu0 %582
    %585 = vset.pattern.permute.xlu0 0
    %586 = vperm.xlu0 %585, %v231
    %v587 = vpop.permute.xlu0 %586
    %589 = vset.pattern.permute.xlu0 0
    %590 = vperm.xlu0 %589, %v232
    %v591 = vpop.permute.xlu0 %590
    %593 = vset.pattern.permute.xlu0 0
    %594 = vperm.xlu0 %593, %v233
    %v595 = vpop.permute.xlu0 %594
    %597 = vset.pattern.permute.xlu0 0
    %598 = vperm.xlu0 %597, %v234
    %v599 = vpop.permute.xlu0 %598
    %601 = vset.pattern.permute.xlu0 0
    %602 = vperm.xlu0 %601, %v235
    %v603 = vpop.permute.xlu0 %602
    %v606 = vperm.slane %v572, 0
    %v608 = vmul.f32 %v575, %v606
    %v609 = vmul.f32 %v579, %v606
    %v610 = vmul.f32 %v583, %v606
    %v611 = vmul.f32 %v587, %v606
    %v612 = vmul.f32 %v591, %v606
    %v613 = vmul.f32 %v595, %v606
    %v614 = vmul.f32 %v599, %v606
    %v615 = vmul.f32 %v603, %v606
    %v616 = vld [vmem:[#allocation8] sm:$0x1]
    %v618 = vperm.slane %v616, 0
    %v620 = vadd.f32 %v608, %v618
    %v621 = vadd.f32 %v609, %v618
    %v622 = vadd.f32 %v610, %v618
    %v623 = vadd.f32 %v611, %v618
    %v624 = vadd.f32 %v612, %v618
    %v625 = vadd.f32 %v613, %v618
    %v626 = vadd.f32 %v614, %v618
    %v627 = vadd.f32 %v615, %v618
    %v636 = vrot.slane %v564, 2
    %v637 = vrot.slane %v564, 4
    %v638 = vrot.slane %v564, 6
    %v639 = vrot.slane %v565, 2
    %v640 = vrot.slane %v565, 4
    %v641 = vrot.slane %v565, 6
    %v642 = vrot.slane %v566, 2
    %v643 = vrot.slane %v566, 4
    %v644 = vrot.slane %v566, 6
    %v645 = vrot.slane %v567, 2
    %v646 = vrot.slane %v567, 4
    %v647 = vrot.slane %v567, 6
    %v648 = vrot.slane %v568, 2
    %v649 = vrot.slane %v568, 4
    %v650 = vrot.slane %v568, 6
    %v651 = vrot.slane %v569, 2
    %v652 = vrot.slane %v569, 4
    %v653 = vrot.slane %v569, 6
    %v654 = vrot.slane %v570, 2
    %v655 = vrot.slane %v570, 4
    %v656 = vrot.slane %v570, 6
    %v657 = vrot.slane %v571, 2
    %v658 = vrot.slane %v571, 4
    %v659 = vrot.slane %v571, 6
    %vm684 = vcmask 254976
    %v685 = vsel %vm684, %v564, -inf
    %v686 = vrot.slane %v685, 4
    %v687 = vmax.f32 %v685, %v686
    %v688 = vrot.slane %v687, 2
    %v689 = vmax.f32 %v687, %v688
    %v690 = vrot.slane %v689, 1
    %v691 = vmax.f32 %v689, %v690
    %v692 = vsel %vm684, %v636, -inf
    %v693 = vrot.slane %v692, 4
    %v694 = vmax.f32 %v692, %v693
    %v695 = vrot.slane %v694, 2
    %v696 = vmax.f32 %v694, %v695
    %v697 = vrot.slane %v696, 1
    %v698 = vmax.f32 %v696, %v697
    %v699 = vsel %vm684, %v637, -inf
    %v700 = vrot.slane %v699, 4
    %v701 = vmax.f32 %v699, %v700
    %v702 = vrot.slane %v701, 2
    %v703 = vmax.f32 %v701, %v702
    %v704 = vrot.slane %v703, 1
    %v705 = vmax.f32 %v703, %v704
    %v706 = vsel %vm684, %v638, -inf
    %v707 = vrot.slane %v706, 4
    %v708 = vmax.f32 %v706, %v707
    %v709 = vrot.slane %v708, 2
    %v710 = vmax.f32 %v708, %v709
    %v711 = vrot.slane %v710, 1
    %v712 = vmax.f32 %v710, %v711
    %v713 = vsel %vm684, %v565, -inf
    %v714 = vrot.slane %v713, 4
    %v715 = vmax.f32 %v713, %v714
    %v716 = vrot.slane %v715, 2
    %v717 = vmax.f32 %v715, %v716
    %v718 = vrot.slane %v717, 1
    %v719 = vmax.f32 %v717, %v718
    %v720 = vsel %vm684, %v639, -inf
    %v721 = vrot.slane %v720, 4
    %v722 = vmax.f32 %v720, %v721
    %v723 = vrot.slane %v722, 2
    %v724 = vmax.f32 %v722, %v723
    %v725 = vrot.slane %v724, 1
    %v726 = vmax.f32 %v724, %v725
    %v727 = vsel %vm684, %v640, -inf
    %v728 = vrot.slane %v727, 4
    %v729 = vmax.f32 %v727, %v728
    %v730 = vrot.slane %v729, 2
    %v731 = vmax.f32 %v729, %v730
    %v732 = vrot.slane %v731, 1
    %v733 = vmax.f32 %v731, %v732
    %v734 = vsel %vm684, %v641, -inf
    %v735 = vrot.slane %v734, 4
    %v736 = vmax.f32 %v734, %v735
    %v737 = vrot.slane %v736, 2
    %v738 = vmax.f32 %v736, %v737
    %v739 = vrot.slane %v738, 1
    %v740 = vmax.f32 %v738, %v739
    %v741 = vsel %vm684, %v566, -inf
    %v742 = vrot.slane %v741, 4
    %v743 = vmax.f32 %v741, %v742
    %v744 = vrot.slane %v743, 2
    %v745 = vmax.f32 %v743, %v744
    %v746 = vrot.slane %v745, 1
    %v747 = vmax.f32 %v745, %v746
    %v748 = vsel %vm684, %v642, -inf
    %v749 = vrot.slane %v748, 4
    %v750 = vmax.f32 %v748, %v749
    %v751 = vrot.slane %v750, 2
    %v752 = vmax.f32 %v750, %v751
    %v753 = vrot.slane %v752, 1
    %v754 = vmax.f32 %v752, %v753
    %v755 = vsel %vm684, %v643, -inf
    %v756 = vrot.slane %v755, 4
    %v757 = vmax.f32 %v755, %v756
    %v758 = vrot.slane %v757, 2
    %v759 = vmax.f32 %v757, %v758
    %v760 = vrot.slane %v759, 1
    %v761 = vmax.f32 %v759, %v760
    %v762 = vsel %vm684, %v644, -inf
    %v763 = vrot.slane %v762, 4
    %v764 = vmax.f32 %v762, %v763
    %v765 = vrot.slane %v764, 2
    %v766 = vmax.f32 %v764, %v765
    %v767 = vrot.slane %v766, 1
    %v768 = vmax.f32 %v766, %v767
    %v769 = vsel %vm684, %v567, -inf
    %v770 = vrot.slane %v769, 4
    %v771 = vmax.f32 %v769, %v770
    %v772 = vrot.slane %v771, 2
    %v773 = vmax.f32 %v771, %v772
    %v774 = vrot.slane %v773, 1
    %v775 = vmax.f32 %v773, %v774
    %v776 = vsel %vm684, %v645, -inf
    %v777 = vrot.slane %v776, 4
    %v778 = vmax.f32 %v776, %v777
    %v779 = vrot.slane %v778, 2
    %v780 = vmax.f32 %v778, %v779
    %v781 = vrot.slane %v780, 1
    %v782 = vmax.f32 %v780, %v781
    %v783 = vsel %vm684, %v646, -inf
    %v784 = vrot.slane %v783, 4
    %v785 = vmax.f32 %v783, %v784
    %v786 = vrot.slane %v785, 2
    %v787 = vmax.f32 %v785, %v786
    %v788 = vrot.slane %v787, 1
    %v789 = vmax.f32 %v787, %v788
    %v790 = vsel %vm684, %v647, -inf
    %v791 = vrot.slane %v790, 4
    %v792 = vmax.f32 %v790, %v791
    %v793 = vrot.slane %v792, 2
    %v794 = vmax.f32 %v792, %v793
    %v795 = vrot.slane %v794, 1
    %v796 = vmax.f32 %v794, %v795
    %v797 = vsel %vm684, %v568, -inf
    %v798 = vrot.slane %v797, 4
    %v799 = vmax.f32 %v797, %v798
    %v800 = vrot.slane %v799, 2
    %v801 = vmax.f32 %v799, %v800
    %v802 = vrot.slane %v801, 1
    %v803 = vmax.f32 %v801, %v802
    %v804 = vsel %vm684, %v648, -inf
    %v805 = vrot.slane %v804, 4
    %v806 = vmax.f32 %v804, %v805
    %v807 = vrot.slane %v806, 2
    %v808 = vmax.f32 %v806, %v807
    %v809 = vrot.slane %v808, 1
    %v810 = vmax.f32 %v808, %v809
    %v811 = vsel %vm684, %v649, -inf
    %v812 = vrot.slane %v811, 4
    %v813 = vmax.f32 %v811, %v812
    %v814 = vrot.slane %v813, 2
    %v815 = vmax.f32 %v813, %v814
    %v816 = vrot.slane %v815, 1
    %v817 = vmax.f32 %v815, %v816
    %v818 = vsel %vm684, %v650, -inf
    %v819 = vrot.slane %v818, 4
    %v820 = vmax.f32 %v818, %v819
    %v821 = vrot.slane %v820, 2
    %v822 = vmax.f32 %v820, %v821
    %v823 = vrot.slane %v822, 1
    %v824 = vmax.f32 %v822, %v823
    %v825 = vsel %vm684, %v569, -inf
    %v826 = vrot.slane %v825, 4
    %v827 = vmax.f32 %v825, %v826
    %v828 = vrot.slane %v827, 2
    %v829 = vmax.f32 %v827, %v828
    %v830 = vrot.slane %v829, 1
    %v831 = vmax.f32 %v829, %v830
    %v832 = vsel %vm684, %v651, -inf
    %v833 = vrot.slane %v832, 4
    %v834 = vmax.f32 %v832, %v833
    %v835 = vrot.slane %v834, 2
    %v836 = vmax.f32 %v834, %v835
    %v837 = vrot.slane %v836, 1
    %v838 = vmax.f32 %v836, %v837
    %v839 = vsel %vm684, %v652, -inf
    %v840 = vrot.slane %v839, 4
    %v841 = vmax.f32 %v839, %v840
    %v842 = vrot.slane %v841, 2
    %v843 = vmax.f32 %v841, %v842
    %v844 = vrot.slane %v843, 1
    %v845 = vmax.f32 %v843, %v844
    %v846 = vsel %vm684, %v653, -inf
    %v847 = vrot.slane %v846, 4
    %v848 = vmax.f32 %v846, %v847
    %v849 = vrot.slane %v848, 2
    %v850 = vmax.f32 %v848, %v849
    %v851 = vrot.slane %v850, 1
    %v852 = vmax.f32 %v850, %v851
    %v853 = vsel %vm684, %v570, -inf
    %v854 = vrot.slane %v853, 4
    %v855 = vmax.f32 %v853, %v854
    %v856 = vrot.slane %v855, 2
    %v857 = vmax.f32 %v855, %v856
    %v858 = vrot.slane %v857, 1
    %v859 = vmax.f32 %v857, %v858
    %v860 = vsel %vm684, %v654, -inf
    %v861 = vrot.slane %v860, 4
    %v862 = vmax.f32 %v860, %v861
    %v863 = vrot.slane %v862, 2
    %v864 = vmax.f32 %v862, %v863
    %v865 = vrot.slane %v864, 1
    %v866 = vmax.f32 %v864, %v865
    %v867 = vsel %vm684, %v655, -inf
    %v868 = vrot.slane %v867, 4
    %v869 = vmax.f32 %v867, %v868
    %v870 = vrot.slane %v869, 2
    %v871 = vmax.f32 %v869, %v870
    %v872 = vrot.slane %v871, 1
    %v873 = vmax.f32 %v871, %v872
    %v874 = vsel %vm684, %v656, -inf
    %v875 = vrot.slane %v874, 4
    %v876 = vmax.f32 %v874, %v875
    %v877 = vrot.slane %v876, 2
    %v878 = vmax.f32 %v876, %v877
    %v879 = vrot.slane %v878, 1
    %v880 = vmax.f32 %v878, %v879
    %v881 = vsel %vm684, %v571, -inf
    %v882 = vrot.slane %v881, 4
    %v883 = vmax.f32 %v881, %v882
    %v884 = vrot.slane %v883, 2
    %v885 = vmax.f32 %v883, %v884
    %v886 = vrot.slane %v885, 1
    %v887 = vmax.f32 %v885, %v886
    %v888 = vsel %vm684, %v657, -inf
    %v889 = vrot.slane %v888, 4
    %v890 = vmax.f32 %v888, %v889
    %v891 = vrot.slane %v890, 2
    %v892 = vmax.f32 %v890, %v891
    %v893 = vrot.slane %v892, 1
    %v894 = vmax.f32 %v892, %v893
    %v895 = vsel %vm684, %v658, -inf
    %v896 = vrot.slane %v895, 4
    %v897 = vmax.f32 %v895, %v896
    %v898 = vrot.slane %v897, 2
    %v899 = vmax.f32 %v897, %v898
    %v900 = vrot.slane %v899, 1
    %v901 = vmax.f32 %v899, %v900
    %v902 = vsel %vm684, %v659, -inf
    %v903 = vrot.slane %v902, 4
    %v904 = vmax.f32 %v902, %v903
    %v905 = vrot.slane %v904, 2
    %v906 = vmax.f32 %v904, %v905
    %v907 = vrot.slane %v906, 1
    %v908 = vmax.f32 %v906, %v907
    %v917 = vrot.slane %v620, 2
    %v918 = vrot.slane %v620, 4
    %v919 = vrot.slane %v620, 6
    %v920 = vrot.slane %v621, 2
    %v921 = vrot.slane %v621, 4
    %v922 = vrot.slane %v621, 6
    %v923 = vrot.slane %v622, 2
    %v924 = vrot.slane %v622, 4
    %v925 = vrot.slane %v622, 6
    %v926 = vrot.slane %v623, 2
    %v927 = vrot.slane %v623, 4
    %v928 = vrot.slane %v623, 6
    %v929 = vrot.slane %v624, 2
    %v930 = vrot.slane %v624, 4
    %v931 = vrot.slane %v624, 6
    %v932 = vrot.slane %v625, 2
    %v933 = vrot.slane %v625, 4
    %v934 = vrot.slane %v625, 6
    %v935 = vrot.slane %v626, 2
    %v936 = vrot.slane %v626, 4
    %v937 = vrot.slane %v626, 6
    %v938 = vrot.slane %v627, 2
    %v939 = vrot.slane %v627, 4
    %v940 = vrot.slane %v627, 6
    %v965 = vsel %vm684, %v620, -inf
    %v966 = vrot.slane %v965, 4
    %v967 = vmax.f32 %v965, %v966
    %v968 = vrot.slane %v967, 2
    %v969 = vmax.f32 %v967, %v968
    %v970 = vrot.slane %v969, 1
    %v971 = vmax.f32 %v969, %v970
    %v972 = vsel %vm684, %v917, -inf
    %v973 = vrot.slane %v972, 4
    %v974 = vmax.f32 %v972, %v973
    %v975 = vrot.slane %v974, 2
    %v976 = vmax.f32 %v974, %v975
    %v977 = vrot.slane %v976, 1
    %v978 = vmax.f32 %v976, %v977
    %v979 = vsel %vm684, %v918, -inf
    %v980 = vrot.slane %v979, 4
    %v981 = vmax.f32 %v979, %v980
    %v982 = vrot.slane %v981, 2
    %v983 = vmax.f32 %v981, %v982
    %v984 = vrot.slane %v983, 1
    %v985 = vmax.f32 %v983, %v984
    %v986 = vsel %vm684, %v919, -inf
    %v987 = vrot.slane %v986, 4
    %v988 = vmax.f32 %v986, %v987
    %v989 = vrot.slane %v988, 2
    %v990 = vmax.f32 %v988, %v989
    %v991 = vrot.slane %v990, 1
    %v992 = vmax.f32 %v990, %v991
    %v993 = vsel %vm684, %v621, -inf
    %v994 = vrot.slane %v993, 4
    %v995 = vmax.f32 %v993, %v994
    %v996 = vrot.slane %v995, 2
    %v997 = vmax.f32 %v995, %v996
    %v998 = vrot.slane %v997, 1
    %v999 = vmax.f32 %v997, %v998
    %v1000 = vsel %vm684, %v920, -inf
    %v1001 = vrot.slane %v1000, 4
    %v1002 = vmax.f32 %v1000, %v1001
    %v1003 = vrot.slane %v1002, 2
    %v1004 = vmax.f32 %v1002, %v1003
    %v1005 = vrot.slane %v1004, 1
    %v1006 = vmax.f32 %v1004, %v1005
    %v1007 = vsel %vm684, %v921, -inf
    %v1008 = vrot.slane %v1007, 4
    %v1009 = vmax.f32 %v1007, %v1008
    %v1010 = vrot.slane %v1009, 2
    %v1011 = vmax.f32 %v1009, %v1010
    %v1012 = vrot.slane %v1011, 1
    %v1013 = vmax.f32 %v1011, %v1012
    %v1014 = vsel %vm684, %v922, -inf
    %v1015 = vrot.slane %v1014, 4
    %v1016 = vmax.f32 %v1014, %v1015
    %v1017 = vrot.slane %v1016, 2
    %v1018 = vmax.f32 %v1016, %v1017
    %v1019 = vrot.slane %v1018, 1
    %v1020 = vmax.f32 %v1018, %v1019
    %v1021 = vsel %vm684, %v622, -inf
    %v1022 = vrot.slane %v1021, 4
    %v1023 = vmax.f32 %v1021, %v1022
    %v1024 = vrot.slane %v1023, 2
    %v1025 = vmax.f32 %v1023, %v1024
    %v1026 = vrot.slane %v1025, 1
    %v1027 = vmax.f32 %v1025, %v1026
    %v1028 = vsel %vm684, %v923, -inf
    %v1029 = vrot.slane %v1028, 4
    %v1030 = vmax.f32 %v1028, %v1029
    %v1031 = vrot.slane %v1030, 2
    %v1032 = vmax.f32 %v1030, %v1031
    %v1033 = vrot.slane %v1032, 1
    %v1034 = vmax.f32 %v1032, %v1033
    %v1035 = vsel %vm684, %v924, -inf
    %v1036 = vrot.slane %v1035, 4
    %v1037 = vmax.f32 %v1035, %v1036
    %v1038 = vrot.slane %v1037, 2
    %v1039 = vmax.f32 %v1037, %v1038
    %v1040 = vrot.slane %v1039, 1
    %v1041 = vmax.f32 %v1039, %v1040
    %v1042 = vsel %vm684, %v925, -inf
    %v1043 = vrot.slane %v1042, 4
    %v1044 = vmax.f32 %v1042, %v1043
    %v1045 = vrot.slane %v1044, 2
    %v1046 = vmax.f32 %v1044, %v1045
    %v1047 = vrot.slane %v1046, 1
    %v1048 = vmax.f32 %v1046, %v1047
    %v1049 = vsel %vm684, %v623, -inf
    %v1050 = vrot.slane %v1049, 4
    %v1051 = vmax.f32 %v1049, %v1050
    %v1052 = vrot.slane %v1051, 2
    %v1053 = vmax.f32 %v1051, %v1052
    %v1054 = vrot.slane %v1053, 1
    %v1055 = vmax.f32 %v1053, %v1054
    %v1056 = vsel %vm684, %v926, -inf
    %v1057 = vrot.slane %v1056, 4
    %v1058 = vmax.f32 %v1056, %v1057
    %v1059 = vrot.slane %v1058, 2
    %v1060 = vmax.f32 %v1058, %v1059
    %v1061 = vrot.slane %v1060, 1
    %v1062 = vmax.f32 %v1060, %v1061
    %v1063 = vsel %vm684, %v927, -inf
    %v1064 = vrot.slane %v1063, 4
    %v1065 = vmax.f32 %v1063, %v1064
    %v1066 = vrot.slane %v1065, 2
    %v1067 = vmax.f32 %v1065, %v1066
    %v1068 = vrot.slane %v1067, 1
    %v1069 = vmax.f32 %v1067, %v1068
    %v1070 = vsel %vm684, %v928, -inf
    %v1071 = vrot.slane %v1070, 4
    %v1072 = vmax.f32 %v1070, %v1071
    %v1073 = vrot.slane %v1072, 2
    %v1074 = vmax.f32 %v1072, %v1073
    %v1075 = vrot.slane %v1074, 1
    %v1076 = vmax.f32 %v1074, %v1075
    %v1077 = vsel %vm684, %v624, -inf
    %v1078 = vrot.slane %v1077, 4
    %v1079 = vmax.f32 %v1077, %v1078
    %v1080 = vrot.slane %v1079, 2
    %v1081 = vmax.f32 %v1079, %v1080
    %v1082 = vrot.slane %v1081, 1
    %v1083 = vmax.f32 %v1081, %v1082
    %v1084 = vsel %vm684, %v929, -inf
    %v1085 = vrot.slane %v1084, 4
    %v1086 = vmax.f32 %v1084, %v1085
    %v1087 = vrot.slane %v1086, 2
    %v1088 = vmax.f32 %v1086, %v1087
    %v1089 = vrot.slane %v1088, 1
    %v1090 = vmax.f32 %v1088, %v1089
    %v1091 = vsel %vm684, %v930, -inf
    %v1092 = vrot.slane %v1091, 4
    %v1093 = vmax.f32 %v1091, %v1092
    %v1094 = vrot.slane %v1093, 2
    %v1095 = vmax.f32 %v1093, %v1094
    %v1096 = vrot.slane %v1095, 1
    %v1097 = vmax.f32 %v1095, %v1096
    %v1098 = vsel %vm684, %v931, -inf
    %v1099 = vrot.slane %v1098, 4
    %v1100 = vmax.f32 %v1098, %v1099
    %v1101 = vrot.slane %v1100, 2
    %v1102 = vmax.f32 %v1100, %v1101
    %v1103 = vrot.slane %v1102, 1
    %v1104 = vmax.f32 %v1102, %v1103
    %v1105 = vsel %vm684, %v625, -inf
    %v1106 = vrot.slane %v1105, 4
    %v1107 = vmax.f32 %v1105, %v1106
    %v1108 = vrot.slane %v1107, 2
    %v1109 = vmax.f32 %v1107, %v1108
    %v1110 = vrot.slane %v1109, 1
    %v1111 = vmax.f32 %v1109, %v1110
    %v1112 = vsel %vm684, %v932, -inf
    %v1113 = vrot.slane %v1112, 4
    %v1114 = vmax.f32 %v1112, %v1113
    %v1115 = vrot.slane %v1114, 2
    %v1116 = vmax.f32 %v1114, %v1115
    %v1117 = vrot.slane %v1116, 1
    %v1118 = vmax.f32 %v1116, %v1117
    %v1119 = vsel %vm684, %v933, -inf
    %v1120 = vrot.slane %v1119, 4
    %v1121 = vmax.f32 %v1119, %v1120
    %v1122 = vrot.slane %v1121, 2
    %v1123 = vmax.f32 %v1121, %v1122
    %v1124 = vrot.slane %v1123, 1
    %v1125 = vmax.f32 %v1123, %v1124
    %v1126 = vsel %vm684, %v934, -inf
    %v1127 = vrot.slane %v1126, 4
    %v1128 = vmax.f32 %v1126, %v1127
    %v1129 = vrot.slane %v1128, 2
    %v1130 = vmax.f32 %v1128, %v1129
    %v1131 = vrot.slane %v1130, 1
    %v1132 = vmax.f32 %v1130, %v1131
    %v1133 = vsel %vm684, %v626, -inf
    %v1134 = vrot.slane %v1133, 4
    %v1135 = vmax.f32 %v1133, %v1134
    %v1136 = vrot.slane %v1135, 2
    %v1137 = vmax.f32 %v1135, %v1136
    %v1138 = vrot.slane %v1137, 1
    %v1139 = vmax.f32 %v1137, %v1138
    %v1140 = vsel %vm684, %v935, -inf
    %v1141 = vrot.slane %v1140, 4
    %v1142 = vmax.f32 %v1140, %v1141
    %v1143 = vrot.slane %v1142, 2
    %v1144 = vmax.f32 %v1142, %v1143
    %v1145 = vrot.slane %v1144, 1
    %v1146 = vmax.f32 %v1144, %v1145
    %v1147 = vsel %vm684, %v936, -inf
    %v1148 = vrot.slane %v1147, 4
    %v1149 = vmax.f32 %v1147, %v1148
    %v1150 = vrot.slane %v1149, 2
    %v1151 = vmax.f32 %v1149, %v1150
    %v1152 = vrot.slane %v1151, 1
    %v1153 = vmax.f32 %v1151, %v1152
    %v1154 = vsel %vm684, %v937, -inf
    %v1155 = vrot.slane %v1154, 4
    %v1156 = vmax.f32 %v1154, %v1155
    %v1157 = vrot.slane %v1156, 2
    %v1158 = vmax.f32 %v1156, %v1157
    %v1159 = vrot.slane %v1158, 1
    %v1160 = vmax.f32 %v1158, %v1159
    %v1161 = vsel %vm684, %v627, -inf
    %v1162 = vrot.slane %v1161, 4
    %v1163 = vmax.f32 %v1161, %v1162
    %v1164 = vrot.slane %v1163, 2
    %v1165 = vmax.f32 %v1163, %v1164
    %v1166 = vrot.slane %v1165, 1
    %v1167 = vmax.f32 %v1165, %v1166
    %v1168 = vsel %vm684, %v938, -inf
    %v1169 = vrot.slane %v1168, 4
    %v1170 = vmax.f32 %v1168, %v1169
    %v1171 = vrot.slane %v1170, 2
    %v1172 = vmax.f32 %v1170, %v1171
    %v1173 = vrot.slane %v1172, 1
    %v1174 = vmax.f32 %v1172, %v1173
    %v1175 = vsel %vm684, %v939, -inf
    %v1176 = vrot.slane %v1175, 4
    %v1177 = vmax.f32 %v1175, %v1176
    %v1178 = vrot.slane %v1177, 2
    %v1179 = vmax.f32 %v1177, %v1178
    %v1180 = vrot.slane %v1179, 1
    %v1181 = vmax.f32 %v1179, %v1180
    %v1182 = vsel %vm684, %v940, -inf
    %v1183 = vrot.slane %v1182, 4
    %v1184 = vmax.f32 %v1182, %v1183
    %v1185 = vrot.slane %v1184, 2
    %v1186 = vmax.f32 %v1184, %v1185
    %v1187 = vrot.slane %v1186, 1
    %v1188 = vmax.f32 %v1186, %v1187
    %v1189 = vadd.f32 %v691, %v971
    %v1190 = vadd.f32 %v698, %v978
    %v1191 = vadd.f32 %v705, %v985
    %v1192 = vadd.f32 %v712, %v992
    %v1193 = vadd.f32 %v719, %v999
    %v1194 = vadd.f32 %v726, %v1006
    %v1195 = vadd.f32 %v733, %v1013
    %v1196 = vadd.f32 %v740, %v1020
    %v1197 = vadd.f32 %v747, %v1027
    %v1198 = vadd.f32 %v754, %v1034
    %v1199 = vadd.f32 %v761, %v1041
    %v1200 = vadd.f32 %v768, %v1048
    %v1201 = vadd.f32 %v775, %v1055
    %v1202 = vadd.f32 %v782, %v1062
    %v1203 = vadd.f32 %v789, %v1069
    %v1204 = vadd.f32 %v796, %v1076
    %v1205 = vadd.f32 %v803, %v1083
    %v1206 = vadd.f32 %v810, %v1090
    %v1207 = vadd.f32 %v817, %v1097
    %v1208 = vadd.f32 %v824, %v1104
    %v1209 = vadd.f32 %v831, %v1111
    %v1210 = vadd.f32 %v838, %v1118
    %v1211 = vadd.f32 %v845, %v1125
    %v1212 = vadd.f32 %v852, %v1132
    %v1213 = vadd.f32 %v859, %v1139
    %v1214 = vadd.f32 %v866, %v1146
    %v1215 = vadd.f32 %v873, %v1153
    %v1216 = vadd.f32 %v880, %v1160
    %v1217 = vadd.f32 %v887, %v1167
    %v1218 = vadd.f32 %v894, %v1174
    %v1219 = vadd.f32 %v901, %v1181
    %v1220 = vadd.f32 %v908, %v1188
    %1221 = vst [vmem:[#allocation3] sm:$0xff] 0.0
    %vm1222 = vcmask 785408
    %1223 = vst.msk [vmem:[#allocation3 + $0x8] sm:$0xff] %vm1222, 0.0
    %1224 = vst [vmem:[#allocation3 + $0x10] sm:$0xff] 0.0
    %1225 = vst.msk [vmem:[#allocation3 + $0x18] sm:$0xff] %vm1222, 0.0
    %1226 = vst [vmem:[#allocation3 + $0x20] sm:$0xff] 0.0
    %1227 = vst.msk [vmem:[#allocation3 + $0x28] sm:$0xff] %vm1222, 0.0
    %1228 = vst [vmem:[#allocation3 + $0x30] sm:$0xff] 0.0
    %1229 = vst.msk [vmem:[#allocation3 + $0x38] sm:$0xff] %vm1222, 0.0
    %vm1256 = vcmask 1044484
    %v1257 = vsel %vm1256, %v1190, %v1189
    %vm1258 = vcmask 1045509
    %v1259 = vsel %vm1258, %v1191, %v1257
    %vm1260 = vcmask 1046534
    %v1261 = vsel %vm1260, %v1192, %v1259
    %vm1262 = vcmask 1047559
    %v1263 = vsel %vm1262, %v1193, %v1261
    %vm1264 = vcmask 1041409
    %v1265 = vsel %vm1264, %v1195, %v1194
    %vm1266 = vcmask 1042434
    %v1267 = vsel %vm1266, %v1196, %v1265
    %vm1268 = vcmask 1043459
    %v1269 = vsel %vm1268, %v1197, %v1267
    %v1270 = vsel %vm1256, %v1198, %v1269
    %v1271 = vsel %vm1258, %v1199, %v1270
    %v1272 = vsel %vm1260, %v1200, %v1271
    %v1273 = vsel %vm1262, %v1201, %v1272
    %v1274 = vsel %vm1256, %v1206, %v1205
    %v1275 = vsel %vm1258, %v1207, %v1274
    %v1276 = vsel %vm1260, %v1208, %v1275
    %v1277 = vsel %vm1262, %v1209, %v1276
    %v1278 = vsel %vm1264, %v1211, %v1210
    %v1279 = vsel %vm1266, %v1212, %v1278
    %v1280 = vsel %vm1268, %v1213, %v1279
    %v1281 = vsel %vm1256, %v1214, %v1280
    %v1282 = vsel %vm1258, %v1215, %v1281
    %v1283 = vsel %vm1260, %v1216, %v1282
    %v1284 = vsel %vm1262, %v1217, %v1283
    %vm1289 = vcmask 261123
    %1290 = vst.msk [vmem:[#allocation3] sm:$0xf8] %vm1289, %v1263
    %vm1291 = vcmask 261120
    %1292 = vst.msk [vmem:[#allocation3 + $0x10] sm:$0xff] %vm1291, %v1273
    %1293 = vst.msk [vmem:[#allocation3 + $0x20] sm:$0xf8] %vm1289, %v1277
    %1294 = vst.msk [vmem:[#allocation3 + $0x30] sm:$0xff] %vm1291, %v1284
    %v1297 = vsel %vm1268, %v1190, %v1189
    %v1298 = vsel %vm1256, %v1191, %v1297
    %v1299 = vsel %vm1258, %v1192, %v1298
    %v1300 = vsel %vm1260, %v1193, %v1299
    %v1301 = vsel %vm1262, %v1194, %v1300
    %v1302 = vsel %vm1264, %v1196, %v1195
    %v1303 = vsel %vm1266, %v1197, %v1302
    %v1304 = vsel %vm1268, %v1198, %v1303
    %v1305 = vsel %vm1256, %v1199, %v1304
    %v1306 = vsel %vm1258, %v1200, %v1305
    %v1307 = vsel %vm1260, %v1201, %v1306
    %v1308 = vsel %vm1262, %v1202, %v1307
    %v1309 = vsel %vm1268, %v1206, %v1205
    %v1310 = vsel %vm1256, %v1207, %v1309
    %v1311 = vsel %vm1258, %v1208, %v1310
    %v1312 = vsel %vm1260, %v1209, %v1311
    %v1313 = vsel %vm1262, %v1210, %v1312
    %v1314 = vsel %vm1264, %v1212, %v1211
    %v1315 = vsel %vm1266, %v1213, %v1314
    %v1316 = vsel %vm1268, %v1214, %v1315
    %v1317 = vsel %vm1256, %v1215, %v1316
    %v1318 = vsel %vm1258, %v1216, %v1317
    %v1319 = vsel %vm1260, %v1217, %v1318
    %v1320 = vsel %vm1262, %v1218, %v1319
    %1321 = vrot.lane.b32.xlu0 %v1301, 32
    %v1322 = vpop.permute.xlu0 %1321
    %1323 = vrot.lane.b32.xlu0 %v1308, 32
    %v1324 = vpop.permute.xlu0 %1323
    %1325 = vrot.lane.b32.xlu0 %v1313, 32
    %v1326 = vpop.permute.xlu0 %1325
    %1327 = vrot.lane.b32.xlu0 %v1320, 32
    %v1328 = vpop.permute.xlu0 %1327
    %vm1333 = vcmask 523522
    %1334 = vst.msk [vmem:[#allocation3] sm:$0xfc] %vm1333, %v1322
    %vm1335 = vcmask 523520
    %1336 = vst.msk [vmem:[#allocation3 + $0x10] sm:$0xff] %vm1335, %v1324
    %1337 = vst.msk [vmem:[#allocation3 + $0x20] sm:$0xfc] %vm1333, %v1326
    %1338 = vst.msk [vmem:[#allocation3 + $0x30] sm:$0xff] %vm1335, %v1328
    %v1341 = vsel %vm1266, %v1190, %v1189
    %v1342 = vsel %vm1268, %v1191, %v1341
    %v1343 = vsel %vm1256, %v1192, %v1342
    %v1344 = vsel %vm1258, %v1193, %v1343
    %v1345 = vsel %vm1260, %v1194, %v1344
    %v1346 = vsel %vm1262, %v1195, %v1345
    %v1347 = vsel %vm1264, %v1197, %v1196
    %v1348 = vsel %vm1266, %v1198, %v1347
    %v1349 = vsel %vm1268, %v1199, %v1348
    %v1350 = vsel %vm1256, %v1200, %v1349
    %v1351 = vsel %vm1258, %v1201, %v1350
    %v1352 = vsel %vm1260, %v1202, %v1351
    %v1353 = vsel %vm1262, %v1203, %v1352
    %v1354 = vsel %vm1266, %v1206, %v1205
    %v1355 = vsel %vm1268, %v1207, %v1354
    %v1356 = vsel %vm1256, %v1208, %v1355
    %v1357 = vsel %vm1258, %v1209, %v1356
    %v1358 = vsel %vm1260, %v1210, %v1357
    %v1359 = vsel %vm1262, %v1211, %v1358
    %v1360 = vsel %vm1264, %v1213, %v1212
    %v1361 = vsel %vm1266, %v1214, %v1360
    %v1362 = vsel %vm1268, %v1215, %v1361
    %v1363 = vsel %vm1256, %v1216, %v1362
    %v1364 = vsel %vm1258, %v1217, %v1363
    %v1365 = vsel %vm1260, %v1218, %v1364
    %v1366 = vsel %vm1262, %v1219, %v1365
    %1367 = vrot.lane.b32.xlu0 %v1346, 64
    %v1368 = vpop.permute.xlu0 %1367
    %1369 = vrot.lane.b32.xlu0 %v1353, 64
    %v1370 = vpop.permute.xlu0 %1369
    %1371 = vrot.lane.b32.xlu0 %v1359, 64
    %v1372 = vpop.permute.xlu0 %1371
    %1373 = vrot.lane.b32.xlu0 %v1366, 64
    %v1374 = vpop.permute.xlu0 %1373
    %vm1379 = vcmask 785921
    %1380 = vst.msk [vmem:[#allocation3] sm:$0xfe] %vm1379, %v1368
    %vm1381 = vcmask 785920
    %1382 = vst.msk [vmem:[#allocation3 + $0x10] sm:$0xff] %vm1381, %v1370
    %1383 = vst.msk [vmem:[#allocation3 + $0x20] sm:$0xfe] %vm1379, %v1372
    %1384 = vst.msk [vmem:[#allocation3 + $0x30] sm:$0xff] %vm1381, %v1374
    %v1387 = vsel %vm1264, %v1190, %v1189
    %v1388 = vsel %vm1266, %v1191, %v1387
    %v1389 = vsel %vm1268, %v1192, %v1388
    %v1390 = vsel %vm1256, %v1193, %v1389
    %v1391 = vsel %vm1258, %v1194, %v1390
    %v1392 = vsel %vm1260, %v1195, %v1391
    %v1393 = vsel %vm1262, %v1196, %v1392
    %v1394 = vsel %vm1264, %v1198, %v1197
    %v1395 = vsel %vm1266, %v1199, %v1394
    %v1396 = vsel %vm1268, %v1200, %v1395
    %v1397 = vsel %vm1256, %v1201, %v1396
    %v1398 = vsel %vm1258, %v1202, %v1397
    %v1399 = vsel %vm1260, %v1203, %v1398
    %v1400 = vsel %vm1262, %v1204, %v1399
    %v1401 = vsel %vm1264, %v1206, %v1205
    %v1402 = vsel %vm1266, %v1207, %v1401
    %v1403 = vsel %vm1268, %v1208, %v1402
    %v1404 = vsel %vm1256, %v1209, %v1403
    %v1405 = vsel %vm1258, %v1210, %v1404
    %v1406 = vsel %vm1260, %v1211, %v1405
    %v1407 = vsel %vm1262, %v1212, %v1406
    %v1408 = vsel %vm1264, %v1214, %v1213
    %v1409 = vsel %vm1266, %v1215, %v1408
    %v1410 = vsel %vm1268, %v1216, %v1409
    %v1411 = vsel %vm1256, %v1217, %v1410
    %v1412 = vsel %vm1258, %v1218, %v1411
    %v1413 = vsel %vm1260, %v1219, %v1412
    %v1414 = vsel %vm1262, %v1220, %v1413
    %1415 = vrot.lane.b32.xlu0 %v1393, 96
    %v1416 = vpop.permute.xlu0 %1415
    %1417 = vrot.lane.b32.xlu0 %v1400, 96
    %v1418 = vpop.permute.xlu0 %1417
    %1419 = vrot.lane.b32.xlu0 %v1407, 96
    %v1420 = vpop.permute.xlu0 %1419
    %1421 = vrot.lane.b32.xlu0 %v1414, 96
    %v1422 = vpop.permute.xlu0 %1421
    %vm1427 = vcmask 1048320
    %1428 = vst.msk [vmem:[#allocation3] sm:$0xff] %vm1427, %v1416
    %1429 = vst.msk [vmem:[#allocation3 + $0x10] sm:$0xff] %vm1427, %v1418
    %1430 = vst.msk [vmem:[#allocation3 + $0x20] sm:$0xff] %vm1427, %v1420
    %1431 = vst.msk [vmem:[#allocation3 + $0x30] sm:$0xff] %vm1427, %v1422
    %v1432 = vsel %vm1264, %v1191, %v1190
    %v1433 = vsel %vm1266, %v1192, %v1432
    %v1434 = vsel %vm1268, %v1193, %v1433
    %v1435 = vsel %vm1256, %v1194, %v1434
    %v1436 = vsel %vm1258, %v1195, %v1435
    %v1437 = vsel %vm1260, %v1196, %v1436
    %v1438 = vsel %vm1262, %v1197, %v1437
    %v1439 = vsel %vm1264, %v1199, %v1198
    %v1440 = vsel %vm1266, %v1200, %v1439
    %v1441 = vsel %vm1268, %v1201, %v1440
    %v1442 = vsel %vm1256, %v1202, %v1441
    %v1443 = vsel %vm1258, %v1203, %v1442
    %v1444 = vsel %vm1260, %v1204, %v1443
    %v1445 = vsel %vm1264, %v1207, %v1206
    %v1446 = vsel %vm1266, %v1208, %v1445
    %v1447 = vsel %vm1268, %v1209, %v1446
    %v1448 = vsel %vm1256, %v1210, %v1447
    %v1449 = vsel %vm1258, %v1211, %v1448
    %v1450 = vsel %vm1260, %v1212, %v1449
    %v1451 = vsel %vm1262, %v1213, %v1450
    %v1452 = vsel %vm1264, %v1215, %v1214
    %v1453 = vsel %vm1266, %v1216, %v1452
    %v1454 = vsel %vm1268, %v1217, %v1453
    %v1455 = vsel %vm1256, %v1218, %v1454
    %v1456 = vsel %vm1258, %v1219, %v1455
    %v1457 = vsel %vm1260, %v1220, %v1456
    %1462 = vst.msk [vmem:[#allocation3 + $0x8] sm:$0xff] %vm1291, %v1438
    %vm1463 = vcmask 260096
    %1464 = vst.msk [vmem:[#allocation3 + $0x18] sm:$0x7f] %vm1463, %v1444
    %1465 = vst.msk [vmem:[#allocation3 + $0x28] sm:$0xff] %vm1291, %v1451
    %1466 = vst.msk [vmem:[#allocation3 + $0x38] sm:$0x7f] %vm1463, %v1457
    %v1467 = vsel %vm1264, %v1192, %v1191
    %v1468 = vsel %vm1266, %v1193, %v1467
    %v1469 = vsel %vm1268, %v1194, %v1468
    %v1470 = vsel %vm1256, %v1195, %v1469
    %v1471 = vsel %vm1258, %v1196, %v1470
    %v1472 = vsel %vm1260, %v1197, %v1471
    %v1473 = vsel %vm1262, %v1198, %v1472
    %v1474 = vsel %vm1264, %v1200, %v1199
    %v1475 = vsel %vm1266, %v1201, %v1474
    %v1476 = vsel %vm1268, %v1202, %v1475
    %v1477 = vsel %vm1256, %v1203, %v1476
    %v1478 = vsel %vm1258, %v1204, %v1477
    %v1479 = vsel %vm1264, %v1208, %v1207
    %v1480 = vsel %vm1266, %v1209, %v1479
    %v1481 = vsel %vm1268, %v1210, %v1480
    %v1482 = vsel %vm1256, %v1211, %v1481
    %v1483 = vsel %vm1258, %v1212, %v1482
    %v1484 = vsel %vm1260, %v1213, %v1483
    %v1485 = vsel %vm1262, %v1214, %v1484
    %v1486 = vsel %vm1264, %v1216, %v1215
    %v1487 = vsel %vm1266, %v1217, %v1486
    %v1488 = vsel %vm1268, %v1218, %v1487
    %v1489 = vsel %vm1256, %v1219, %v1488
    %v1490 = vsel %vm1258, %v1220, %v1489
    %1491 = vrot.lane.b32.xlu0 %v1473, 32
    %v1492 = vpop.permute.xlu0 %1491
    %1493 = vrot.lane.b32.xlu0 %v1478, 32
    %v1494 = vpop.permute.xlu0 %1493
    %1495 = vrot.lane.b32.xlu0 %v1485, 32
    %v1496 = vpop.permute.xlu0 %1495
    %1497 = vrot.lane.b32.xlu0 %v1490, 32
    %v1498 = vpop.permute.xlu0 %1497
    %1503 = vst.msk [vmem:[#allocation3 + $0x8] sm:$0xff] %vm1335, %v1492
    %vm1504 = vcmask 521472
    %1505 = vst.msk [vmem:[#allocation3 + $0x18] sm:$0x3f] %vm1504, %v1494
    %1506 = vst.msk [vmem:[#allocation3 + $0x28] sm:$0xff] %vm1335, %v1496
    %1507 = vst.msk [vmem:[#allocation3 + $0x38] sm:$0x3f] %vm1504, %v1498
    %v1508 = vsel %vm1264, %v1193, %v1192
    %v1509 = vsel %vm1266, %v1194, %v1508
    %v1510 = vsel %vm1268, %v1195, %v1509
    %v1511 = vsel %vm1256, %v1196, %v1510
    %v1512 = vsel %vm1258, %v1197, %v1511
    %v1513 = vsel %vm1260, %v1198, %v1512
    %v1514 = vsel %vm1262, %v1199, %v1513
    %v1515 = vsel %vm1264, %v1201, %v1200
    %v1516 = vsel %vm1266, %v1202, %v1515
    %v1517 = vsel %vm1268, %v1203, %v1516
    %v1518 = vsel %vm1256, %v1204, %v1517
    %v1519 = vsel %vm1264, %v1209, %v1208
    %v1520 = vsel %vm1266, %v1210, %v1519
    %v1521 = vsel %vm1268, %v1211, %v1520
    %v1522 = vsel %vm1256, %v1212, %v1521
    %v1523 = vsel %vm1258, %v1213, %v1522
    %v1524 = vsel %vm1260, %v1214, %v1523
    %v1525 = vsel %vm1262, %v1215, %v1524
    %v1526 = vsel %vm1264, %v1217, %v1216
    %v1527 = vsel %vm1266, %v1218, %v1526
    %v1528 = vsel %vm1268, %v1219, %v1527
    %v1529 = vsel %vm1256, %v1220, %v1528
    %1530 = vrot.lane.b32.xlu0 %v1514, 64
    %v1531 = vpop.permute.xlu0 %1530
    %1532 = vrot.lane.b32.xlu0 %v1518, 64
    %v1533 = vpop.permute.xlu0 %1532
    %1534 = vrot.lane.b32.xlu0 %v1525, 64
    %v1535 = vpop.permute.xlu0 %1534
    %1536 = vrot.lane.b32.xlu0 %v1529, 64
    %v1537 = vpop.permute.xlu0 %1536
    %1542 = vst.msk [vmem:[#allocation3 + $0x8] sm:$0xff] %vm1381, %v1531
    %vm1543 = vcmask 782848
    %1544 = vst.msk [vmem:[#allocation3 + $0x18] sm:$0x1f] %vm1543, %v1533
    %1545 = vst.msk [vmem:[#allocation3 + $0x28] sm:$0xff] %vm1381, %v1535
    %1546 = vst.msk [vmem:[#allocation3 + $0x38] sm:$0x1f] %vm1543, %v1537
    %v1547 = vld [vmem:[#allocation3] sm:$0xff]
    %v1548 = vld [vmem:[#allocation3 + $0x8] sm:$0xff]
    %v1549 = vld [vmem:[#allocation3 + $0x10] sm:$0xff]
    %v1550 = vld [vmem:[#allocation3 + $0x18] sm:$0xff]
    %v1551 = vld [vmem:[#allocation3 + $0x20] sm:$0xff]
    %v1552 = vld [vmem:[#allocation3 + $0x28] sm:$0xff]
    %v1553 = vld [vmem:[#allocation3 + $0x30] sm:$0xff]
    %v1554 = vld [vmem:[#allocation3 + $0x38] sm:$0xff]
    %v1555 = vld [vmem:[%s5] sm:$0xff]
    %v1556 = vld [vmem:[%s5 + $0x8] sm:$0xff]
    %v1557 = vld [vmem:[%s5 + $0x10] sm:$0xff]
    %v1558 = vld [vmem:[%s5 + $0x18] sm:$0xff]
    %v1559 = vld [vmem:[%s5 + $0x20] sm:$0xff]
    %v1560 = vld [vmem:[%s5 + $0x28] sm:$0xff]
    %v1561 = vld [vmem:[%s5 + $0x30] sm:$0xff]
    %v1562 = vld [vmem:[%s5 + $0x38] sm:$0xff]
    %v1563 = vld [vmem:[%s5 + $0x40] sm:$0xff]
    %v1564 = vld [vmem:[%s5 + $0x48] sm:$0xff]
    %v1565 = vld [vmem:[%s5 + $0x50] sm:$0xff]
    %v1566 = vld [vmem:[%s5 + $0x58] sm:$0xff]
    %v1567 = vld [vmem:[%s5 + $0x60] sm:$0xff]
    %v1568 = vld [vmem:[%s5 + $0x68] sm:$0xff]
    %v1569 = vld [vmem:[%s5 + $0x70] sm:$0xff]
    %v1570 = vld [vmem:[%s5 + $0x78] sm:$0xff]
    %v1571 = vld [vmem:[%s5 + $0x80] sm:$0xff]
    %v1572 = vld [vmem:[%s5 + $0x88] sm:$0xff]
    %v1573 = vld [vmem:[%s5 + $0x90] sm:$0xff]
    %v1574 = vld [vmem:[%s5 + $0x98] sm:$0xff]
    %v1575 = vld [vmem:[%s5 + $0xa0] sm:$0xff]
    %v1576 = vld [vmem:[%s5 + $0xa8] sm:$0xff]
    %v1577 = vld [vmem:[%s5 + $0xb0] sm:$0xff]
    %v1578 = vld [vmem:[%s5 + $0xb8] sm:$0xff]
    %v1579 = vld [vmem:[%s5 + $0xc0] sm:$0xff]
    %v1580 = vld [vmem:[%s5 + $0xc8] sm:$0xff]
    %v1581 = vld [vmem:[%s5 + $0xd0] sm:$0xff]
    %v1582 = vld [vmem:[%s5 + $0xd8] sm:$0xff]
    %v1583 = vld [vmem:[#allocation10] sm:$0x1]
    %v1585 = vperm.slane %v1583, 0
    %v1588 = vsel %vm1222, %v1548, 0
    %v1591 = vsel %vm1222, %v1550, 0
    %v1594 = vsel %vm1222, %v1552, 0
    %v1597 = vsel %vm1222, %v1554, 0
    %1599 = vmatpush.msra.mxu0 %v1570
    %1600 = vmatpush.msra.mxu0 %v1569
    %1601 = vmatpush.msra.mxu0 %v1568
    %1602 = vmatpush.msra.mxu0 %v1567
    %1603 = vmatpush.msra.mxu0 %v1566
    %1604 = vmatpush.msra.mxu0 %v1565
    %1605 = vmatpush.msra.mxu0 %v1564
    %1606 = vmatpush.msra.mxu0 %v1563
    %1607 = vmatpush.msra.mxu0 %v1562
    %1608 = vmatpush.msra.mxu0 %v1561
    %1609 = vmatpush.msra.mxu0 %v1560
    %1610 = vmatpush.msra.mxu0 %v1559
    %1611 = vmatpush.msra.mxu0 %v1558
    %1612 = vmatpush.msra.mxu0 %v1557
    %1613 = vmatpush.msra.mxu0 %v1556
    %1614 = vmatpush.msra.mxu0 %v1555
    %1615 = vmatmul.f32.gmra.mxu0 %v1547
    %v1616 = vpop.f32.mrf.mxu0
    %v1617 = vadd.f32 %v1585, %v1616
    %1618 = vmatmul.f32.gmra.mxu0 %v1549
    %v1619 = vpop.f32.mrf.mxu0
    %v1620 = vadd.f32 %v1585, %v1619
    %1621 = vmatmul.f32.gmra.mxu0 %v1551
    %v1622 = vpop.f32.mrf.mxu0
    %v1623 = vadd.f32 %v1585, %v1622
    %1624 = vmatmul.f32.gmra.mxu0 %v1553
    %v1625 = vpop.f32.mrf.mxu0
    %v1626 = vadd.f32 %v1585, %v1625
    %1627 = vdwg.mxu0
    %1628 = vmatpush.msra.mxu0 0.0
    %1629 = vmatpush.msra.mxu0 0.0
    %1630 = vmatpush.msra.mxu0 0.0
    %1631 = vmatpush.msra.mxu0 0.0
    %1632 = vmatpush.msra.mxu0 %v1582
    %1633 = vmatpush.msra.mxu0 %v1581
    %1634 = vmatpush.msra.mxu0 %v1580
    %1635 = vmatpush.msra.mxu0 %v1579
    %1636 = vmatpush.msra.mxu0 %v1578
    %1637 = vmatpush.msra.mxu0 %v1577
    %1638 = vmatpush.msra.mxu0 %v1576
    %1639 = vmatpush.msra.mxu0 %v1575
    %1640 = vmatpush.msra.mxu0 %v1574
    %1641 = vmatpush.msra.mxu0 %v1573
    %1642 = vmatpush.msra.mxu0 %v1572
    %1643 = vmatpush.msra.mxu0 %v1571
    %1644 = vmatmul.f32.gmra.mxu0 %v1588
    %v1645 = vpop.f32.mrf.mxu0
    %v1646 = vadd.f32 %v1617, %v1645
    %1647 = vmatmul.f32.gmra.mxu0 %v1591
    %v1648 = vpop.f32.mrf.mxu0
    %v1649 = vadd.f32 %v1620, %v1648
    %1650 = vmatmul.f32.gmra.mxu0 %v1594
    %v1651 = vpop.f32.mrf.mxu0
    %v1652 = vadd.f32 %v1623, %v1651
    %1653 = vmatmul.f32.gmra.mxu0 %v1597
    %v1654 = vpop.f32.mrf.mxu0
    %v1655 = vadd.f32 %v1626, %v1654
    %1656 = vdwg.mxu0
    %vm1657 = vcmp.gt.f32.partialorder %v1646, 0.0
    %vm1658 = vcmp.gt.f32.partialorder %v1649, 0.0
    %vm1659 = vcmp.gt.f32.partialorder %v1652, 0.0
    %vm1660 = vcmp.gt.f32.partialorder %v1655, 0.0
    %v1661 = vmul.f32 %v1646, 0.1
    %v1662 = vmul.f32 %v1649, 0.1
    %v1663 = vmul.f32 %v1652, 0.1
    %v1664 = vmul.f32 %v1655, 0.1
    %v1665 = vsel %vm1657, %v1646, %v1661
    %v1666 = vsel %vm1658, %v1649, %v1662
    %v1667 = vsel %vm1659, %v1652, %v1663
    %v1668 = vsel %vm1660, %v1655, %v1664
    %v1669 = vld [vmem:[%s7] sm:$0xff]
    %v1670 = vld [vmem:[%s7 + $0x8] sm:$0xff]
    %v1671 = vld [vmem:[%s7 + $0x10] sm:$0xff]
    %v1672 = vld [vmem:[%s7 + $0x18] sm:$0xff]
    %v1673 = vld [vmem:[#allocation11] sm:$0x1]
    %v1675 = vperm.slane %v1673, 0
    %v1677 = vsel %vm1291, %v1393, 0
    %v1679 = vsel %vm1291, %v1400, 0
    %v1681 = vsel %vm1291, %v1407, 0
    %v1683 = vsel %vm1291, %v1414, 0
    %1685 = vmatpush.msra.mxu0 0.0
    %1686 = vmatpush.msra.mxu0 0.0
    %1687 = vmatpush.msra.mxu0 0.0
    %1688 = vmatpush.msra.mxu0 0.0
    %1689 = vmatpush.msra.mxu0 0.0
    %1690 = vmatpush.msra.mxu0 0.0
    %1691 = vmatpush.msra.mxu0 0.0
    %1692 = vmatpush.msra.mxu0 0.0
    %1693 = vmatpush.msra.mxu0 0.0
    %1694 = vmatpush.msra.mxu0 0.0
    %1695 = vmatpush.msra.mxu0 0.0
    %1696 = vmatpush.msra.mxu0 0.0
    %1697 = vmatpush.msra.mxu0 %v1672
    %1698 = vmatpush.msra.mxu0 %v1671
    %1699 = vmatpush.msra.mxu0 %v1670
    %1700 = vmatpush.msra.mxu0 %v1669
    %1701 = vmatmul.f32.gmra.mxu0 %v1677
    %v1702 = vpop.f32.mrf.mxu0
    %v1703 = vadd.f32 %v1675, %v1702
    %1704 = vmatmul.f32.gmra.mxu0 %v1679
    %v1705 = vpop.f32.mrf.mxu0
    %v1706 = vadd.f32 %v1675, %v1705
    %1707 = vmatmul.f32.gmra.mxu0 %v1681
    %v1708 = vpop.f32.mrf.mxu0
    %v1709 = vadd.f32 %v1675, %v1708
    %1710 = vmatmul.f32.gmra.mxu0 %v1683
    %v1711 = vpop.f32.mrf.mxu0
    %v1712 = vadd.f32 %v1675, %v1711
    %1713 = vdwg.mxu0
    %v1718 = vrot.slane %v1665, 2
    %v1719 = vrot.slane %v1665, 4
    %v1720 = vrot.slane %v1665, 6
    %v1721 = vrot.slane %v1666, 2
    %v1722 = vrot.slane %v1666, 4
    %v1723 = vrot.slane %v1666, 6
    %v1724 = vrot.slane %v1667, 2
    %v1725 = vrot.slane %v1667, 4
    %v1726 = vrot.slane %v1667, 6
    %v1727 = vrot.slane %v1668, 2
    %v1728 = vrot.slane %v1668, 4
    %v1729 = vrot.slane %v1668, 6
    %vm1742 = vcmask 517120
    %v1743 = vsel %vm1742, %v1665, -inf
    %v1744 = vrot.slane %v1743, 4
    %v1745 = vmax.f32 %v1743, %v1744
    %v1746 = vrot.slane %v1745, 2
    %v1747 = vmax.f32 %v1745, %v1746
    %v1748 = vrot.slane %v1747, 1
    %v1749 = vmax.f32 %v1747, %v1748
    %v1750 = vsel %vm1742, %v1718, -inf
    %v1751 = vrot.slane %v1750, 4
    %v1752 = vmax.f32 %v1750, %v1751
    %v1753 = vrot.slane %v1752, 2
    %v1754 = vmax.f32 %v1752, %v1753
    %v1755 = vrot.slane %v1754, 1
    %v1756 = vmax.f32 %v1754, %v1755
    %v1757 = vsel %vm1742, %v1719, -inf
    %v1758 = vrot.slane %v1757, 4
    %v1759 = vmax.f32 %v1757, %v1758
    %v1760 = vrot.slane %v1759, 2
    %v1761 = vmax.f32 %v1759, %v1760
    %v1762 = vrot.slane %v1761, 1
    %v1763 = vmax.f32 %v1761, %v1762
    %v1764 = vsel %vm1742, %v1720, -inf
    %v1765 = vrot.slane %v1764, 4
    %v1766 = vmax.f32 %v1764, %v1765
    %v1767 = vrot.slane %v1766, 2
    %v1768 = vmax.f32 %v1766, %v1767
    %v1769 = vrot.slane %v1768, 1
    %v1770 = vmax.f32 %v1768, %v1769
    %v1771 = vsel %vm1742, %v1666, -inf
    %v1772 = vrot.slane %v1771, 4
    %v1773 = vmax.f32 %v1771, %v1772
    %v1774 = vrot.slane %v1773, 2
    %v1775 = vmax.f32 %v1773, %v1774
    %v1776 = vrot.slane %v1775, 1
    %v1777 = vmax.f32 %v1775, %v1776
    %v1778 = vsel %vm1742, %v1721, -inf
    %v1779 = vrot.slane %v1778, 4
    %v1780 = vmax.f32 %v1778, %v1779
    %v1781 = vrot.slane %v1780, 2
    %v1782 = vmax.f32 %v1780, %v1781
    %v1783 = vrot.slane %v1782, 1
    %v1784 = vmax.f32 %v1782, %v1783
    %v1785 = vsel %vm1742, %v1722, -inf
    %v1786 = vrot.slane %v1785, 4
    %v1787 = vmax.f32 %v1785, %v1786
    %v1788 = vrot.slane %v1787, 2
    %v1789 = vmax.f32 %v1787, %v1788
    %v1790 = vrot.slane %v1789, 1
    %v1791 = vmax.f32 %v1789, %v1790
    %v1792 = vsel %vm1742, %v1723, -inf
    %v1793 = vrot.slane %v1792, 4
    %v1794 = vmax.f32 %v1792, %v1793
    %v1795 = vrot.slane %v1794, 2
    %v1796 = vmax.f32 %v1794, %v1795
    %v1797 = vrot.slane %v1796, 1
    %v1798 = vmax.f32 %v1796, %v1797
    %v1799 = vsel %vm1742, %v1667, -inf
    %v1800 = vrot.slane %v1799, 4
    %v1801 = vmax.f32 %v1799, %v1800
    %v1802 = vrot.slane %v1801, 2
    %v1803 = vmax.f32 %v1801, %v1802
    %v1804 = vrot.slane %v1803, 1
    %v1805 = vmax.f32 %v1803, %v1804
    %v1806 = vsel %vm1742, %v1724, -inf
    %v1807 = vrot.slane %v1806, 4
    %v1808 = vmax.f32 %v1806, %v1807
    %v1809 = vrot.slane %v1808, 2
    %v1810 = vmax.f32 %v1808, %v1809
    %v1811 = vrot.slane %v1810, 1
    %v1812 = vmax.f32 %v1810, %v1811
    %v1813 = vsel %vm1742, %v1725, -inf
    %v1814 = vrot.slane %v1813, 4
    %v1815 = vmax.f32 %v1813, %v1814
    %v1816 = vrot.slane %v1815, 2
    %v1817 = vmax.f32 %v1815, %v1816
    %v1818 = vrot.slane %v1817, 1
    %v1819 = vmax.f32 %v1817, %v1818
    %v1820 = vsel %vm1742, %v1726, -inf
    %v1821 = vrot.slane %v1820, 4
    %v1822 = vmax.f32 %v1820, %v1821
    %v1823 = vrot.slane %v1822, 2
    %v1824 = vmax.f32 %v1822, %v1823
    %v1825 = vrot.slane %v1824, 1
    %v1826 = vmax.f32 %v1824, %v1825
    %v1827 = vsel %vm1742, %v1668, -inf
    %v1828 = vrot.slane %v1827, 4
    %v1829 = vmax.f32 %v1827, %v1828
    %v1830 = vrot.slane %v1829, 2
    %v1831 = vmax.f32 %v1829, %v1830
    %v1832 = vrot.slane %v1831, 1
    %v1833 = vmax.f32 %v1831, %v1832
    %v1834 = vsel %vm1742, %v1727, -inf
    %v1835 = vrot.slane %v1834, 4
    %v1836 = vmax.f32 %v1834, %v1835
    %v1837 = vrot.slane %v1836, 2
    %v1838 = vmax.f32 %v1836, %v1837
    %v1839 = vrot.slane %v1838, 1
    %v1840 = vmax.f32 %v1838, %v1839
    %v1841 = vsel %vm1742, %v1728, -inf
    %v1842 = vrot.slane %v1841, 4
    %v1843 = vmax.f32 %v1841, %v1842
    %v1844 = vrot.slane %v1843, 2
    %v1845 = vmax.f32 %v1843, %v1844
    %v1846 = vrot.slane %v1845, 1
    %v1847 = vmax.f32 %v1845, %v1846
    %v1848 = vsel %vm1742, %v1729, -inf
    %v1849 = vrot.slane %v1848, 4
    %v1850 = vmax.f32 %v1848, %v1849
    %v1851 = vrot.slane %v1850, 2
    %v1852 = vmax.f32 %v1850, %v1851
    %v1853 = vrot.slane %v1852, 1
    %v1854 = vmax.f32 %v1852, %v1853
    %v1859 = vrot.slane %v1703, 2
    %v1860 = vrot.slane %v1703, 4
    %v1861 = vrot.slane %v1703, 6
    %v1862 = vrot.slane %v1706, 2
    %v1863 = vrot.slane %v1706, 4
    %v1864 = vrot.slane %v1706, 6
    %v1865 = vrot.slane %v1709, 2
    %v1866 = vrot.slane %v1709, 4
    %v1867 = vrot.slane %v1709, 6
    %v1868 = vrot.slane %v1712, 2
    %v1869 = vrot.slane %v1712, 4
    %v1870 = vrot.slane %v1712, 6
    %v1883 = vsel %vm1742, %v1703, -inf
    %v1884 = vrot.slane %v1883, 4
    %v1885 = vmax.f32 %v1883, %v1884
    %v1886 = vrot.slane %v1885, 2
    %v1887 = vmax.f32 %v1885, %v1886
    %v1888 = vrot.slane %v1887, 1
    %v1889 = vmax.f32 %v1887, %v1888
    %v1890 = vsel %vm1742, %v1859, -inf
    %v1891 = vrot.slane %v1890, 4
    %v1892 = vmax.f32 %v1890, %v1891
    %v1893 = vrot.slane %v1892, 2
    %v1894 = vmax.f32 %v1892, %v1893
    %v1895 = vrot.slane %v1894, 1
    %v1896 = vmax.f32 %v1894, %v1895
    %v1897 = vsel %vm1742, %v1860, -inf
    %v1898 = vrot.slane %v1897, 4
    %v1899 = vmax.f32 %v1897, %v1898
    %v1900 = vrot.slane %v1899, 2
    %v1901 = vmax.f32 %v1899, %v1900
    %v1902 = vrot.slane %v1901, 1
    %v1903 = vmax.f32 %v1901, %v1902
    %v1904 = vsel %vm1742, %v1861, -inf
    %v1905 = vrot.slane %v1904, 4
    %v1906 = vmax.f32 %v1904, %v1905
    %v1907 = vrot.slane %v1906, 2
    %v1908 = vmax.f32 %v1906, %v1907
    %v1909 = vrot.slane %v1908, 1
    %v1910 = vmax.f32 %v1908, %v1909
    %v1911 = vsel %vm1742, %v1706, -inf
    %v1912 = vrot.slane %v1911, 4
    %v1913 = vmax.f32 %v1911, %v1912
    %v1914 = vrot.slane %v1913, 2
    %v1915 = vmax.f32 %v1913, %v1914
    %v1916 = vrot.slane %v1915, 1
    %v1917 = vmax.f32 %v1915, %v1916
    %v1918 = vsel %vm1742, %v1862, -inf
    %v1919 = vrot.slane %v1918, 4
    %v1920 = vmax.f32 %v1918, %v1919
    %v1921 = vrot.slane %v1920, 2
    %v1922 = vmax.f32 %v1920, %v1921
    %v1923 = vrot.slane %v1922, 1
    %v1924 = vmax.f32 %v1922, %v1923
    %v1925 = vsel %vm1742, %v1863, -inf
    %v1926 = vrot.slane %v1925, 4
    %v1927 = vmax.f32 %v1925, %v1926
    %v1928 = vrot.slane %v1927, 2
    %v1929 = vmax.f32 %v1927, %v1928
    %v1930 = vrot.slane %v1929, 1
    %v1931 = vmax.f32 %v1929, %v1930
    %v1932 = vsel %vm1742, %v1864, -inf
    %v1933 = vrot.slane %v1932, 4
    %v1934 = vmax.f32 %v1932, %v1933
    %v1935 = vrot.slane %v1934, 2
    %v1936 = vmax.f32 %v1934, %v1935
    %v1937 = vrot.slane %v1936, 1
    %v1938 = vmax.f32 %v1936, %v1937
    %v1939 = vsel %vm1742, %v1709, -inf
    %v1940 = vrot.slane %v1939, 4
    %v1941 = vmax.f32 %v1939, %v1940
    %v1942 = vrot.slane %v1941, 2
    %v1943 = vmax.f32 %v1941, %v1942
    %v1944 = vrot.slane %v1943, 1
    %v1945 = vmax.f32 %v1943, %v1944
    %v1946 = vsel %vm1742, %v1865, -inf
    %v1947 = vrot.slane %v1946, 4
    %v1948 = vmax.f32 %v1946, %v1947
    %v1949 = vrot.slane %v1948, 2
    %v1950 = vmax.f32 %v1948, %v1949
    %v1951 = vrot.slane %v1950, 1
    %v1952 = vmax.f32 %v1950, %v1951
    %v1953 = vsel %vm1742, %v1866, -inf
    %v1954 = vrot.slane %v1953, 4
    %v1955 = vmax.f32 %v1953, %v1954
    %v1956 = vrot.slane %v1955, 2
    %v1957 = vmax.f32 %v1955, %v1956
    %v1958 = vrot.slane %v1957, 1
    %v1959 = vmax.f32 %v1957, %v1958
    %v1960 = vsel %vm1742, %v1867, -inf
    %v1961 = vrot.slane %v1960, 4
    %v1962 = vmax.f32 %v1960, %v1961
    %v1963 = vrot.slane %v1962, 2
    %v1964 = vmax.f32 %v1962, %v1963
    %v1965 = vrot.slane %v1964, 1
    %v1966 = vmax.f32 %v1964, %v1965
    %v1967 = vsel %vm1742, %v1712, -inf
    %v1968 = vrot.slane %v1967, 4
    %v1969 = vmax.f32 %v1967, %v1968
    %v1970 = vrot.slane %v1969, 2
    %v1971 = vmax.f32 %v1969, %v1970
    %v1972 = vrot.slane %v1971, 1
    %v1973 = vmax.f32 %v1971, %v1972
    %v1974 = vsel %vm1742, %v1868, -inf
    %v1975 = vrot.slane %v1974, 4
    %v1976 = vmax.f32 %v1974, %v1975
    %v1977 = vrot.slane %v1976, 2
    %v1978 = vmax.f32 %v1976, %v1977
    %v1979 = vrot.slane %v1978, 1
    %v1980 = vmax.f32 %v1978, %v1979
    %v1981 = vsel %vm1742, %v1869, -inf
    %v1982 = vrot.slane %v1981, 4
    %v1983 = vmax.f32 %v1981, %v1982
    %v1984 = vrot.slane %v1983, 2
    %v1985 = vmax.f32 %v1983, %v1984
    %v1986 = vrot.slane %v1985, 1
    %v1987 = vmax.f32 %v1985, %v1986
    %v1988 = vsel %vm1742, %v1870, -inf
    %v1989 = vrot.slane %v1988, 4
    %v1990 = vmax.f32 %v1988, %v1989
    %v1991 = vrot.slane %v1990, 2
    %v1992 = vmax.f32 %v1990, %v1991
    %v1993 = vrot.slane %v1992, 1
    %v1994 = vmax.f32 %v1992, %v1993
    %v1995 = vadd.f32 %v1749, %v1889
    %v1996 = vadd.f32 %v1756, %v1896
    %v1997 = vadd.f32 %v1763, %v1903
    %v1998 = vadd.f32 %v1770, %v1910
    %v1999 = vadd.f32 %v1777, %v1917
    %v2000 = vadd.f32 %v1784, %v1924
    %v2001 = vadd.f32 %v1791, %v1931
    %v2002 = vadd.f32 %v1798, %v1938
    %v2003 = vadd.f32 %v1805, %v1945
    %v2004 = vadd.f32 %v1812, %v1952
    %v2005 = vadd.f32 %v1819, %v1959
    %v2006 = vadd.f32 %v1826, %v1966
    %v2007 = vadd.f32 %v1833, %v1973
    %v2008 = vadd.f32 %v1840, %v1980
    %v2009 = vadd.f32 %v1847, %v1987
    %v2010 = vadd.f32 %v1854, %v1994
    %2011 = vst [vmem:[#allocation4] sm:$0xff] 0.0
    %2012 = vst [vmem:[#allocation4 + $0x8] sm:$0xff] 0.0
    %2013 = vst [vmem:[#allocation4 + $0x10] sm:$0xff] 0.0
    %vm2014 = vcmask 523264
    %2015 = vst.msk [vmem:[#allocation4 + $0x18] sm:$0xff] %vm2014, 0.0
    %2016 = vst [vmem:[#allocation4 + $0x20] sm:$0xff] 0.0
    %2017 = vst [vmem:[#allocation4 + $0x28] sm:$0xff] 0.0
    %2018 = vst [vmem:[#allocation4 + $0x30] sm:$0xff] 0.0
    %2019 = vst.msk [vmem:[#allocation4 + $0x38] sm:$0xff] %vm2014, 0.0
    %v2030 = vsel %vm1256, %v1996, %v1995
    %v2031 = vsel %vm1258, %v1997, %v2030
    %v2032 = vsel %vm1260, %v1998, %v2031
    %v2033 = vsel %vm1262, %v1999, %v2032
    %v2034 = vsel %vm1256, %v2004, %v2003
    %v2035 = vsel %vm1258, %v2005, %v2034
    %v2036 = vsel %vm1260, %v2006, %v2035
    %v2037 = vsel %vm1262, %v2007, %v2036
    %vm2040 = vcmask 523267
    %2041 = vst.msk [vmem:[#allocation4] sm:$0xf8] %vm2040, %v2033
    %2042 = vst.msk [vmem:[#allocation4 + $0x20] sm:$0xf8] %vm2040, %v2037
    %v2045 = vsel %vm1268, %v1996, %v1995
    %v2046 = vsel %vm1256, %v1997, %v2045
    %v2047 = vsel %vm1258, %v1998, %v2046
    %v2048 = vsel %vm1260, %v1999, %v2047
    %v2049 = vsel %vm1262, %v2000, %v2048
    %v2050 = vsel %vm1268, %v2004, %v2003
    %v2051 = vsel %vm1256, %v2005, %v2050
    %v2052 = vsel %vm1258, %v2006, %v2051
    %v2053 = vsel %vm1260, %v2007, %v2052
    %v2054 = vsel %vm1262, %v2008, %v2053
    %2055 = vrot.lane.b32.xlu0 %v2049, 64
    %v2056 = vpop.permute.xlu0 %2055
    %2057 = vrot.lane.b32.xlu0 %v2054, 64
    %v2058 = vpop.permute.xlu0 %2057
    %vm2061 = vcmask 1048066
    %2062 = vst.msk [vmem:[#allocation4] sm:$0xfc] %vm2061, %v2056
    %2063 = vst.msk [vmem:[#allocation4 + $0x20] sm:$0xfc] %vm2061, %v2058
    %v2066 = vsel %vm1266, %v1996, %v1995
    %v2067 = vsel %vm1268, %v1997, %v2066
    %v2068 = vsel %vm1256, %v1998, %v2067
    %v2069 = vsel %vm1258, %v1999, %v2068
    %v2070 = vsel %vm1260, %v2000, %v2069
    %v2071 = vsel %vm1262, %v2001, %v2070
    %v2072 = vsel %vm1266, %v2004, %v2003
    %v2073 = vsel %vm1268, %v2005, %v2072
    %v2074 = vsel %vm1256, %v2006, %v2073
    %v2075 = vsel %vm1258, %v2007, %v2074
    %v2076 = vsel %vm1260, %v2008, %v2075
    %v2077 = vsel %vm1262, %v2009, %v2076
    %vm2080 = vcmask 523265
    %2081 = vst.msk [vmem:[#allocation4 + $0x8] sm:$0xfe] %vm2080, %v2071
    %2082 = vst.msk [vmem:[#allocation4 + $0x28] sm:$0xfe] %vm2080, %v2077
    %v2085 = vsel %vm1264, %v1996, %v1995
    %v2086 = vsel %vm1266, %v1997, %v2085
    %v2087 = vsel %vm1268, %v1998, %v2086
    %v2088 = vsel %vm1256, %v1999, %v2087
    %v2089 = vsel %vm1258, %v2000, %v2088
    %v2090 = vsel %vm1260, %v2001, %v2089
    %v2091 = vsel %vm1262, %v2002, %v2090
    %v2092 = vsel %vm1264, %v2004, %v2003
    %v2093 = vsel %vm1266, %v2005, %v2092
    %v2094 = vsel %vm1268, %v2006, %v2093
    %v2095 = vsel %vm1256, %v2007, %v2094
    %v2096 = vsel %vm1258, %v2008, %v2095
    %v2097 = vsel %vm1260, %v2009, %v2096
    %v2098 = vsel %vm1262, %v2010, %v2097
    %2099 = vrot.lane.b32.xlu0 %v2091, 64
    %v2100 = vpop.permute.xlu0 %2099
    %2101 = vrot.lane.b32.xlu0 %v2098, 64
    %v2102 = vpop.permute.xlu0 %2101
    %vm2105 = vcmask 1048064
    %2106 = vst.msk [vmem:[#allocation4 + $0x8] sm:$0xff] %vm2105, %v2100
    %2107 = vst.msk [vmem:[#allocation4 + $0x28] sm:$0xff] %vm2105, %v2102
    %v2108 = vsel %vm1264, %v1997, %v1996
    %v2109 = vsel %vm1266, %v1998, %v2108
    %v2110 = vsel %vm1268, %v1999, %v2109
    %v2111 = vsel %vm1256, %v2000, %v2110
    %v2112 = vsel %vm1258, %v2001, %v2111
    %v2113 = vsel %vm1260, %v2002, %v2112
    %v2114 = vsel %vm1264, %v2005, %v2004
    %v2115 = vsel %vm1266, %v2006, %v2114
    %v2116 = vsel %vm1268, %v2007, %v2115
    %v2117 = vsel %vm1256, %v2008, %v2116
    %v2118 = vsel %vm1258, %v2009, %v2117
    %v2119 = vsel %vm1260, %v2010, %v2118
    %vm2122 = vcmask 522240
    %2123 = vst.msk [vmem:[#allocation4 + $0x10] sm:$0x7f] %vm2122, %v2113
    %2124 = vst.msk [vmem:[#allocation4 + $0x30] sm:$0x7f] %vm2122, %v2119
    %v2125 = vsel %vm1264, %v1998, %v1997
    %v2126 = vsel %vm1266, %v1999, %v2125
    %v2127 = vsel %vm1268, %v2000, %v2126
    %v2128 = vsel %vm1256, %v2001, %v2127
    %v2129 = vsel %vm1258, %v2002, %v2128
    %v2130 = vsel %vm1264, %v2006, %v2005
    %v2131 = vsel %vm1266, %v2007, %v2130
    %v2132 = vsel %vm1268, %v2008, %v2131
    %v2133 = vsel %vm1256, %v2009, %v2132
    %v2134 = vsel %vm1258, %v2010, %v2133
    %2135 = vrot.lane.b32.xlu0 %v2129, 64
    %v2136 = vpop.permute.xlu0 %2135
    %2137 = vrot.lane.b32.xlu0 %v2134, 64
    %v2138 = vpop.permute.xlu0 %2137
    %vm2141 = vcmask 1046016
    %2142 = vst.msk [vmem:[#allocation4 + $0x10] sm:$0x3f] %vm2141, %v2136
    %2143 = vst.msk [vmem:[#allocation4 + $0x30] sm:$0x3f] %vm2141, %v2138
    %v2144 = vsel %vm1264, %v1999, %v1998
    %v2145 = vsel %vm1266, %v2000, %v2144
    %v2146 = vsel %vm1268, %v2001, %v2145
    %v2147 = vsel %vm1256, %v2002, %v2146
    %v2148 = vsel %vm1264, %v2007, %v2006
    %v2149 = vsel %vm1266, %v2008, %v2148
    %v2150 = vsel %vm1268, %v2009, %v2149
    %v2151 = vsel %vm1256, %v2010, %v2150
    %vm2154 = vcmask 520192
    %2155 = vst.msk [vmem:[#allocation4 + $0x18] sm:$0x1f] %vm2154, %v2147
    %2156 = vst.msk [vmem:[#allocation4 + $0x38] sm:$0x1f] %vm2154, %v2151
    %v2157 = vld [vmem:[#allocation4] sm:$0xff]
    %v2158 = vld [vmem:[#allocation4 + $0x8] sm:$0xff]
    %v2159 = vld [vmem:[#allocation4 + $0x10] sm:$0xff]
    %v2160 = vld [vmem:[#allocation4 + $0x18] sm:$0xff]
    %v2161 = vld [vmem:[#allocation4 + $0x20] sm:$0xff]
    %v2162 = vld [vmem:[#allocation4 + $0x28] sm:$0xff]
    %v2163 = vld [vmem:[#allocation4 + $0x30] sm:$0xff]
    %v2164 = vld [vmem:[#allocation4 + $0x38] sm:$0xff]
    %v2165 = vld [vmem:[#allocation13] sm:$0xff]
    %v2166 = vld [vmem:[#allocation13 + $0x8] sm:$0xff]
    %v2167 = vld [vmem:[#allocation13 + $0x10] sm:$0xff]
    %v2168 = vld [vmem:[#allocation13 + $0x18] sm:$0xff]
    %v2169 = vld [vmem:[#allocation13 + $0x20] sm:$0xff]
    %v2170 = vld [vmem:[#allocation13 + $0x28] sm:$0xff]
    %v2171 = vld [vmem:[#allocation13 + $0x30] sm:$0xff]
    %v2172 = vld [vmem:[#allocation13 + $0x38] sm:$0xff]
    %v2173 = vld [vmem:[#allocation13 + $0x40] sm:$0xff]
    %v2174 = vld [vmem:[#allocation13 + $0x48] sm:$0xff]
    %v2175 = vld [vmem:[#allocation13 + $0x50] sm:$0xff]
    %v2176 = vld [vmem:[#allocation13 + $0x58] sm:$0xff]
    %v2177 = vld [vmem:[#allocation13 + $0x60] sm:$0xff]
    %v2178 = vld [vmem:[#allocation13 + $0x68] sm:$0xff]
    %v2179 = vld [vmem:[#allocation13 + $0x70] sm:$0xff]
    %v2180 = vld [vmem:[#allocation13 + $0x78] sm:$0xff]
    %v2181 = vld [vmem:[#allocation13 + $0x80] sm:$0xff]
    %v2182 = vld [vmem:[#allocation13 + $0x88] sm:$0xff]
    %v2183 = vld [vmem:[#allocation13 + $0x90] sm:$0xff]
    %v2184 = vld [vmem:[#allocation13 + $0x98] sm:$0xff]
    %v2185 = vld [vmem:[#allocation13 + $0xa0] sm:$0xff]
    %v2186 = vld [vmem:[#allocation13 + $0xa8] sm:$0xff]
    %v2187 = vld [vmem:[#allocation13 + $0xb0] sm:$0xff]
    %v2188 = vld [vmem:[#allocation13 + $0xb8] sm:$0xff]
    %v2189 = vld [vmem:[#allocation13 + $0xc0] sm:$0xff]
    %v2190 = vld [vmem:[#allocation13 + $0xc8] sm:$0xff]
    %v2191 = vld [vmem:[#allocation13 + $0xd0] sm:$0xff]
    %v2192 = vld [vmem:[#allocation13 + $0xd8] sm:$0xff]
    %v2193 = vld [vmem:[#allocation13 + $0xe0] sm:$0xff]
    %v2194 = vld [vmem:[#allocation13 + $0xe8] sm:$0xff]
    %v2195 = vld [vmem:[#allocation13 + $0xf0] sm:$0xff]
    %v2196 = vld [vmem:[#allocation13 + $0xf8] sm:$0xff]
    %v2197 = vld [vmem:[#allocation13 + $0x100] sm:$0xff]
    %v2198 = vld [vmem:[#allocation13 + $0x108] sm:$0xff]
    %v2199 = vld [vmem:[#allocation13 + $0x110] sm:$0xff]
    %v2200 = vld [vmem:[#allocation13 + $0x118] sm:$0xff]
    %v2201 = vld [vmem:[#allocation13 + $0x120] sm:$0xff]
    %v2202 = vld [vmem:[#allocation13 + $0x128] sm:$0xff]
    %v2203 = vld [vmem:[#allocation13 + $0x130] sm:$0xff]
    %v2204 = vld [vmem:[#allocation13 + $0x138] sm:$0xff]
    %v2205 = vld [vmem:[#allocation13 + $0x140] sm:$0xff]
    %v2206 = vld [vmem:[#allocation13 + $0x148] sm:$0xff]
    %v2207 = vld [vmem:[#allocation13 + $0x150] sm:$0xff]
    %v2208 = vld [vmem:[#allocation13 + $0x158] sm:$0xff]
    %v2209 = vld [vmem:[#allocation13 + $0x160] sm:$0xff]
    %v2210 = vld [vmem:[#allocation13 + $0x168] sm:$0xff]
    %v2211 = vld [vmem:[#allocation13 + $0x170] sm:$0xff]
    %v2212 = vld [vmem:[#allocation13 + $0x178] sm:$0xff]
    %v2213 = vld [vmem:[#allocation13 + $0x180] sm:$0xff]
    %v2214 = vld [vmem:[#allocation13 + $0x188] sm:$0xff]
    %v2215 = vld [vmem:[#allocation13 + $0x190] sm:$0xff]
    %v2216 = vld [vmem:[#allocation13 + $0x198] sm:$0xff]
    %v2217 = vld [vmem:[#allocation13 + $0x1a0] sm:$0xff]
    %v2218 = vld [vmem:[#allocation13 + $0x1a8] sm:$0xff]
    %v2219 = vld [vmem:[#allocation13 + $0x1b0] sm:$0xff]
    %v2220 = vld [vmem:[#allocation13 + $0x1b8] sm:$0xff]
    %v2221 = vld [vmem:[%s10] sm:$0x1]
    %v2223 = vperm.slane %v2221, 0
    %v2226 = vsel %vm2014, %v2160, 0
    %v2229 = vsel %vm2014, %v2164, 0
    %2231 = vmatpush.msra.mxu0 %v2180
    %2232 = vmatpush.msra.mxu0 %v2179
    %2233 = vmatpush.msra.mxu0 %v2178
    %2234 = vmatpush.msra.mxu0 %v2177
    %2235 = vmatpush.msra.mxu0 %v2176
    %2236 = vmatpush.msra.mxu0 %v2175
    %2237 = vmatpush.msra.mxu0 %v2174
    %2238 = vmatpush.msra.mxu0 %v2173
    %2239 = vmatpush.msra.mxu0 %v2172
    %2240 = vmatpush.msra.mxu0 %v2171
    %2241 = vmatpush.msra.mxu0 %v2170
    %2242 = vmatpush.msra.mxu0 %v2169
    %2243 = vmatpush.msra.mxu0 %v2168
    %2244 = vmatpush.msra.mxu0 %v2167
    %2245 = vmatpush.msra.mxu0 %v2166
    %2246 = vmatpush.msra.mxu0 %v2165
    %2247 = vmatmul.f32.gmra.mxu0 %v2157
    %v2248 = vpop.f32.mrf.mxu0
    %v2249 = vadd.f32 %v2223, %v2248
    %2250 = vmatmul.f32.gmra.mxu0 %v2161
    %v2251 = vpop.f32.mrf.mxu0
    %v2252 = vadd.f32 %v2223, %v2251
    %2253 = vdwg.mxu0
    %2254 = vmatpush.msra.mxu0 %v2196
    %2255 = vmatpush.msra.mxu0 %v2195
    %2256 = vmatpush.msra.mxu0 %v2194
    %2257 = vmatpush.msra.mxu0 %v2193
    %2258 = vmatpush.msra.mxu0 %v2192
    %2259 = vmatpush.msra.mxu0 %v2191
    %2260 = vmatpush.msra.mxu0 %v2190
    %2261 = vmatpush.msra.mxu0 %v2189
    %2262 = vmatpush.msra.mxu0 %v2188
    %2263 = vmatpush.msra.mxu0 %v2187
    %2264 = vmatpush.msra.mxu0 %v2186
    %2265 = vmatpush.msra.mxu0 %v2185
    %2266 = vmatpush.msra.mxu0 %v2184
    %2267 = vmatpush.msra.mxu0 %v2183
    %2268 = vmatpush.msra.mxu0 %v2182
    %2269 = vmatpush.msra.mxu0 %v2181
    %2270 = vmatmul.f32.gmra.mxu0 %v2158
    %v2271 = vpop.f32.mrf.mxu0
    %v2272 = vadd.f32 %v2249, %v2271
    %2273 = vmatmul.f32.gmra.mxu0 %v2162
    %v2274 = vpop.f32.mrf.mxu0
    %v2275 = vadd.f32 %v2252, %v2274
    %2276 = vdwg.mxu0
    %2277 = vmatpush.msra.mxu0 %v2212
    %2278 = vmatpush.msra.mxu0 %v2211
    %2279 = vmatpush.msra.mxu0 %v2210
    %2280 = vmatpush.msra.mxu0 %v2209
    %2281 = vmatpush.msra.mxu0 %v2208
    %2282 = vmatpush.msra.mxu0 %v2207
    %2283 = vmatpush.msra.mxu0 %v2206
    %2284 = vmatpush.msra.mxu0 %v2205
    %2285 = vmatpush.msra.mxu0 %v2204
    %2286 = vmatpush.msra.mxu0 %v2203
    %2287 = vmatpush.msra.mxu0 %v2202
    %2288 = vmatpush.msra.mxu0 %v2201
    %2289 = vmatpush.msra.mxu0 %v2200
    %2290 = vmatpush.msra.mxu0 %v2199
    %2291 = vmatpush.msra.mxu0 %v2198
    %2292 = vmatpush.msra.mxu0 %v2197
    %2293 = vmatmul.f32.gmra.mxu0 %v2159
    %v2294 = vpop.f32.mrf.mxu0
    %v2295 = vadd.f32 %v2272, %v2294
    %2296 = vmatmul.f32.gmra.mxu0 %v2163
    %v2297 = vpop.f32.mrf.mxu0
    %v2298 = vadd.f32 %v2275, %v2297
    %2299 = vdwg.mxu0
    %2300 = vmatpush.msra.mxu0 0.0
    %2301 = vmatpush.msra.mxu0 0.0
    %2302 = vmatpush.msra.mxu0 0.0
    %2303 = vmatpush.msra.mxu0 0.0
    %2304 = vmatpush.msra.mxu0 0.0
    %2305 = vmatpush.msra.mxu0 0.0
    %2306 = vmatpush.msra.mxu0 0.0
    %2307 = vmatpush.msra.mxu0 0.0
    %2308 = vmatpush.msra.mxu0 %v2220
    %2309 = vmatpush.msra.mxu0 %v2219
    %2310 = vmatpush.msra.mxu0 %v2218
    %2311 = vmatpush.msra.mxu0 %v2217
    %2312 = vmatpush.msra.mxu0 %v2216
    %2313 = vmatpush.msra.mxu0 %v2215
    %2314 = vmatpush.msra.mxu0 %v2214
    %2315 = vmatpush.msra.mxu0 %v2213
    %2316 = vmatmul.f32.gmra.mxu0 %v2226
    %v2317 = vpop.f32.mrf.mxu0
    %v2318 = vadd.f32 %v2295, %v2317
    %2319 = vmatmul.f32.gmra.mxu0 %v2229
    %v2320 = vpop.f32.mrf.mxu0
    %v2321 = vadd.f32 %v2298, %v2320
    %2322 = vdwg.mxu0
    %vm2323 = vcmp.gt.f32.partialorder %v2318, 0.0
    %vm2324 = vcmp.gt.f32.partialorder %v2321, 0.0
    %v2325 = vmul.f32 %v2318, 0.1
    %v2326 = vmul.f32 %v2321, 0.1
    %v2327 = vsel %vm2323, %v2318, %v2325
    %v2328 = vsel %vm2324, %v2321, %v2326
    %v2329 = vld [vmem:[#allocation14] sm:$0xff]
    %v2330 = vld [vmem:[#allocation14 + $0x8] sm:$0xff]
    %v2331 = vld [vmem:[#allocation14 + $0x10] sm:$0xff]
    %v2332 = vld [vmem:[#allocation14 + $0x18] sm:$0xff]
    %v2333 = vld [vmem:[#allocation14 + $0x20] sm:$0xff]
    %v2334 = vld [vmem:[#allocation14 + $0x28] sm:$0xff]
    %v2335 = vld [vmem:[#allocation14 + $0x30] sm:$0xff]
    %v2336 = vld [vmem:[#allocation14 + $0x38] sm:$0xff]
    %v2337 = vld [vmem:[%s12] sm:$0x1]
    %v2339 = vperm.slane %v2337, 0
    %v2341 = vsel %vm2014, %v2091, 0
    %v2343 = vsel %vm2014, %v2098, 0
    %2345 = vmatpush.msra.mxu0 0.0
    %2346 = vmatpush.msra.mxu0 0.0
    %2347 = vmatpush.msra.mxu0 0.0
    %2348 = vmatpush.msra.mxu0 0.0
    %2349 = vmatpush.msra.mxu0 0.0
    %2350 = vmatpush.msra.mxu0 0.0
    %2351 = vmatpush.msra.mxu0 0.0
    %2352 = vmatpush.msra.mxu0 0.0
    %2353 = vmatpush.msra.mxu0 %v2336
    %2354 = vmatpush.msra.mxu0 %v2335
    %2355 = vmatpush.msra.mxu0 %v2334
    %2356 = vmatpush.msra.mxu0 %v2333
    %2357 = vmatpush.msra.mxu0 %v2332
    %2358 = vmatpush.msra.mxu0 %v2331
    %2359 = vmatpush.msra.mxu0 %v2330
    %2360 = vmatpush.msra.mxu0 %v2329
    %2361 = vmatmul.f32.gmra.mxu0 %v2341
    %v2362 = vpop.f32.mrf.mxu0
    %v2363 = vadd.f32 %v2339, %v2362
    %2364 = vmatmul.f32.gmra.mxu0 %v2343
    %v2365 = vpop.f32.mrf.mxu0
    %v2366 = vadd.f32 %v2339, %v2365
    %2367 = vdwg.mxu0
    %v2368 = vadd.f32 %v2327, %v2363
    %v2369 = vadd.f32 %v2328, %v2366
    %v2370 = vld [vmem:[%s13] sm:$0xff]
    %v2371 = vld [vmem:[%s13 + $0x8] sm:$0xff]
    %v2372 = vld [vmem:[%s13 + $0x10] sm:$0xff]
    %v2373 = vld [vmem:[%s13 + $0x18] sm:$0xff]
    %v2374 = vld [vmem:[%s13 + $0x20] sm:$0xff]
    %v2375 = vld [vmem:[%s13 + $0x28] sm:$0xff]
    %v2376 = vld [vmem:[%s13 + $0x30] sm:$0xff]
    %v2377 = vld [vmem:[%s13 + $0x38] sm:$0xff]
    %v2378 = vld [vmem:[%s13 + $0x40] sm:$0xff]
    %v2379 = vld [vmem:[%s13 + $0x48] sm:$0xff]
    %v2380 = vld [vmem:[%s13 + $0x50] sm:$0xff]
    %v2381 = vld [vmem:[%s13 + $0x58] sm:$0xff]
    %v2382 = vld [vmem:[%s13 + $0x60] sm:$0xff]
    %v2383 = vld [vmem:[%s13 + $0x68] sm:$0xff]
    %v2384 = vld [vmem:[%s13 + $0x70] sm:$0xff]
    %v2385 = vld [vmem:[%s13 + $0x78] sm:$0xff]
    %v2386 = vld [vmem:[#allocation16] sm:$0x1]
    %v2388 = vperm.slane %v2386, 0
    %2390 = vmatpush.msra.mxu0 %v2385
    %2391 = vmatpush.msra.mxu0 %v2384
    %2392 = vmatpush.msra.mxu0 %v2383
    %2393 = vmatpush.msra.mxu0 %v2382
    %2394 = vmatpush.msra.mxu0 %v2381
    %2395 = vmatpush.msra.mxu0 %v2380
    %2396 = vmatpush.msra.mxu0 %v2379
    %2397 = vmatpush.msra.mxu0 %v2378
    %2398 = vmatpush.msra.mxu0 %v2377
    %2399 = vmatpush.msra.mxu0 %v2376
    %2400 = vmatpush.msra.mxu0 %v2375
    %2401 = vmatpush.msra.mxu0 %v2374
    %2402 = vmatpush.msra.mxu0 %v2373
    %2403 = vmatpush.msra.mxu0 %v2372
    %2404 = vmatpush.msra.mxu0 %v2371
    %2405 = vmatpush.msra.mxu0 %v2370
    %2406 = vmatmul.f32.gmra.mxu0 %v2368
    %v2407 = vpop.f32.mrf.mxu0
    %v2408 = vadd.f32 %v2388, %v2407
    %2409 = vmatmul.f32.gmra.mxu0 %v2369
    %v2410 = vpop.f32.mrf.mxu0
    %v2411 = vadd.f32 %v2388, %v2410
    %2412 = vdwg.mxu0
    %v2413 = vld [vmem:[#allocation17] sm:$0xff]
    %v2414 = vld [vmem:[#allocation17 + $0x8] sm:$0xff]
    %v2415 = vld [vmem:[#allocation17 + $0x10] sm:$0xff]
    %v2416 = vld [vmem:[#allocation17 + $0x18] sm:$0xff]
    %v2417 = vld [vmem:[#allocation17 + $0x20] sm:$0xff]
    %v2418 = vld [vmem:[#allocation17 + $0x28] sm:$0xff]
    %v2419 = vld [vmem:[#allocation17 + $0x30] sm:$0xff]
    %v2420 = vld [vmem:[#allocation17 + $0x38] sm:$0xff]
    %v2421 = vld [vmem:[#allocation17 + $0x40] sm:$0xff]
    %v2422 = vld [vmem:[#allocation17 + $0x48] sm:$0xff]
    %v2423 = vld [vmem:[#allocation17 + $0x50] sm:$0xff]
    %v2424 = vld [vmem:[#allocation17 + $0x58] sm:$0xff]
    %v2425 = vld [vmem:[#allocation17 + $0x60] sm:$0xff]
    %v2426 = vld [vmem:[#allocation17 + $0x68] sm:$0xff]
    %v2427 = vld [vmem:[#allocation17 + $0x70] sm:$0xff]
    %v2428 = vld [vmem:[#allocation17 + $0x78] sm:$0xff]
    %v2429 = vld [vmem:[%s16] sm:$0x1]
    %v2431 = vperm.slane %v2429, 0
    %2433 = vmatpush.msra.mxu0 %v2428
    %2434 = vmatpush.msra.mxu0 %v2427
    %2435 = vmatpush.msra.mxu0 %v2426
    %2436 = vmatpush.msra.mxu0 %v2425
    %2437 = vmatpush.msra.mxu0 %v2424
    %2438 = vmatpush.msra.mxu0 %v2423
    %2439 = vmatpush.msra.mxu0 %v2422
    %2440 = vmatpush.msra.mxu0 %v2421
    %2441 = vmatpush.msra.mxu0 %v2420
    %2442 = vmatpush.msra.mxu0 %v2419
    %2443 = vmatpush.msra.mxu0 %v2418
    %2444 = vmatpush.msra.mxu0 %v2417
    %2445 = vmatpush.msra.mxu0 %v2416
    %2446 = vmatpush.msra.mxu0 %v2415
    %2447 = vmatpush.msra.mxu0 %v2414
    %2448 = vmatpush.msra.mxu0 %v2413
    %2449 = vmatmul.f32.gmra.mxu0 %v2368
    %v2450 = vpop.f32.mrf.mxu0
    %v2451 = vadd.f32 %v2431, %v2450
    %2452 = vmatmul.f32.gmra.mxu0 %v2369
    %v2453 = vpop.f32.mrf.mxu0
    %v2454 = vadd.f32 %v2431, %v2453
    %2455 = vdwg.mxu0
    %v2456 = vld [vmem:[#allocation19] sm:$0xff]
    %v2457 = vld [vmem:[#allocation19 + $0x8] sm:$0xff]
    %v2458 = vld [vmem:[#allocation19 + $0x10] sm:$0xff]
    %v2459 = vld [vmem:[#allocation19 + $0x18] sm:$0xff]
    %v2460 = vld [vmem:[#allocation19 + $0x20] sm:$0xff]
    %v2461 = vld [vmem:[#allocation19 + $0x28] sm:$0xff]
    %v2462 = vld [vmem:[#allocation19 + $0x30] sm:$0xff]
    %v2463 = vld [vmem:[#allocation19 + $0x38] sm:$0xff]
    %v2464 = vld [vmem:[#allocation19 + $0x40] sm:$0xff]
    %v2465 = vld [vmem:[#allocation19 + $0x48] sm:$0xff]
    %v2466 = vld [vmem:[#allocation19 + $0x50] sm:$0xff]
    %v2467 = vld [vmem:[#allocation19 + $0x58] sm:$0xff]
    %v2468 = vld [vmem:[#allocation19 + $0x60] sm:$0xff]
    %v2469 = vld [vmem:[#allocation19 + $0x68] sm:$0xff]
    %v2470 = vld [vmem:[#allocation19 + $0x70] sm:$0xff]
    %v2471 = vld [vmem:[#allocation19 + $0x78] sm:$0xff]
    %v2472 = vld [vmem:[%s18] sm:$0x1]
    %v2474 = vperm.slane %v2472, 0
    %2476 = vmatpush.msra.mxu0 %v2471
    %2477 = vmatpush.msra.mxu0 %v2470
    %2478 = vmatpush.msra.mxu0 %v2469
    %2479 = vmatpush.msra.mxu0 %v2468
    %2480 = vmatpush.msra.mxu0 %v2467
    %2481 = vmatpush.msra.mxu0 %v2466
    %2482 = vmatpush.msra.mxu0 %v2465
    %2483 = vmatpush.msra.mxu0 %v2464
    %2484 = vmatpush.msra.mxu0 %v2463
    %2485 = vmatpush.msra.mxu0 %v2462
    %2486 = vmatpush.msra.mxu0 %v2461
    %2487 = vmatpush.msra.mxu0 %v2460
    %2488 = vmatpush.msra.mxu0 %v2459
    %2489 = vmatpush.msra.mxu0 %v2458
    %2490 = vmatpush.msra.mxu0 %v2457
    %2491 = vmatpush.msra.mxu0 %v2456
    %2492 = vmatmul.f32.gmra.mxu0 %v2368
    %v2493 = vpop.f32.mrf.mxu0
    %v2494 = vadd.f32 %v2474, %v2493
    %2495 = vmatmul.f32.gmra.mxu0 %v2369
    %v2496 = vpop.f32.mrf.mxu0
    %v2497 = vadd.f32 %v2474, %v2496
    %2498 = vdwg.mxu0
    %2499 = vmatpush.xpose.msra.mxu0 0.0
    %2500 = vmatpush.xpose.msra.mxu0 0.0
    %2501 = vmatpush.xpose.msra.mxu0 0.0
    %2502 = vmatpush.xpose.msra.mxu0 0.0
    %2503 = vmatpush.xpose.msra.mxu0 0.0
    %2504 = vmatpush.xpose.msra.mxu0 0.0
    %2505 = vmatpush.xpose.msra.mxu0 0.0
    %2506 = vmatpush.xpose.msra.mxu0 0.0
    %2507 = vmatpush.xpose.msra.mxu0 0.0
    %2508 = vmatpush.xpose.msra.mxu0 0.0
    %2509 = vmatpush.xpose.msra.mxu0 0.0
    %2510 = vmatpush.xpose.msra.mxu0 0.0
    %2511 = vmatpush.xpose.msra.mxu0 0.0
    %2512 = vmatpush.xpose.msra.mxu0 0.0
    %2513 = vmatpush.xpose.msra.mxu0 0.0
    %2514 = vmatpush.xpose.msra.mxu0 %v2451
    %2515 = vmatmul.f32.gmra.mxu0 %v2408
    %v2516 = vpop.f32.mrf.mxu0
    %v2517 = vadd.f32 0.0, %v2516
    %2518 = vdwg.mxu0
    %2519 = vmatpush.xpose.msra.mxu0 0.0
    %2520 = vmatpush.xpose.msra.mxu0 0.0
    %2521 = vmatpush.xpose.msra.mxu0 0.0
    %2522 = vmatpush.xpose.msra.mxu0 0.0
    %2523 = vmatpush.xpose.msra.mxu0 0.0
    %2524 = vmatpush.xpose.msra.mxu0 0.0
    %2525 = vmatpush.xpose.msra.mxu0 0.0
    %2526 = vmatpush.xpose.msra.mxu0 0.0
    %2527 = vmatpush.xpose.msra.mxu0 0.0
    %2528 = vmatpush.xpose.msra.mxu0 0.0
    %2529 = vmatpush.xpose.msra.mxu0 0.0
    %2530 = vmatpush.xpose.msra.mxu0 0.0
    %2531 = vmatpush.xpose.msra.mxu0 0.0
    %2532 = vmatpush.xpose.msra.mxu0 0.0
    %2533 = vmatpush.xpose.msra.mxu0 0.0
    %2534 = vmatpush.xpose.msra.mxu0 %v2454
    %2535 = vmatmul.f32.gmra.mxu0 %v2411
    %v2536 = vpop.f32.mrf.mxu0
    %v2537 = vadd.f32 0.0, %v2536
    %2538 = vdwg.mxu0
    %v2539 = vmul.f32 %v2517, 0.088388346
    %v2540 = vmul.f32 %v2537, 0.088388346
    %vm2541 = vcmask 64512
    %v2542 = vsel %vm2541, %v2539, -inf
    %2543 = vmax.xlane.f32.xlu0 %v2542
    %v2544 = vpop.xlane.xlu0 %2543
    %v2545 = vsel %vm2541, %v2540, -inf
    %2546 = vmax.xlane.f32.xlu0 %v2545
    %v2547 = vpop.xlane.xlu0 %2546
    %v2548 = vsub.f32 %v2539, %v2544
    %v2549 = vsub.f32 %v2540, %v2547
    %v2550 = vmul.f32 %v2548, 1.442695
    %v2551 = vpow.pop %v2550
    %v2552 = vmul.f32 %v2549, 1.442695
    %v2553 = vpow.pop %v2552
    %v2554 = vsel %vm2541, %v2551, 0.0
    %2555 = vadd.xlane.f32.xlu0 %v2554
    %v2556 = vpop.xlane.xlu0 %2555
    %v2557 = vsel %vm2541, %v2553, 0.0
    %2558 = vadd.xlane.f32.xlu0 %v2557
    %v2559 = vpop.xlane.xlu0 %2558
    %v2560 = vrcp.pop %v2556
    %v2561 = vrcp.pop %v2559
    %v2562 = vmul.f32 %v2551, %v2560
    %v2563 = vmul.f32 %v2553, %v2561
    %v2565 = vsel %vm2541, %v2562, 0
    %2567 = vmatpush.msra.mxu0 0.0
    %2568 = vmatpush.msra.mxu0 0.0
    %2569 = vmatpush.msra.mxu0 0.0
    %2570 = vmatpush.msra.mxu0 0.0
    %2571 = vmatpush.msra.mxu0 0.0
    %2572 = vmatpush.msra.mxu0 0.0
    %2573 = vmatpush.msra.mxu0 0.0
    %2574 = vmatpush.msra.mxu0 0.0
    %2575 = vmatpush.msra.mxu0 0.0
    %2576 = vmatpush.msra.mxu0 0.0
    %2577 = vmatpush.msra.mxu0 0.0
    %2578 = vmatpush.msra.mxu0 0.0
    %2579 = vmatpush.msra.mxu0 0.0
    %2580 = vmatpush.msra.mxu0 0.0
    %2581 = vmatpush.msra.mxu0 0.0
    %2582 = vmatpush.msra.mxu0 %v2494
    %2583 = vmatmul.f32.gmra.mxu0 %v2565
    %v2584 = vpop.f32.mrf.mxu0
    %v2585 = vadd.f32 0.0, %v2584
    %2586 = vdwg.mxu0
    %v2588 = vsel %vm2541, %v2563, 0
    %2590 = vmatpush.msra.mxu0 0.0
    %2591 = vmatpush.msra.mxu0 0.0
    %2592 = vmatpush.msra.mxu0 0.0
    %2593 = vmatpush.msra.mxu0 0.0
    %2594 = vmatpush.msra.mxu0 0.0
    %2595 = vmatpush.msra.mxu0 0.0
    %2596 = vmatpush.msra.mxu0 0.0
    %2597 = vmatpush.msra.mxu0 0.0
    %2598 = vmatpush.msra.mxu0 0.0
    %2599 = vmatpush.msra.mxu0 0.0
    %2600 = vmatpush.msra.mxu0 0.0
    %2601 = vmatpush.msra.mxu0 0.0
    %2602 = vmatpush.msra.mxu0 0.0
    %2603 = vmatpush.msra.mxu0 0.0
    %2604 = vmatpush.msra.mxu0 0.0
    %2605 = vmatpush.msra.mxu0 %v2497
    %2606 = vmatmul.f32.gmra.mxu0 %v2588
    %v2607 = vpop.f32.mrf.mxu0
    %v2608 = vadd.f32 0.0, %v2607
    %2609 = vdwg.mxu0
    %v2610 = vmul.f32 %v2585, 0.3928
    %v2611 = vmul.f32 %v2608, 0.3928
    %v2612 = vadd.f32 %v2368, %v2610
    %v2613 = vadd.f32 %v2369, %v2611
    %v2614 = vld [vmem:[#allocation20] sm:$0xff]
    %v2615 = vld [vmem:[#allocation20 + $0x8] sm:$0xff]
    %v2616 = vld [vmem:[#allocation20 + $0x10] sm:$0xff]
    %v2617 = vld [vmem:[#allocation20 + $0x18] sm:$0xff]
    %v2618 = vld [vmem:[#allocation20 + $0x20] sm:$0xff]
    %v2619 = vld [vmem:[#allocation20 + $0x28] sm:$0xff]
    %v2620 = vld [vmem:[#allocation20 + $0x30] sm:$0xff]
    %v2621 = vld [vmem:[#allocation20 + $0x38] sm:$0xff]
    %v2622 = vld [vmem:[#allocation20 + $0x40] sm:$0xff]
    %v2623 = vld [vmem:[#allocation20 + $0x48] sm:$0xff]
    %v2624 = vld [vmem:[#allocation20 + $0x50] sm:$0xff]
    %v2625 = vld [vmem:[#allocation20 + $0x58] sm:$0xff]
    %v2626 = vld [vmem:[#allocation20 + $0x60] sm:$0xff]
    %v2627 = vld [vmem:[#allocation20 + $0x68] sm:$0xff]
    %v2628 = vld [vmem:[#allocation20 + $0x70] sm:$0xff]
    %v2629 = vld [vmem:[#allocation20 + $0x78] sm:$0xff]
    %v2630 = vld [vmem:[#allocation20 + $0x80] sm:$0xff]
    %v2631 = vld [vmem:[#allocation20 + $0x88] sm:$0xff]
    %v2632 = vld [vmem:[#allocation20 + $0x90] sm:$0xff]
    %v2633 = vld [vmem:[#allocation20 + $0x98] sm:$0xff]
    %v2634 = vld [vmem:[#allocation20 + $0xa0] sm:$0xff]
    %v2635 = vld [vmem:[#allocation20 + $0xa8] sm:$0xff]
    %v2636 = vld [vmem:[#allocation20 + $0xb0] sm:$0xff]
    %v2637 = vld [vmem:[#allocation20 + $0xb8] sm:$0xff]
    %v2638 = vld [vmem:[#allocation20 + $0xc0] sm:$0xff]
    %v2639 = vld [vmem:[#allocation20 + $0xc8] sm:$0xff]
    %v2640 = vld [vmem:[#allocation20 + $0xd0] sm:$0xff]
    %v2641 = vld [vmem:[#allocation20 + $0xd8] sm:$0xff]
    %v2642 = vld [vmem:[#allocation20 + $0xe0] sm:$0xff]
    %v2643 = vld [vmem:[#allocation20 + $0xe8] sm:$0xff]
    %v2644 = vld [vmem:[#allocation20 + $0xf0] sm:$0xff]
    %v2645 = vld [vmem:[#allocation20 + $0xf8] sm:$0xff]
    %s2646 = scalar_lea.vmem [#allocation20], 256
    %v2647 = vld [vmem:[%s2646] sm:$0xff]
    %v2648 = vld [vmem:[%s2646 + $0x8] sm:$0xff]
    %v2649 = vld [vmem:[%s2646 + $0x10] sm:$0xff]
    %v2650 = vld [vmem:[%s2646 + $0x18] sm:$0xff]
    %v2651 = vld [vmem:[%s2646 + $0x20] sm:$0xff]
    %v2652 = vld [vmem:[%s2646 + $0x28] sm:$0xff]
    %v2653 = vld [vmem:[%s2646 + $0x30] sm:$0xff]
    %v2654 = vld [vmem:[%s2646 + $0x38] sm:$0xff]
    %v2655 = vld [vmem:[%s2646 + $0x40] sm:$0xff]
    %v2656 = vld [vmem:[%s2646 + $0x48] sm:$0xff]
    %v2657 = vld [vmem:[%s2646 + $0x50] sm:$0xff]
    %v2658 = vld [vmem:[%s2646 + $0x58] sm:$0xff]
    %v2659 = vld [vmem:[%s2646 + $0x60] sm:$0xff]
    %v2660 = vld [vmem:[%s2646 + $0x68] sm:$0xff]
    %v2661 = vld [vmem:[%s2646 + $0x70] sm:$0xff]
    %v2662 = vld [vmem:[%s2646 + $0x78] sm:$0xff]
    %v2663 = vld [vmem:[%s2646 + $0x80] sm:$0xff]
    %v2664 = vld [vmem:[%s2646 + $0x88] sm:$0xff]
    %v2665 = vld [vmem:[%s2646 + $0x90] sm:$0xff]
    %v2666 = vld [vmem:[%s2646 + $0x98] sm:$0xff]
    %v2667 = vld [vmem:[%s2646 + $0xa0] sm:$0xff]
    %v2668 = vld [vmem:[%s2646 + $0xa8] sm:$0xff]
    %v2669 = vld [vmem:[%s2646 + $0xb0] sm:$0xff]
    %v2670 = vld [vmem:[%s2646 + $0xb8] sm:$0xff]
    %v2671 = vld [vmem:[%s2646 + $0xc0] sm:$0xff]
    %v2672 = vld [vmem:[%s2646 + $0xc8] sm:$0xff]
    %v2673 = vld [vmem:[%s2646 + $0xd0] sm:$0xff]
    %v2674 = vld [vmem:[%s2646 + $0xd8] sm:$0xff]
    %v2675 = vld [vmem:[%s2646 + $0xe0] sm:$0xff]
    %v2676 = vld [vmem:[%s2646 + $0xe8] sm:$0xff]
    %v2677 = vld [vmem:[%s2646 + $0xf0] sm:$0xff]
    %v2678 = vld [vmem:[%s2646 + $0xf8] sm:$0xff]
    %v2681 = vrot.slane %v2612, 1
    %v2682 = vsel %vm1264, %v2613, %v2681
    %2684 = vmatpush.msra.mxu0 %v2677
    %2685 = vmatpush.msra.mxu0 %v2675
    %2686 = vmatpush.msra.mxu0 %v2673
    %2687 = vmatpush.msra.mxu0 %v2671
    %2688 = vmatpush.msra.mxu0 %v2669
    %2689 = vmatpush.msra.mxu0 %v2667
    %2690 = vmatpush.msra.mxu0 %v2665
    %2691 = vmatpush.msra.mxu0 %v2663
    %2692 = vmatpush.msra.mxu0 %v2661
    %2693 = vmatpush.msra.mxu0 %v2659
    %2694 = vmatpush.msra.mxu0 %v2657
    %2695 = vmatpush.msra.mxu0 %v2655
    %2696 = vmatpush.msra.mxu0 %v2653
    %2697 = vmatpush.msra.mxu0 %v2651
    %2698 = vmatpush.msra.mxu0 %v2649
    %2699 = vmatpush.msra.mxu0 %v2647
    %2700 = vmatmul.f32.gmra.mxu0 %v2682
    %v2701 = vpop.f32.mrf.mxu0
    %v2702 = vadd.f32 0.0, %v2701
    %2703 = vdwg.mxu0
    %2704 = vmatpush.msra.mxu0 %v2678
    %2705 = vmatpush.msra.mxu0 %v2676
    %2706 = vmatpush.msra.mxu0 %v2674
    %2707 = vmatpush.msra.mxu0 %v2672
    %2708 = vmatpush.msra.mxu0 %v2670
    %2709 = vmatpush.msra.mxu0 %v2668
    %2710 = vmatpush.msra.mxu0 %v2666
    %2711 = vmatpush.msra.mxu0 %v2664
    %2712 = vmatpush.msra.mxu0 %v2662
    %2713 = vmatpush.msra.mxu0 %v2660
    %2714 = vmatpush.msra.mxu0 %v2658
    %2715 = vmatpush.msra.mxu0 %v2656
    %2716 = vmatpush.msra.mxu0 %v2654
    %2717 = vmatpush.msra.mxu0 %v2652
    %2718 = vmatpush.msra.mxu0 %v2650
    %2719 = vmatpush.msra.mxu0 %v2648
    %2720 = vmatmul.f32.gmra.mxu0 %v2682
    %v2721 = vpop.f32.mrf.mxu0
    %v2722 = vadd.f32 0.0, %v2721
    %2723 = vdwg.mxu0
    %v2724 = vrot.slane %v2613, 7
    %v2725 = vsel %vm1264, %v2724, %v2612
    %2727 = vmatpush.msra.mxu0 %v2644
    %2728 = vmatpush.msra.mxu0 %v2642
    %2729 = vmatpush.msra.mxu0 %v2640
    %2730 = vmatpush.msra.mxu0 %v2638
    %2731 = vmatpush.msra.mxu0 %v2636
    %2732 = vmatpush.msra.mxu0 %v2634
    %2733 = vmatpush.msra.mxu0 %v2632
    %2734 = vmatpush.msra.mxu0 %v2630
    %2735 = vmatpush.msra.mxu0 %v2628
    %2736 = vmatpush.msra.mxu0 %v2626
    %2737 = vmatpush.msra.mxu0 %v2624
    %2738 = vmatpush.msra.mxu0 %v2622
    %2739 = vmatpush.msra.mxu0 %v2620
    %2740 = vmatpush.msra.mxu0 %v2618
    %2741 = vmatpush.msra.mxu0 %v2616
    %2742 = vmatpush.msra.mxu0 %v2614
    %2743 = vmatmul.f32.gmra.mxu0 %v2725
    %v2744 = vpop.f32.mrf.mxu0
    %v2745 = vadd.f32 %v2702, %v2744
    %2746 = vdwg.mxu0
    %2747 = vmatpush.msra.mxu0 %v2645
    %2748 = vmatpush.msra.mxu0 %v2643
    %2749 = vmatpush.msra.mxu0 %v2641
    %2750 = vmatpush.msra.mxu0 %v2639
    %2751 = vmatpush.msra.mxu0 %v2637
    %2752 = vmatpush.msra.mxu0 %v2635
    %2753 = vmatpush.msra.mxu0 %v2633
    %2754 = vmatpush.msra.mxu0 %v2631
    %2755 = vmatpush.msra.mxu0 %v2629
    %2756 = vmatpush.msra.mxu0 %v2627
    %2757 = vmatpush.msra.mxu0 %v2625
    %2758 = vmatpush.msra.mxu0 %v2623
    %2759 = vmatpush.msra.mxu0 %v2621
    %2760 = vmatpush.msra.mxu0 %v2619
    %2761 = vmatpush.msra.mxu0 %v2617
    %2762 = vmatpush.msra.mxu0 %v2615
    %2763 = vmatmul.f32.gmra.mxu0 %v2725
    %v2764 = vpop.f32.mrf.mxu0
    %v2765 = vadd.f32 %v2722, %v2764
    %2766 = vdwg.mxu0
    %s2767 = scalar_lea.vmem [#allocation20], 512
    %v2768 = vld [vmem:[%s2767] sm:$0xff]
    %v2769 = vld [vmem:[%s2767 + $0x8] sm:$0xff]
    %v2770 = vld [vmem:[%s2767 + $0x10] sm:$0xff]
    %v2771 = vld [vmem:[%s2767 + $0x18] sm:$0xff]
    %v2772 = vld [vmem:[%s2767 + $0x20] sm:$0xff]
    %v2773 = vld [vmem:[%s2767 + $0x28] sm:$0xff]
    %v2774 = vld [vmem:[%s2767 + $0x30] sm:$0xff]
    %v2775 = vld [vmem:[%s2767 + $0x38] sm:$0xff]
    %v2776 = vld [vmem:[%s2767 + $0x40] sm:$0xff]
    %v2777 = vld [vmem:[%s2767 + $0x48] sm:$0xff]
    %v2778 = vld [vmem:[%s2767 + $0x50] sm:$0xff]
    %v2779 = vld [vmem:[%s2767 + $0x58] sm:$0xff]
    %v2780 = vld [vmem:[%s2767 + $0x60] sm:$0xff]
    %v2781 = vld [vmem:[%s2767 + $0x68] sm:$0xff]
    %v2782 = vld [vmem:[%s2767 + $0x70] sm:$0xff]
    %v2783 = vld [vmem:[%s2767 + $0x78] sm:$0xff]
    %v2784 = vld [vmem:[%s2767 + $0x80] sm:$0xff]
    %v2785 = vld [vmem:[%s2767 + $0x88] sm:$0xff]
    %v2786 = vld [vmem:[%s2767 + $0x90] sm:$0xff]
    %v2787 = vld [vmem:[%s2767 + $0x98] sm:$0xff]
    %v2788 = vld [vmem:[%s2767 + $0xa0] sm:$0xff]
    %v2789 = vld [vmem:[%s2767 + $0xa8] sm:$0xff]
    %v2790 = vld [vmem:[%s2767 + $0xb0] sm:$0xff]
    %v2791 = vld [vmem:[%s2767 + $0xb8] sm:$0xff]
    %v2792 = vld [vmem:[%s2767 + $0xc0] sm:$0xff]
    %v2793 = vld [vmem:[%s2767 + $0xc8] sm:$0xff]
    %v2794 = vld [vmem:[%s2767 + $0xd0] sm:$0xff]
    %v2795 = vld [vmem:[%s2767 + $0xd8] sm:$0xff]
    %v2796 = vld [vmem:[%s2767 + $0xe0] sm:$0xff]
    %v2797 = vld [vmem:[%s2767 + $0xe8] sm:$0xff]
    %v2798 = vld [vmem:[%s2767 + $0xf0] sm:$0xff]
    %v2799 = vld [vmem:[%s2767 + $0xf8] sm:$0xff]
    %v2800 = vrot.slane %v2612, 2
    %v2801 = vrot.slane %v2613, 1
    %v2802 = vsel %vm1264, %v2801, %v2800
    %2804 = vmatpush.msra.mxu0 %v2798
    %2805 = vmatpush.msra.mxu0 %v2796
    %2806 = vmatpush.msra.mxu0 %v2794
    %2807 = vmatpush.msra.mxu0 %v2792
    %2808 = vmatpush.msra.mxu0 %v2790
    %2809 = vmatpush.msra.mxu0 %v2788
    %2810 = vmatpush.msra.mxu0 %v2786
    %2811 = vmatpush.msra.mxu0 %v2784
    %2812 = vmatpush.msra.mxu0 %v2782
    %2813 = vmatpush.msra.mxu0 %v2780
    %2814 = vmatpush.msra.mxu0 %v2778
    %2815 = vmatpush.msra.mxu0 %v2776
    %2816 = vmatpush.msra.mxu0 %v2774
    %2817 = vmatpush.msra.mxu0 %v2772
    %2818 = vmatpush.msra.mxu0 %v2770
    %2819 = vmatpush.msra.mxu0 %v2768
    %2820 = vmatmul.f32.gmra.mxu0 %v2802
    %v2821 = vpop.f32.mrf.mxu0
    %v2822 = vadd.f32 0.0, %v2821
    %2823 = vdwg.mxu0
    %2824 = vmatpush.msra.mxu0 %v2799
    %2825 = vmatpush.msra.mxu0 %v2797
    %2826 = vmatpush.msra.mxu0 %v2795
    %2827 = vmatpush.msra.mxu0 %v2793
    %2828 = vmatpush.msra.mxu0 %v2791
    %2829 = vmatpush.msra.mxu0 %v2789
    %2830 = vmatpush.msra.mxu0 %v2787
    %2831 = vmatpush.msra.mxu0 %v2785
    %2832 = vmatpush.msra.mxu0 %v2783
    %2833 = vmatpush.msra.mxu0 %v2781
    %2834 = vmatpush.msra.mxu0 %v2779
    %2835 = vmatpush.msra.mxu0 %v2777
    %2836 = vmatpush.msra.mxu0 %v2775
    %2837 = vmatpush.msra.mxu0 %v2773
    %2838 = vmatpush.msra.mxu0 %v2771
    %2839 = vmatpush.msra.mxu0 %v2769
    %2840 = vmatmul.f32.gmra.mxu0 %v2802
    %v2841 = vpop.f32.mrf.mxu0
    %v2842 = vadd.f32 0.0, %v2841
    %2843 = vdwg.mxu0
    %v2844 = vadd.f32 %v2745, %v2822
    %v2845 = vadd.f32 %v2765, %v2842
    %s2846 = scalar_lea.vmem [#allocation20], 768
    %v2847 = vld [vmem:[%s2846] sm:$0xff]
    %v2848 = vld [vmem:[%s2846 + $0x8] sm:$0xff]
    %v2849 = vld [vmem:[%s2846 + $0x10] sm:$0xff]
    %v2850 = vld [vmem:[%s2846 + $0x18] sm:$0xff]
    %v2851 = vld [vmem:[%s2846 + $0x20] sm:$0xff]
    %v2852 = vld [vmem:[%s2846 + $0x28] sm:$0xff]
    %v2853 = vld [vmem:[%s2846 + $0x30] sm:$0xff]
    %v2854 = vld [vmem:[%s2846 + $0x38] sm:$0xff]
    %v2855 = vld [vmem:[%s2846 + $0x40] sm:$0xff]
    %v2856 = vld [vmem:[%s2846 + $0x48] sm:$0xff]
    %v2857 = vld [vmem:[%s2846 + $0x50] sm:$0xff]
    %v2858 = vld [vmem:[%s2846 + $0x58] sm:$0xff]
    %v2859 = vld [vmem:[%s2846 + $0x60] sm:$0xff]
    %v2860 = vld [vmem:[%s2846 + $0x68] sm:$0xff]
    %v2861 = vld [vmem:[%s2846 + $0x70] sm:$0xff]
    %v2862 = vld [vmem:[%s2846 + $0x78] sm:$0xff]
    %v2863 = vld [vmem:[%s2846 + $0x80] sm:$0xff]
    %v2864 = vld [vmem:[%s2846 + $0x88] sm:$0xff]
    %v2865 = vld [vmem:[%s2846 + $0x90] sm:$0xff]
    %v2866 = vld [vmem:[%s2846 + $0x98] sm:$0xff]
    %v2867 = vld [vmem:[%s2846 + $0xa0] sm:$0xff]
    %v2868 = vld [vmem:[%s2846 + $0xa8] sm:$0xff]
    %v2869 = vld [vmem:[%s2846 + $0xb0] sm:$0xff]
    %v2870 = vld [vmem:[%s2846 + $0xb8] sm:$0xff]
    %v2871 = vld [vmem:[%s2846 + $0xc0] sm:$0xff]
    %v2872 = vld [vmem:[%s2846 + $0xc8] sm:$0xff]
    %v2873 = vld [vmem:[%s2846 + $0xd0] sm:$0xff]
    %v2874 = vld [vmem:[%s2846 + $0xd8] sm:$0xff]
    %v2875 = vld [vmem:[%s2846 + $0xe0] sm:$0xff]
    %v2876 = vld [vmem:[%s2846 + $0xe8] sm:$0xff]
    %v2877 = vld [vmem:[%s2846 + $0xf0] sm:$0xff]
    %v2878 = vld [vmem:[%s2846 + $0xf8] sm:$0xff]
    %v2879 = vrot.slane %v2612, 3
    %v2880 = vrot.slane %v2613, 2
    %v2881 = vsel %vm1264, %v2880, %v2879
    %2883 = vmatpush.msra.mxu0 %v2877
    %2884 = vmatpush.msra.mxu0 %v2875
    %2885 = vmatpush.msra.mxu0 %v2873
    %2886 = vmatpush.msra.mxu0 %v2871
    %2887 = vmatpush.msra.mxu0 %v2869
    %2888 = vmatpush.msra.mxu0 %v2867
    %2889 = vmatpush.msra.mxu0 %v2865
    %2890 = vmatpush.msra.mxu0 %v2863
    %2891 = vmatpush.msra.mxu0 %v2861
    %2892 = vmatpush.msra.mxu0 %v2859
    %2893 = vmatpush.msra.mxu0 %v2857
    %2894 = vmatpush.msra.mxu0 %v2855
    %2895 = vmatpush.msra.mxu0 %v2853
    %2896 = vmatpush.msra.mxu0 %v2851
    %2897 = vmatpush.msra.mxu0 %v2849
    %2898 = vmatpush.msra.mxu0 %v2847
    %2899 = vmatmul.f32.gmra.mxu0 %v2881
    %v2900 = vpop.f32.mrf.mxu0
    %v2901 = vadd.f32 0.0, %v2900
    %2902 = vdwg.mxu0
    %2903 = vmatpush.msra.mxu0 %v2878
    %2904 = vmatpush.msra.mxu0 %v2876
    %2905 = vmatpush.msra.mxu0 %v2874
    %2906 = vmatpush.msra.mxu0 %v2872
    %2907 = vmatpush.msra.mxu0 %v2870
    %2908 = vmatpush.msra.mxu0 %v2868
    %2909 = vmatpush.msra.mxu0 %v2866
    %2910 = vmatpush.msra.mxu0 %v2864
    %2911 = vmatpush.msra.mxu0 %v2862
    %2912 = vmatpush.msra.mxu0 %v2860
    %2913 = vmatpush.msra.mxu0 %v2858
    %2914 = vmatpush.msra.mxu0 %v2856
    %2915 = vmatpush.msra.mxu0 %v2854
    %2916 = vmatpush.msra.mxu0 %v2852
    %2917 = vmatpush.msra.mxu0 %v2850
    %2918 = vmatpush.msra.mxu0 %v2848
    %2919 = vmatmul.f32.gmra.mxu0 %v2881
    %v2920 = vpop.f32.mrf.mxu0
    %v2921 = vadd.f32 0.0, %v2920
    %2922 = vdwg.mxu0
    %v2923 = vadd.f32 %v2844, %v2901
    %v2924 = vadd.f32 %v2845, %v2921
    %s2925 = scalar_lea.vmem [#allocation20], 1024
    %v2926 = vld [vmem:[%s2925] sm:$0xff]
    %v2927 = vld [vmem:[%s2925 + $0x8] sm:$0xff]
    %v2928 = vld [vmem:[%s2925 + $0x10] sm:$0xff]
    %v2929 = vld [vmem:[%s2925 + $0x18] sm:$0xff]
    %v2930 = vld [vmem:[%s2925 + $0x20] sm:$0xff]
    %v2931 = vld [vmem:[%s2925 + $0x28] sm:$0xff]
    %v2932 = vld [vmem:[%s2925 + $0x30] sm:$0xff]
    %v2933 = vld [vmem:[%s2925 + $0x38] sm:$0xff]
    %v2934 = vld [vmem:[%s2925 + $0x40] sm:$0xff]
    %v2935 = vld [vmem:[%s2925 + $0x48] sm:$0xff]
    %v2936 = vld [vmem:[%s2925 + $0x50] sm:$0xff]
    %v2937 = vld [vmem:[%s2925 + $0x58] sm:$0xff]
    %v2938 = vld [vmem:[%s2925 + $0x60] sm:$0xff]
    %v2939 = vld [vmem:[%s2925 + $0x68] sm:$0xff]
    %v2940 = vld [vmem:[%s2925 + $0x70] sm:$0xff]
    %v2941 = vld [vmem:[%s2925 + $0x78] sm:$0xff]
    %v2942 = vld [vmem:[%s2925 + $0x80] sm:$0xff]
    %v2943 = vld [vmem:[%s2925 + $0x88] sm:$0xff]
    %v2944 = vld [vmem:[%s2925 + $0x90] sm:$0xff]
    %v2945 = vld [vmem:[%s2925 + $0x98] sm:$0xff]
    %v2946 = vld [vmem:[%s2925 + $0xa0] sm:$0xff]
    %v2947 = vld [vmem:[%s2925 + $0xa8] sm:$0xff]
    %v2948 = vld [vmem:[%s2925 + $0xb0] sm:$0xff]
    %v2949 = vld [vmem:[%s2925 + $0xb8] sm:$0xff]
    %v2950 = vld [vmem:[%s2925 + $0xc0] sm:$0xff]
    %v2951 = vld [vmem:[%s2925 + $0xc8] sm:$0xff]
    %v2952 = vld [vmem:[%s2925 + $0xd0] sm:$0xff]
    %v2953 = vld [vmem:[%s2925 + $0xd8] sm:$0xff]
    %v2954 = vld [vmem:[%s2925 + $0xe0] sm:$0xff]
    %v2955 = vld [vmem:[%s2925 + $0xe8] sm:$0xff]
    %v2956 = vld [vmem:[%s2925 + $0xf0] sm:$0xff]
    %v2957 = vld [vmem:[%s2925 + $0xf8] sm:$0xff]
    %v2958 = vrot.slane %v2612, 4
    %v2959 = vrot.slane %v2613, 3
    %v2960 = vsel %vm1264, %v2959, %v2958
    %2962 = vmatpush.msra.mxu0 %v2956
    %2963 = vmatpush.msra.mxu0 %v2954
    %2964 = vmatpush.msra.mxu0 %v2952
    %2965 = vmatpush.msra.mxu0 %v2950
    %2966 = vmatpush.msra.mxu0 %v2948
    %2967 = vmatpush.msra.mxu0 %v2946
    %2968 = vmatpush.msra.mxu0 %v2944
    %2969 = vmatpush.msra.mxu0 %v2942
    %2970 = vmatpush.msra.mxu0 %v2940
    %2971 = vmatpush.msra.mxu0 %v2938
    %2972 = vmatpush.msra.mxu0 %v2936
    %2973 = vmatpush.msra.mxu0 %v2934
    %2974 = vmatpush.msra.mxu0 %v2932
    %2975 = vmatpush.msra.mxu0 %v2930
    %2976 = vmatpush.msra.mxu0 %v2928
    %2977 = vmatpush.msra.mxu0 %v2926
    %2978 = vmatmul.f32.gmra.mxu0 %v2960
    %v2979 = vpop.f32.mrf.mxu0
    %v2980 = vadd.f32 0.0, %v2979
    %2981 = vdwg.mxu0
    %2982 = vmatpush.msra.mxu0 %v2957
    %2983 = vmatpush.msra.mxu0 %v2955
    %2984 = vmatpush.msra.mxu0 %v2953
    %2985 = vmatpush.msra.mxu0 %v2951
    %2986 = vmatpush.msra.mxu0 %v2949
    %2987 = vmatpush.msra.mxu0 %v2947
    %2988 = vmatpush.msra.mxu0 %v2945
    %2989 = vmatpush.msra.mxu0 %v2943
    %2990 = vmatpush.msra.mxu0 %v2941
    %2991 = vmatpush.msra.mxu0 %v2939
    %2992 = vmatpush.msra.mxu0 %v2937
    %2993 = vmatpush.msra.mxu0 %v2935
    %2994 = vmatpush.msra.mxu0 %v2933
    %2995 = vmatpush.msra.mxu0 %v2931
    %2996 = vmatpush.msra.mxu0 %v2929
    %2997 = vmatpush.msra.mxu0 %v2927
    %2998 = vmatmul.f32.gmra.mxu0 %v2960
    %v2999 = vpop.f32.mrf.mxu0
    %v3000 = vadd.f32 0.0, %v2999
    %3001 = vdwg.mxu0
    %v3002 = vadd.f32 %v2923, %v2980
    %v3003 = vadd.f32 %v2924, %v3000
    %s3004 = scalar_lea.vmem [#allocation20], 1280
    %v3005 = vld [vmem:[%s3004] sm:$0xff]
    %v3006 = vld [vmem:[%s3004 + $0x8] sm:$0xff]
    %v3007 = vld [vmem:[%s3004 + $0x10] sm:$0xff]
    %v3008 = vld [vmem:[%s3004 + $0x18] sm:$0xff]
    %v3009 = vld [vmem:[%s3004 + $0x20] sm:$0xff]
    %v3010 = vld [vmem:[%s3004 + $0x28] sm:$0xff]
    %v3011 = vld [vmem:[%s3004 + $0x30] sm:$0xff]
    %v3012 = vld [vmem:[%s3004 + $0x38] sm:$0xff]
    %v3013 = vld [vmem:[%s3004 + $0x40] sm:$0xff]
    %v3014 = vld [vmem:[%s3004 + $0x48] sm:$0xff]
    %v3015 = vld [vmem:[%s3004 + $0x50] sm:$0xff]
    %v3016 = vld [vmem:[%s3004 + $0x58] sm:$0xff]
    %v3017 = vld [vmem:[%s3004 + $0x60] sm:$0xff]
    %v3018 = vld [vmem:[%s3004 + $0x68] sm:$0xff]
    %v3019 = vld [vmem:[%s3004 + $0x70] sm:$0xff]
    %v3020 = vld [vmem:[%s3004 + $0x78] sm:$0xff]
    %v3021 = vld [vmem:[%s3004 + $0x80] sm:$0xff]
    %v3022 = vld [vmem:[%s3004 + $0x88] sm:$0xff]
    %v3023 = vld [vmem:[%s3004 + $0x90] sm:$0xff]
    %v3024 = vld [vmem:[%s3004 + $0x98] sm:$0xff]
    %v3025 = vld [vmem:[%s3004 + $0xa0] sm:$0xff]
    %v3026 = vld [vmem:[%s3004 + $0xa8] sm:$0xff]
    %v3027 = vld [vmem:[%s3004 + $0xb0] sm:$0xff]
    %v3028 = vld [vmem:[%s3004 + $0xb8] sm:$0xff]
    %v3029 = vld [vmem:[%s3004 + $0xc0] sm:$0xff]
    %v3030 = vld [vmem:[%s3004 + $0xc8] sm:$0xff]
    %v3031 = vld [vmem:[%s3004 + $0xd0] sm:$0xff]
    %v3032 = vld [vmem:[%s3004 + $0xd8] sm:$0xff]
    %v3033 = vld [vmem:[%s3004 + $0xe0] sm:$0xff]
    %v3034 = vld [vmem:[%s3004 + $0xe8] sm:$0xff]
    %v3035 = vld [vmem:[%s3004 + $0xf0] sm:$0xff]
    %v3036 = vld [vmem:[%s3004 + $0xf8] sm:$0xff]
    %v3037 = vrot.slane %v2612, 5
    %v3038 = vrot.slane %v2613, 4
    %v3039 = vsel %vm1264, %v3038, %v3037
    %3041 = vmatpush.msra.mxu0 %v3035
    %3042 = vmatpush.msra.mxu0 %v3033
    %3043 = vmatpush.msra.mxu0 %v3031
    %3044 = vmatpush.msra.mxu0 %v3029
    %3045 = vmatpush.msra.mxu0 %v3027
    %3046 = vmatpush.msra.mxu0 %v3025
    %3047 = vmatpush.msra.mxu0 %v3023
    %3048 = vmatpush.msra.mxu0 %v3021
    %3049 = vmatpush.msra.mxu0 %v3019
    %3050 = vmatpush.msra.mxu0 %v3017
    %3051 = vmatpush.msra.mxu0 %v3015
    %3052 = vmatpush.msra.mxu0 %v3013
    %3053 = vmatpush.msra.mxu0 %v3011
    %3054 = vmatpush.msra.mxu0 %v3009
    %3055 = vmatpush.msra.mxu0 %v3007
    %3056 = vmatpush.msra.mxu0 %v3005
    %3057 = vmatmul.f32.gmra.mxu0 %v3039
    %v3058 = vpop.f32.mrf.mxu0
    %v3059 = vadd.f32 0.0, %v3058
    %3060 = vdwg.mxu0
    %3061 = vmatpush.msra.mxu0 %v3036
    %3062 = vmatpush.msra.mxu0 %v3034
    %3063 = vmatpush.msra.mxu0 %v3032
    %3064 = vmatpush.msra.mxu0 %v3030
    %3065 = vmatpush.msra.mxu0 %v3028
    %3066 = vmatpush.msra.mxu0 %v3026
    %3067 = vmatpush.msra.mxu0 %v3024
    %3068 = vmatpush.msra.mxu0 %v3022
    %3069 = vmatpush.msra.mxu0 %v3020
    %3070 = vmatpush.msra.mxu0 %v3018
    %3071 = vmatpush.msra.mxu0 %v3016
    %3072 = vmatpush.msra.mxu0 %v3014
    %3073 = vmatpush.msra.mxu0 %v3012
    %3074 = vmatpush.msra.mxu0 %v3010
    %3075 = vmatpush.msra.mxu0 %v3008
    %3076 = vmatpush.msra.mxu0 %v3006
    %3077 = vmatmul.f32.gmra.mxu0 %v3039
    %v3078 = vpop.f32.mrf.mxu0
    %v3079 = vadd.f32 0.0, %v3078
    %3080 = vdwg.mxu0
    %v3081 = vadd.f32 %v3002, %v3059
    %v3082 = vadd.f32 %v3003, %v3079
    %s3083 = scalar_lea.vmem [#allocation20], 1536
    %v3084 = vld [vmem:[%s3083] sm:$0xff]
    %v3085 = vld [vmem:[%s3083 + $0x8] sm:$0xff]
    %v3086 = vld [vmem:[%s3083 + $0x10] sm:$0xff]
    %v3087 = vld [vmem:[%s3083 + $0x18] sm:$0xff]
    %v3088 = vld [vmem:[%s3083 + $0x20] sm:$0xff]
    %v3089 = vld [vmem:[%s3083 + $0x28] sm:$0xff]
    %v3090 = vld [vmem:[%s3083 + $0x30] sm:$0xff]
    %v3091 = vld [vmem:[%s3083 + $0x38] sm:$0xff]
    %v3092 = vld [vmem:[%s3083 + $0x40] sm:$0xff]
    %v3093 = vld [vmem:[%s3083 + $0x48] sm:$0xff]
    %v3094 = vld [vmem:[%s3083 + $0x50] sm:$0xff]
    %v3095 = vld [vmem:[%s3083 + $0x58] sm:$0xff]
    %v3096 = vld [vmem:[%s3083 + $0x60] sm:$0xff]
    %v3097 = vld [vmem:[%s3083 + $0x68] sm:$0xff]
    %v3098 = vld [vmem:[%s3083 + $0x70] sm:$0xff]
    %v3099 = vld [vmem:[%s3083 + $0x78] sm:$0xff]
    %v3100 = vld [vmem:[%s3083 + $0x80] sm:$0xff]
    %v3101 = vld [vmem:[%s3083 + $0x88] sm:$0xff]
    %v3102 = vld [vmem:[%s3083 + $0x90] sm:$0xff]
    %v3103 = vld [vmem:[%s3083 + $0x98] sm:$0xff]
    %v3104 = vld [vmem:[%s3083 + $0xa0] sm:$0xff]
    %v3105 = vld [vmem:[%s3083 + $0xa8] sm:$0xff]
    %v3106 = vld [vmem:[%s3083 + $0xb0] sm:$0xff]
    %v3107 = vld [vmem:[%s3083 + $0xb8] sm:$0xff]
    %v3108 = vld [vmem:[%s3083 + $0xc0] sm:$0xff]
    %v3109 = vld [vmem:[%s3083 + $0xc8] sm:$0xff]
    %v3110 = vld [vmem:[%s3083 + $0xd0] sm:$0xff]
    %v3111 = vld [vmem:[%s3083 + $0xd8] sm:$0xff]
    %v3112 = vld [vmem:[%s3083 + $0xe0] sm:$0xff]
    %v3113 = vld [vmem:[%s3083 + $0xe8] sm:$0xff]
    %v3114 = vld [vmem:[%s3083 + $0xf0] sm:$0xff]
    %v3115 = vld [vmem:[%s3083 + $0xf8] sm:$0xff]
    %v3116 = vrot.slane %v2612, 6
    %v3117 = vrot.slane %v2613, 5
    %v3118 = vsel %vm1264, %v3117, %v3116
    %3120 = vmatpush.msra.mxu0 %v3114
    %3121 = vmatpush.msra.mxu0 %v3112
    %3122 = vmatpush.msra.mxu0 %v3110
    %3123 = vmatpush.msra.mxu0 %v3108
    %3124 = vmatpush.msra.mxu0 %v3106
    %3125 = vmatpush.msra.mxu0 %v3104
    %3126 = vmatpush.msra.mxu0 %v3102
    %3127 = vmatpush.msra.mxu0 %v3100
    %3128 = vmatpush.msra.mxu0 %v3098
    %3129 = vmatpush.msra.mxu0 %v3096
    %3130 = vmatpush.msra.mxu0 %v3094
    %3131 = vmatpush.msra.mxu0 %v3092
    %3132 = vmatpush.msra.mxu0 %v3090
    %3133 = vmatpush.msra.mxu0 %v3088
    %3134 = vmatpush.msra.mxu0 %v3086
    %3135 = vmatpush.msra.mxu0 %v3084
    %3136 = vmatmul.f32.gmra.mxu0 %v3118
    %v3137 = vpop.f32.mrf.mxu0
    %v3138 = vadd.f32 0.0, %v3137
    %3139 = vdwg.mxu0
    %3140 = vmatpush.msra.mxu0 %v3115
    %3141 = vmatpush.msra.mxu0 %v3113
    %3142 = vmatpush.msra.mxu0 %v3111
    %3143 = vmatpush.msra.mxu0 %v3109
    %3144 = vmatpush.msra.mxu0 %v3107
    %3145 = vmatpush.msra.mxu0 %v3105
    %3146 = vmatpush.msra.mxu0 %v3103
    %3147 = vmatpush.msra.mxu0 %v3101
    %3148 = vmatpush.msra.mxu0 %v3099
    %3149 = vmatpush.msra.mxu0 %v3097
    %3150 = vmatpush.msra.mxu0 %v3095
    %3151 = vmatpush.msra.mxu0 %v3093
    %3152 = vmatpush.msra.mxu0 %v3091
    %3153 = vmatpush.msra.mxu0 %v3089
    %3154 = vmatpush.msra.mxu0 %v3087
    %3155 = vmatpush.msra.mxu0 %v3085
    %3156 = vmatmul.f32.gmra.mxu0 %v3118
    %v3157 = vpop.f32.mrf.mxu0
    %v3158 = vadd.f32 0.0, %v3157
    %3159 = vdwg.mxu0
    %v3160 = vadd.f32 %v3081, %v3138
    %v3161 = vadd.f32 %v3082, %v3158
    %s3162 = scalar_lea.vmem [#allocation20], 1792
    %v3163 = vld [vmem:[%s3162] sm:$0xff]
    %v3164 = vld [vmem:[%s3162 + $0x8] sm:$0xff]
    %v3165 = vld [vmem:[%s3162 + $0x10] sm:$0xff]
    %v3166 = vld [vmem:[%s3162 + $0x18] sm:$0xff]
    %v3167 = vld [vmem:[%s3162 + $0x20] sm:$0xff]
    %v3168 = vld [vmem:[%s3162 + $0x28] sm:$0xff]
    %v3169 = vld [vmem:[%s3162 + $0x30] sm:$0xff]
    %v3170 = vld [vmem:[%s3162 + $0x38] sm:$0xff]
    %v3171 = vld [vmem:[%s3162 + $0x40] sm:$0xff]
    %v3172 = vld [vmem:[%s3162 + $0x48] sm:$0xff]
    %v3173 = vld [vmem:[%s3162 + $0x50] sm:$0xff]
    %v3174 = vld [vmem:[%s3162 + $0x58] sm:$0xff]
    %v3175 = vld [vmem:[%s3162 + $0x60] sm:$0xff]
    %v3176 = vld [vmem:[%s3162 + $0x68] sm:$0xff]
    %v3177 = vld [vmem:[%s3162 + $0x70] sm:$0xff]
    %v3178 = vld [vmem:[%s3162 + $0x78] sm:$0xff]
    %v3179 = vld [vmem:[%s3162 + $0x80] sm:$0xff]
    %v3180 = vld [vmem:[%s3162 + $0x88] sm:$0xff]
    %v3181 = vld [vmem:[%s3162 + $0x90] sm:$0xff]
    %v3182 = vld [vmem:[%s3162 + $0x98] sm:$0xff]
    %v3183 = vld [vmem:[%s3162 + $0xa0] sm:$0xff]
    %v3184 = vld [vmem:[%s3162 + $0xa8] sm:$0xff]
    %v3185 = vld [vmem:[%s3162 + $0xb0] sm:$0xff]
    %v3186 = vld [vmem:[%s3162 + $0xb8] sm:$0xff]
    %v3187 = vld [vmem:[%s3162 + $0xc0] sm:$0xff]
    %v3188 = vld [vmem:[%s3162 + $0xc8] sm:$0xff]
    %v3189 = vld [vmem:[%s3162 + $0xd0] sm:$0xff]
    %v3190 = vld [vmem:[%s3162 + $0xd8] sm:$0xff]
    %v3191 = vld [vmem:[%s3162 + $0xe0] sm:$0xff]
    %v3192 = vld [vmem:[%s3162 + $0xe8] sm:$0xff]
    %v3193 = vld [vmem:[%s3162 + $0xf0] sm:$0xff]
    %v3194 = vld [vmem:[%s3162 + $0xf8] sm:$0xff]
    %v3195 = vrot.slane %v2612, 7
    %v3196 = vrot.slane %v2613, 6
    %v3197 = vsel %vm1264, %v3196, %v3195
    %3199 = vmatpush.msra.mxu0 %v3193
    %3200 = vmatpush.msra.mxu0 %v3191
    %3201 = vmatpush.msra.mxu0 %v3189
    %3202 = vmatpush.msra.mxu0 %v3187
    %3203 = vmatpush.msra.mxu0 %v3185
    %3204 = vmatpush.msra.mxu0 %v3183
    %3205 = vmatpush.msra.mxu0 %v3181
    %3206 = vmatpush.msra.mxu0 %v3179
    %3207 = vmatpush.msra.mxu0 %v3177
    %3208 = vmatpush.msra.mxu0 %v3175
    %3209 = vmatpush.msra.mxu0 %v3173
    %3210 = vmatpush.msra.mxu0 %v3171
    %3211 = vmatpush.msra.mxu0 %v3169
    %3212 = vmatpush.msra.mxu0 %v3167
    %3213 = vmatpush.msra.mxu0 %v3165
    %3214 = vmatpush.msra.mxu0 %v3163
    %3215 = vmatmul.f32.gmra.mxu0 %v3197
    %v3216 = vpop.f32.mrf.mxu0
    %v3217 = vadd.f32 0.0, %v3216
    %3218 = vdwg.mxu0
    %3219 = vmatpush.msra.mxu0 %v3194
    %3220 = vmatpush.msra.mxu0 %v3192
    %3221 = vmatpush.msra.mxu0 %v3190
    %3222 = vmatpush.msra.mxu0 %v3188
    %3223 = vmatpush.msra.mxu0 %v3186
    %3224 = vmatpush.msra.mxu0 %v3184
    %3225 = vmatpush.msra.mxu0 %v3182
    %3226 = vmatpush.msra.mxu0 %v3180
    %3227 = vmatpush.msra.mxu0 %v3178
    %3228 = vmatpush.msra.mxu0 %v3176
    %3229 = vmatpush.msra.mxu0 %v3174
    %3230 = vmatpush.msra.mxu0 %v3172
    %3231 = vmatpush.msra.mxu0 %v3170
    %3232 = vmatpush.msra.mxu0 %v3168
    %3233 = vmatpush.msra.mxu0 %v3166
    %3234 = vmatpush.msra.mxu0 %v3164
    %3235 = vmatmul.f32.gmra.mxu0 %v3197
    %v3236 = vpop.f32.mrf.mxu0
    %v3237 = vadd.f32 0.0, %v3236
    %3238 = vdwg.mxu0
    %v3239 = vadd.f32 %v3160, %v3217
    %v3240 = vadd.f32 %v3161, %v3237
    %v3241 = vld [vmem:[%s20] sm:$0x3]
    %v3243 = vperm.slane %v3241, 0
    %v3244 = vperm.slane %v3241, 1
    %v3247 = vadd.f32 %v3239, %v3243
    %v3248 = vadd.f32 %v3240, %v3244
    %vm3249 = vcmp.gt.f32.partialorder %v3247, 0.0
    %vm3250 = vcmp.gt.f32.partialorder %v3248, 0.0
    %v3251 = vmul.f32 %v3247, 0.1
    %v3252 = vmul.f32 %v3248, 0.1
    %v3253 = vsel %vm3249, %v3247, %v3251
    %v3254 = vsel %vm3250, %v3248, %v3252
    %v3255 = vld [vmem:[%s21] sm:$0xff]
    %v3256 = vld [vmem:[%s21 + $0x8] sm:$0xff]
    %v3257 = vld [vmem:[%s21 + $0x10] sm:$0xff]
    %v3258 = vld [vmem:[%s21 + $0x18] sm:$0xff]
    %v3259 = vld [vmem:[%s21 + $0x20] sm:$0xff]
    %v3260 = vld [vmem:[%s21 + $0x28] sm:$0xff]
    %v3261 = vld [vmem:[%s21 + $0x30] sm:$0xff]
    %v3262 = vld [vmem:[%s21 + $0x38] sm:$0xff]
    %v3263 = vld [vmem:[%s21 + $0x40] sm:$0xff]
    %v3264 = vld [vmem:[%s21 + $0x48] sm:$0xff]
    %v3265 = vld [vmem:[%s21 + $0x50] sm:$0xff]
    %v3266 = vld [vmem:[%s21 + $0x58] sm:$0xff]
    %v3267 = vld [vmem:[%s21 + $0x60] sm:$0xff]
    %v3268 = vld [vmem:[%s21 + $0x68] sm:$0xff]
    %v3269 = vld [vmem:[%s21 + $0x70] sm:$0xff]
    %v3270 = vld [vmem:[%s21 + $0x78] sm:$0xff]
    %v3271 = vld [vmem:[%s21 + $0x80] sm:$0xff]
    %v3272 = vld [vmem:[%s21 + $0x88] sm:$0xff]
    %v3273 = vld [vmem:[%s21 + $0x90] sm:$0xff]
    %v3274 = vld [vmem:[%s21 + $0x98] sm:$0xff]
    %v3275 = vld [vmem:[%s21 + $0xa0] sm:$0xff]
    %v3276 = vld [vmem:[%s21 + $0xa8] sm:$0xff]
    %v3277 = vld [vmem:[%s21 + $0xb0] sm:$0xff]
    %v3278 = vld [vmem:[%s21 + $0xb8] sm:$0xff]
    %v3279 = vld [vmem:[%s21 + $0xc0] sm:$0xff]
    %v3280 = vld [vmem:[%s21 + $0xc8] sm:$0xff]
    %v3281 = vld [vmem:[%s21 + $0xd0] sm:$0xff]
    %v3282 = vld [vmem:[%s21 + $0xd8] sm:$0xff]
    %v3283 = vld [vmem:[%s21 + $0xe0] sm:$0xff]
    %v3284 = vld [vmem:[%s21 + $0xe8] sm:$0xff]
    %v3285 = vld [vmem:[%s21 + $0xf0] sm:$0xff]
    %v3286 = vld [vmem:[%s21 + $0xf8] sm:$0xff]
    %v3287 = vld [vmem:[%s22] sm:$0x1]
    %v3289 = vperm.slane %v3287, 0
    %3291 = vmatpush.msra.mxu0 %v3270
    %3292 = vmatpush.msra.mxu0 %v3269
    %3293 = vmatpush.msra.mxu0 %v3268
    %3294 = vmatpush.msra.mxu0 %v3267
    %3295 = vmatpush.msra.mxu0 %v3266
    %3296 = vmatpush.msra.mxu0 %v3265
    %3297 = vmatpush.msra.mxu0 %v3264
    %3298 = vmatpush.msra.mxu0 %v3263
    %3299 = vmatpush.msra.mxu0 %v3262
    %3300 = vmatpush.msra.mxu0 %v3261
    %3301 = vmatpush.msra.mxu0 %v3260
    %3302 = vmatpush.msra.mxu0 %v3259
    %3303 = vmatpush.msra.mxu0 %v3258
    %3304 = vmatpush.msra.mxu0 %v3257
    %3305 = vmatpush.msra.mxu0 %v3256
    %3306 = vmatpush.msra.mxu0 %v3255
    %3307 = vmatmul.f32.gmra.mxu0 %v3253
    %v3308 = vpop.f32.mrf.mxu0
    %v3309 = vadd.f32 %v3289, %v3308
    %3310 = vdwg.mxu0
    %3311 = vmatpush.msra.mxu0 %v3286
    %3312 = vmatpush.msra.mxu0 %v3285
    %3313 = vmatpush.msra.mxu0 %v3284
    %3314 = vmatpush.msra.mxu0 %v3283
    %3315 = vmatpush.msra.mxu0 %v3282
    %3316 = vmatpush.msra.mxu0 %v3281
    %3317 = vmatpush.msra.mxu0 %v3280
    %3318 = vmatpush.msra.mxu0 %v3279
    %3319 = vmatpush.msra.mxu0 %v3278
    %3320 = vmatpush.msra.mxu0 %v3277
    %3321 = vmatpush.msra.mxu0 %v3276
    %3322 = vmatpush.msra.mxu0 %v3275
    %3323 = vmatpush.msra.mxu0 %v3274
    %3324 = vmatpush.msra.mxu0 %v3273
    %3325 = vmatpush.msra.mxu0 %v3272
    %3326 = vmatpush.msra.mxu0 %v3271
    %3327 = vmatmul.f32.gmra.mxu0 %v3254
    %v3328 = vpop.f32.mrf.mxu0
    %v3329 = vadd.f32 %v3309, %v3328
    %3330 = vdwg.mxu0
    %vm3331 = vcmp.gt.f32.partialorder %v3329, 0.0
    %v3332 = vmul.f32 %v3329, 0.1
    %v3333 = vsel %vm3331, %v3329, %v3332
    %v3334 = vld [vmem:[%s23] sm:$0xff]
    %v3335 = vld [vmem:[%s23 + $0x8] sm:$0xff]
    %v3336 = vld [vmem:[%s23 + $0x10] sm:$0xff]
    %v3337 = vld [vmem:[%s23 + $0x18] sm:$0xff]
    %v3338 = vld [vmem:[%s23 + $0x20] sm:$0xff]
    %v3339 = vld [vmem:[%s23 + $0x28] sm:$0xff]
    %v3340 = vld [vmem:[%s23 + $0x30] sm:$0xff]
    %v3341 = vld [vmem:[%s23 + $0x38] sm:$0xff]
    %v3342 = vld [vmem:[%s23 + $0x40] sm:$0xff]
    %v3343 = vld [vmem:[%s23 + $0x48] sm:$0xff]
    %v3344 = vld [vmem:[%s23 + $0x50] sm:$0xff]
    %v3345 = vld [vmem:[%s23 + $0x58] sm:$0xff]
    %v3346 = vld [vmem:[%s23 + $0x60] sm:$0xff]
    %v3347 = vld [vmem:[%s23 + $0x68] sm:$0xff]
    %v3348 = vld [vmem:[%s23 + $0x70] sm:$0xff]
    %v3349 = vld [vmem:[%s23 + $0x78] sm:$0xff]
    %v3350 = vld [vmem:[#allocation5] sm:$0x1]
    %v3352 = vperm.slane %v3350, 0
    %3354 = vmatpush.msra.mxu0 %v3349
    %3355 = vmatpush.msra.mxu0 %v3348
    %3356 = vmatpush.msra.mxu0 %v3347
    %3357 = vmatpush.msra.mxu0 %v3346
    %3358 = vmatpush.msra.mxu0 %v3345
    %3359 = vmatpush.msra.mxu0 %v3344
    %3360 = vmatpush.msra.mxu0 %v3343
    %3361 = vmatpush.msra.mxu0 %v3342
    %3362 = vmatpush.msra.mxu0 %v3341
    %3363 = vmatpush.msra.mxu0 %v3340
    %3364 = vmatpush.msra.mxu0 %v3339
    %3365 = vmatpush.msra.mxu0 %v3338
    %3366 = vmatpush.msra.mxu0 %v3337
    %3367 = vmatpush.msra.mxu0 %v3336
    %3368 = vmatpush.msra.mxu0 %v3335
    %3369 = vmatpush.msra.mxu0 %v3334
    %3370 = vmatmul.f32.gmra.mxu0 %v3333
    %v3371 = vpop.f32.mrf.mxu0
    %v3372 = vadd.f32 %v3352, %v3371
    %3373 = vdwg.mxu0
    %vm3374 = vcmask 1024
    %3375 = vst.msk [vmem:[%s25] sm:$0x3] %vm3374, %v3372
    // Predicated region
    $region142: #{tpu_custom_call.1} parent=1 // pred_check
      _
    $region143: #{tpu_custom_call.1} parent=1 // pred_check_branch
      %3377 = sbr.rel (0) target = $region145
    $region144: #{tpu_custom_call.1} parent=1 // pred_region
      _
    $region145: #{tpu_custom_call.1} parent=1 // pred_fallthru
      _
    // Predicated region
    $region146: #{tpu_custom_call.1} parent=1 // pred_check
      _
    $region147: #{tpu_custom_call.1} parent=1 // pred_check_branch
      %3379 = sbr.rel (0) target = $region149
    $region148: #{tpu_custom_call.1} parent=1 // pred_region
      _
    $region149: #{tpu_custom_call.1} parent=1 // pred_fallthru
      _
    %3380 = vsyncpa [#allocation7], 1
    %3381 = vsyncpa [#allocation9], 1
    %3382 = vsyncpa [#allocation12], 1
    %3383 = vsyncpa [#allocation15], 1
    %3384 = vsyncpa [#allocation18], 1
    %3385 = vsyncpa [#allocation21], 1

</llo_original>
